<compile_context>
chip_gen: v7x
topology: tpu7x:2x2x1
jax: 0.10.0
libtpu: 0.0.40
codegen_flags: <defaults>
</compile_context>

<pallas_src>
import functools

import jax
import jax.numpy as jnp
from jax import lax
from jax.experimental import pallas as pl
from jax.experimental.pallas import tpu as pltpu


_NEG_BIG = -1e9  # finite "-inf": avoids NaN for fully-masked rows (intentional
                 # deviation from torch's -inf semantics in that corner case)

# pipeline_mode=pl.Buffered(1) support is feature-detected on first use.
_single_buffer_weights_ok = True


# ----------------------------- Pallas kernels -----------------------------

def _attend_and_project(q, k, v, mask_row, wo_ref, num_heads, head_dim):
    """Per-head softmax attention + per-head out-projection accumulation.

    q: (T, E) f32, k/v: (S, E) f32, mask_row: (1, S) f32 additive mask,
    wo_ref: (E, E) ref in the MXU compute dtype.
    Returns the (T, E) f32 attention output (out-proj bias not yet added).
    """
    T = q.shape[0]
    S = k.shape[0]
    E = q.shape[1]
    cd = wo_ref.dtype                      # MXU compute dtype (bf16 by default)

    # Hoisted out of the head loop: one mask broadcast (JAX does not CSE
    # broadcast_in_dim) and one f32->bf16 cast per operand instead of per head.
    mask_b = jnp.broadcast_to(mask_row, (T, S))
    q_c = q.astype(cd)
    k_c = k.astype(cd)
    v_c = v.astype(cd)

    acc = jnp.zeros((T, E), jnp.float32)
    # Statically unrolled over a small fixed head count. At production H prefer
    # lax.fori_loop(unroll=True) + a VMEM scratch to bound live ranges.
    for h in range(num_heads):
        lo = h * head_dim
        hi = lo + head_dim
        # q_h @ k_h^T without materializing the transpose (contract last dims).
        s = lax.dot_general(q_c[:, lo:hi], k_c[:, lo:hi],
                            dimension_numbers=(((1,), (1,)), ((), ())),
                            preferred_element_type=jnp.float32) + mask_b  # (T,S)
        m = jnp.max(s, axis=-1, keepdims=True)
        p = jnp.exp(s - m)
        denom = jnp.sum(p, axis=-1, keepdims=True)
        r = pl.reciprocal(denom, approx=True)     # EUP slot (otherwise idle)
        r = r * (2.0 - denom * r)                 # one Newton step -> ~f32 exact
        ctx_h = jnp.dot((p * r).astype(cd), v_c[:, lo:hi],
                        preferred_element_type=jnp.float32)          # (T, Hd)
        # Accumulate the out-projection per head: the wo row-slice is
        # sublane-contiguous, so no cross-lane concat of per-head contexts.
        acc = acc + jnp.dot(ctx_h.astype(cd), wo_ref[lo:hi, :],
                            preferred_element_type=jnp.float32)      # (T, E)
    return acc


def _self_attn_kernel(x_ref, wqkv_ref, bqkv_ref, wo_ref, bo_ref, mask_ref,
                      out_ref, kc_ref, vc_ref, *, num_heads):
    """Self-attention: q, k, v all projected from `x` via one fused (E,3E) matmul."""
    x = x_ref[0]                                   # (T, E) f32
    E = x.shape[-1]
    Hd = E // num_heads
    cd = wqkv_ref.dtype
    # Single MXU matmul for q/k/v; q scaling already folded into wqkv.
    qkv = jnp.dot(x.astype(cd), wqkv_ref[...],
                  preferred_element_type=jnp.float32) + bqkv_ref[...]  # (T, 3E) f32
    q = qkv[:, :E]
    k = qkv[:, E:2 * E]
    v = qkv[:, 2 * E:]
    # Lane-dense K/V cache writeback: one unmasked (S, E) store each; the
    # wrapper views these as (B, H, S, Hd).
    kc_ref[0] = k
    vc_ref[0] = v
    out = _attend_and_project(q, k, v, mask_ref[0], wo_ref, num_heads, Hd)
    out_ref[0] = (out + bo_ref[...]).astype(out_ref.dtype)


def _cross_attn_kernel(q_in_ref, kv_in_ref, wq_ref, bq_ref, wkv_ref, bkv_ref,
                       wo_ref, bo_ref, mask_ref, out_ref, kc_ref, vc_ref, *,
                       num_heads):
    """Cross-attention: q from `query`, k/v from `key` via one fused (E,2E) matmul."""
    E = q_in_ref.shape[-1]
    Hd = E // num_heads
    cd = wq_ref.dtype
    q = jnp.dot(q_in_ref[0].astype(cd), wq_ref[...],
                preferred_element_type=jnp.float32) + bq_ref[...]       # (T, E)
    kv = jnp.dot(kv_in_ref[0].astype(cd), wkv_ref[...],
                 preferred_element_type=jnp.float32) + bkv_ref[...]     # (S, 2E)
    k = kv[:, :E]
    v = kv[:, E:]
    kc_ref[0] = k
    vc_ref[0] = v
    out = _attend_and_project(q, k, v, mask_ref[0], wo_ref, num_heads, Hd)
    out_ref[0] = (out + bo_ref[...]).astype(out_ref.dtype)


# --------------------------- parameters & wrapper ---------------------------

def init_params(key, embed_dim):
    ks = jax.random.split(key, 8)
    scale = 0.05
    E = embed_dim
    # Weights stored as (in, out) == torch Linear weight transposed.
    return {
        "wq_t": scale * jax.random.normal(ks[0], (E, E), jnp.float32),
        "bq":   scale * jax.random.normal(ks[1], (E,), jnp.float32),
        "wk_t": scale * jax.random.normal(ks[2], (E, E), jnp.float32),
        "bk":   scale * jax.random.normal(ks[3], (E,), jnp.float32),
        "wv_t": scale * jax.random.normal(ks[4], (E, E), jnp.float32),
        "bv":   scale * jax.random.normal(ks[5], (E,), jnp.float32),
        "wo_t": scale * jax.random.normal(ks[6], (E, E), jnp.float32),
        "bo":   scale * jax.random.normal(ks[7], (E,), jnp.float32),
    }


def prepare_params(params, num_heads, mxu_dtype=jnp.bfloat16):
    """Host-side, one-time transform: fold head_dim**-0.5 into the q weights,
    fuse q/k/v (self-attn) and k/v (cross-attn) projections into single matmuls
    and cast the weight matrices to the MXU compute dtype (bf16 by default).
    Biases stay f32 (added to the f32 accumulators)."""
    E = params["wq_t"].shape[0]
    scaling = float(E // num_heads) ** -0.5
    wq_s = params["wq_t"] * scaling
    bq_s = params["bq"] * scaling
    cast = lambda w: w.astype(mxu_dtype)
    return {
        "wqkv_t": cast(jnp.concatenate([wq_s, params["wk_t"], params["wv_t"]], axis=1)),  # (E, 3E)
        "bqkv":   jnp.concatenate([bq_s, params["bk"], params["bv"]])[None, :],           # (1, 3E) f32
        "wq_t_s": cast(wq_s),                                                             # (E, E)
        "bq_s":   bq_s[None, :],                                                          # (1, E) f32
        "wkv_t":  cast(jnp.concatenate([params["wk_t"], params["wv_t"]], axis=1)),        # (E, 2E)
        "bkv":    jnp.concatenate([params["bk"], params["bv"]])[None, :],                 # (1, 2E) f32
        "wo_t":   cast(params["wo_t"]),                                                   # (E, E)
        "bo":     params["bo"][None, :],                                                  # (1, E) f32
    }


def _const_spec(shape, single_buffer):
    """BlockSpec for a grid-invariant (weight/bias) input.

    The index_map is constant across the batch grid, so double-buffering buys
    nothing; pl.Buffered(1) keeps a single VMEM copy (at production E the fused
    weights double-buffered would eat a large share of VMEM, esp. v7x's 64 MiB).
    """
    assert len(shape) == 2
    idx = lambda b: (0, 0)
    if single_buffer:
        return pl.BlockSpec(shape, idx, pipeline_mode=pl.Buffered(1))
    return pl.BlockSpec(shape, idx)


def attention_forward(prepared, query, key, key_padding_mask, layer_state,
                      num_heads, encoder_decoder_attention=False,
                      use_past=False, has_key_padding_mask=False):
    """Mirrors AttentionForONNX.forward for the use_past=False path."""
    if use_past:
        # TODO(synk): use_past=True cache concatenation / static-kv reuse.
        raise NotImplementedError("use_past=True is not implemented")
    del layer_state  # present in the signature for parity; unused when use_past=False

    T, B, E = query.shape
    H = num_heads
    Hd = E // H
    assert Hd * H == E

    # Batch-major layout: each grid step owns a full (T, E)/(S, E) slab so the
    # last two block dims equal the full array dims (satisfies the (8,128)
    # BlockSpec rule) and the main output write is lane-dense.
    q_bme = jnp.transpose(query, (1, 0, 2))                  # (B, T, E)
    if encoder_decoder_attention:
        kv_src = key
        kv_bme = jnp.transpose(key, (1, 0, 2))               # (B, S, E)
    else:
        kv_src = query
        kv_bme = q_bme
    S = kv_src.shape[0]

    if has_key_padding_mask:
        mask_add = jnp.where(key_padding_mask, _NEG_BIG, 0.0).astype(jnp.float32)
    else:
        mask_add = jnp.zeros((B, S), jnp.float32)
    mask_add = mask_add[:, None, :]                          # (B, 1, S)

    out_shapes = (
        jax.ShapeDtypeStruct((B, T, E), jnp.float32),        # attention output (batch-major)
        jax.ShapeDtypeStruct((B, S, E), jnp.float32),        # new_key_cache (lane-dense layout)
        jax.ShapeDtypeStruct((B, S, E), jnp.float32),        # new_value_cache (lane-dense layout)
    )
    out_specs = (
        pl.BlockSpec((1, T, E), lambda b: (b, 0, 0)),
        pl.BlockSpec((1, S, E), lambda b: (b, 0, 0)),
        pl.BlockSpec((1, S, E), lambda b: (b, 0, 0)),
    )
    compiler_params = pltpu.CompilerParams(
        dimension_semantics=("parallel",),
        vmem_limit_bytes=48 * 1024 * 1024,   # explicit, with headroom on v7x's 64 MiB
    )

    def run(single_buffer):
        if not encoder_decoder_attention:
            in_specs = [
                pl.BlockSpec((1, T, E), lambda b: (b, 0, 0)),     # x (q/k/v source)
                _const_spec((E, 3 * E), single_buffer),           # fused wqkv (bf16)
                _const_spec((1, 3 * E), single_buffer),           # fused bqkv (f32)
                _const_spec((E, E), single_buffer),               # wo (bf16)
                _const_spec((1, E), single_buffer),               # bo (f32)
                pl.BlockSpec((1, 1, S), lambda b: (b, 0, 0)),     # additive mask
            ]
            return pl.pallas_call(
                functools.partial(_self_attn_kernel, num_heads=H),
                out_shape=out_shapes, grid=(B,), in_specs=in_specs,
                out_specs=out_specs, compiler_params=compiler_params,
            )(q_bme, prepared["wqkv_t"], prepared["bqkv"],
              prepared["wo_t"], prepared["bo"], mask_add)

        in_specs = [
            pl.BlockSpec((1, T, E), lambda b: (b, 0, 0)),         # q source
            pl.BlockSpec((1, S, E), lambda b: (b, 0, 0)),         # k/v source
            _const_spec((E, E), single_buffer),                   # wq (scaled, bf16)
            _const_spec((1, E), single_buffer),                   # bq (scaled, f32)
            _const_spec((E, 2 * E), single_buffer),               # fused wkv (bf16)
            _const_spec((1, 2 * E), single_buffer),               # fused bkv (f32)
            _const_spec((E, E), single_buffer),                   # wo (bf16)
            _const_spec((1, E), single_buffer),                   # bo (f32)
            pl.BlockSpec((1, 1, S), lambda b: (b, 0, 0)),         # additive mask
        ]
        return pl.pallas_call(
            functools.partial(_cross_attn_kernel, num_heads=H),
            out_shape=out_shapes, grid=(B,), in_specs=in_specs,
            out_specs=out_specs, compiler_params=compiler_params,
        )(q_bme, kv_bme, prepared["wq_t_s"], prepared["bq_s"],
          prepared["wkv_t"], prepared["bkv"],
          prepared["wo_t"], prepared["bo"], mask_add)

    global _single_buffer_weights_ok
    if _single_buffer_weights_ok:
        try:
            out_b, kc_bse, vc_bse = run(True)
        except Exception:
            # pipeline_mode=pl.Buffered(1) not supported on this jax build;
            # fall back to default (double-buffered) weight specs.
            _single_buffer_weights_ok = False
            out_b, kc_bse, vc_bse = run(False)
    else:
        out_b, kc_bse, vc_bse = run(False)

    # Module I/O is (T, B, E); the kernel works batch-major -> one transpose back.
    out = jnp.transpose(out_b, (1, 0, 2))
    # Caches were stored lane-dense as (B, S, E); view as (B, H, S, Hd) for the
    # module's output layout. (A consumer could take the (B, S, E) layout
    # directly and skip this transpose.)
    new_k = jnp.transpose(jnp.reshape(kc_bse, (B, S, H, Hd)), (0, 2, 1, 3))
    new_v = jnp.transpose(jnp.reshape(vc_bse, (B, S, H, Hd)), (0, 2, 1, 3))
    return out, new_k, new_v


# ------------------------------ pure-JAX reference ------------------------------

def reference_forward(params, query, key, key_padding_mask, num_heads,
                      encoder_decoder_attention=False, has_key_padding_mask=False):
    T, B, E = query.shape
    H = num_heads
    Hd = E // H
    scaling = float(Hd) ** -0.5

    def lin(x, w_t, b):
        return x @ w_t + b

    q = lin(query, params["wq_t"], params["bq"]) * scaling
    kv_src = key if encoder_decoder_attention else query
    S_kv = kv_src.shape[0]
    k = lin(kv_src, params["wk_t"], params["bk"])
    v = lin(kv_src, params["wv_t"], params["bv"])

    q = q.reshape(T, B * H, Hd).transpose(1, 0, 2)
    k = k.reshape(S_kv, B * H, Hd).transpose(1, 0, 2)
    v = v.reshape(S_kv, B * H, Hd).transpose(1, 0, 2)

    new_key_cache = k.reshape(B, H, S_kv, Hd)
    new_value_cache = v.reshape(B, H, S_kv, Hd)

    w = jnp.einsum("btd,bsd->bts", q, k)
    if has_key_padding_mask:
        w = w.reshape(B, H, T, S_kv)
        w = jnp.where(key_padding_mask[:, None, None, :], -jnp.inf, w)
        w = w.reshape(B * H, T, S_kv)
    w = jax.nn.softmax(w, axis=-1)
    o = jnp.einsum("bts,bsd->btd", w, v)
    o = o.transpose(1, 0, 2).reshape(T, B, E)
    o = lin(o, params["wo_t"], params["bo"])
    return o, new_key_cache, new_value_cache


# ----------------------------------- main -----------------------------------

if __name__ == "__main__":
    embed_dim = 32
    num_heads = 4
    head_dim = embed_dim // num_heads
    tgt_len = 8
    src_len = 8
    bsz = 2

    root = jax.random.PRNGKey(0)
    kq, kk, kp, kcache = jax.random.split(root, 4)
    params = init_params(kp, embed_dim)
    prepared_bf16 = prepare_params(params, num_heads)                       # production default
    prepared_f32 = prepare_params(params, num_heads, mxu_dtype=jnp.float32)  # strict-parity variant

    query = jax.random.normal(kq, (tgt_len, bsz, embed_dim), jnp.float32)
    key = jax.random.normal(kk, (src_len, bsz, embed_dim), jnp.float32)

    # key_padding_mask: bool (B, S); mask the last position of batch 1 only.
    key_padding_mask = jnp.zeros((bsz, src_len), jnp.bool_).at[1, -1].set(True)

    # layer_state present (so new caches are returned) but unused with use_past=False.
    cache_len = 5
    layer_state = [
        0.1 * jax.random.normal(kcache, (bsz, num_heads, cache_len, head_dim), jnp.float32)
        for _ in range(4)
    ]

    # --- self-attention path (the exercised unit-test configuration) ---
    ref_out, ref_k, ref_v = reference_forward(
        params, query, key, key_padding_mask, num_heads=num_heads,
        encoder_decoder_attention=False, has_key_padding_mask=True)

    # f32 MXU operands: exact parity with the f32 reference.
    out32, k32, v32 = attention_forward(
        prepared_f32, query, key, key_padding_mask, layer_state,
        num_heads=num_heads, encoder_decoder_attention=False,
        use_past=False, has_key_padding_mask=True)
    jax.block_until_ready((out32, k32, v32))
    assert out32.shape == (tgt_len, bsz, embed_dim)
    assert k32.shape == (bsz, num_heads, src_len, head_dim)
    assert v32.shape == (bsz, num_heads, src_len, head_dim)
    assert jnp.allclose(out32, ref_out, rtol=1e-5, atol=1e-5)
    assert jnp.allclose(k32, ref_k, rtol=1e-5, atol=1e-5)
    assert jnp.allclose(v32, ref_v, rtol=1e-5, atol=1e-5)

    # bf16 MXU operands (default / production): looser parity vs the f32 reference.
    out16, k16, v16 = attention_forward(
        prepared_bf16, query, key, key_padding_mask, layer_state,
        num_heads=num_heads, encoder_decoder_attention=False,
        use_past=False, has_key_padding_mask=True)
    jax.block_until_ready((out16, k16, v16))
    assert jnp.allclose(out16, ref_out, rtol=2e-2, atol=2e-2)
    assert jnp.allclose(k16, ref_k, rtol=2e-2, atol=2e-2)
    assert jnp.allclose(v16, ref_v, rtol=2e-2, atol=2e-2)

    # --- encoder-decoder (cross) attention path, use_past=False ---
    ref_out_x, ref_kx, ref_vx = reference_forward(
        params, query, key, key_padding_mask, num_heads=num_heads,
        encoder_decoder_attention=True, has_key_padding_mask=True)

    outx32, kx32, vx32 = attention_forward(
        prepared_f32, query, key, key_padding_mask, layer_state,
        num_heads=num_heads, encoder_decoder_attention=True,
        use_past=False, has_key_padding_mask=True)
    jax.block_until_ready((outx32, kx32, vx32))
    assert jnp.allclose(outx32, ref_out_x, rtol=1e-5, atol=1e-5)
    assert jnp.allclose(kx32, ref_kx, rtol=1e-5, atol=1e-5)
    assert jnp.allclose(vx32, ref_vx, rtol=1e-5, atol=1e-5)

    outx16, kx16, vx16 = attention_forward(
        prepared_bf16, query, key, key_padding_mask, layer_state,
        num_heads=num_heads, encoder_decoder_attention=True,
        use_past=False, has_key_padding_mask=True)
    jax.block_until_ready((outx16, kx16, vx16))
    assert jnp.allclose(outx16, ref_out_x, rtol=2e-2, atol=2e-2)
    assert jnp.allclose(kx16, ref_kx, rtol=2e-2, atol=2e-2)
    assert jnp.allclose(vx16, ref_vx, rtol=2e-2, atol=2e-2)

    print("KERNEL_OK")
</pallas_src>

<mosaic_0001>
module attributes {stable_mosaic.version = 11 : i64} {
  func.func @_self_attn_kernel(%arg0: i32, %arg1: memref<1x8x32xf32, #tpu.memory_space<vmem>>, %arg2: memref<32x96xf32, #tpu.memory_space<vmem>>, %arg3: memref<1x96xf32, #tpu.memory_space<vmem>>, %arg4: memref<32x32xf32, #tpu.memory_space<vmem>>, %arg5: memref<1x32xf32, #tpu.memory_space<vmem>>, %arg6: memref<1x1x8xf32, #tpu.memory_space<vmem>>, %arg7: memref<1x8x32xf32, #tpu.memory_space<vmem>>, %arg8: memref<1x8x32xf32, #tpu.memory_space<vmem>>, %arg9: memref<1x8x32xf32, #tpu.memory_space<vmem>>) attributes {dimension_semantics = [#tpu.dimension_semantics<parallel>], iteration_bounds = array<i64: 2>, scalar_prefetch = 0 : i64, scratch_operands = 0 : i64, tpu.core_type = #tpu.core_type<tc>, window_params = [{transform_indices = @transform_0, window_bounds = array<i64: 1, 8, 32>}, {pipeline_mode = #tpu.pipeline_mode<synchronous>, transform_indices = @transform_1, window_bounds = array<i64: 32, 96>}, {pipeline_mode = #tpu.pipeline_mode<synchronous>, transform_indices = @transform_2, window_bounds = array<i64: 1, 96>}, {pipeline_mode = #tpu.pipeline_mode<synchronous>, transform_indices = @transform_3, window_bounds = array<i64: 32, 32>}, {pipeline_mode = #tpu.pipeline_mode<synchronous>, transform_indices = @transform_4, window_bounds = array<i64: 1, 32>}, {transform_indices = @transform_5, window_bounds = array<i64: 1, 1, 8>}, {transform_indices = @transform_6, window_bounds = array<i64: 1, 8, 32>}, {transform_indices = @transform_7, window_bounds = array<i64: 1, 8, 32>}, {transform_indices = @transform_8, window_bounds = array<i64: 1, 8, 32>}]} {
    %c0 = arith.constant 0 : index
    %c0_0 = arith.constant 0 : index
    %c0_1 = arith.constant 0 : index
    %0 = vector.load %arg1[%c0, %c0_0, %c0_1] : memref<1x8x32xf32, #tpu.memory_space<vmem>>, vector<1x8x32xf32>
    %1 = vector.shape_cast %0 : vector<1x8x32xf32> to vector<8x32xf32>
    %c0_2 = arith.constant 0 : index
    %c0_3 = arith.constant 0 : index
    %2 = vector.load %arg2[%c0_2, %c0_3] : memref<32x96xf32, #tpu.memory_space<vmem>>, vector<32x96xf32>
    %cst = arith.constant dense<0.000000e+00> : vector<8x96xf32>
    %3 = tpu.matmul %1, %2, %cst {dimension_numbers = #tpu.dot_dimension_numbers<[1], [0], [0], [1], [0, 0, 1, 1], [], []>} : vector<8x32xf32>, vector<32x96xf32>, vector<8x96xf32> -> vector<8x96xf32>
    %c0_4 = arith.constant 0 : index
    %c0_5 = arith.constant 0 : index
    %4 = vector.load %arg3[%c0_4, %c0_5] : memref<1x96xf32, #tpu.memory_space<vmem>>, vector<1x96xf32>
    %5 = vector.broadcast %4 : vector<1x96xf32> to vector<8x96xf32>
    %6 = arith.addf %3, %5 : vector<8x96xf32>
    %7 = vector.extract_strided_slice %6 {offsets = [0, 0], sizes = [8, 32], strides = [1, 1]} : vector<8x96xf32> to vector<8x32xf32>
    %8 = vector.extract_strided_slice %6 {offsets = [0, 32], sizes = [8, 32], strides = [1, 1]} : vector<8x96xf32> to vector<8x32xf32>
    %9 = vector.extract_strided_slice %6 {offsets = [0, 64], sizes = [8, 32], strides = [1, 1]} : vector<8x96xf32> to vector<8x32xf32>
    %c0_6 = arith.constant 0 : index
    %c0_7 = arith.constant 0 : index
    %c0_8 = arith.constant 0 : index
    %10 = vector.load %arg8[%c0_6, %c0_7, %c0_8] : memref<1x8x32xf32, #tpu.memory_space<vmem>>, vector<1x8x32xf32>
    %11 = vector.shape_cast %10 : vector<1x8x32xf32> to vector<8x32xf32>
    %12 = vector.shape_cast %8 : vector<8x32xf32> to vector<1x8x32xf32>
    tpu.vector_store %arg8[%c0_6, %c0_7, %c0_8], %12 {strides = array<i32>} : memref<1x8x32xf32, #tpu.memory_space<vmem>>, vector<1x8x32xf32>,
    %c0_9 = arith.constant 0 : index
    %c0_10 = arith.constant 0 : index
    %c0_11 = arith.constant 0 : index
    %13 = vector.load %arg9[%c0_9, %c0_10, %c0_11] : memref<1x8x32xf32, #tpu.memory_space<vmem>>, vector<1x8x32xf32>
    %14 = vector.shape_cast %13 : vector<1x8x32xf32> to vector<8x32xf32>
    %15 = vector.shape_cast %9 : vector<8x32xf32> to vector<1x8x32xf32>
    tpu.vector_store %arg9[%c0_9, %c0_10, %c0_11], %15 {strides = array<i32>} : memref<1x8x32xf32, #tpu.memory_space<vmem>>, vector<1x8x32xf32>,
    %c0_12 = arith.constant 0 : index
    %c0_13 = arith.constant 0 : index
    %c0_14 = arith.constant 0 : index
    %16 = vector.load %arg6[%c0_12, %c0_13, %c0_14] : memref<1x1x8xf32, #tpu.memory_space<vmem>>, vector<1x1x8xf32>
    %17 = vector.shape_cast %16 : vector<1x1x8xf32> to vector<1x8xf32>
    %18 = vector.shape_cast %17 : vector<1x8xf32> to vector<1x8xf32>
    %19 = vector.broadcast %18 : vector<1x8xf32> to vector<8x8xf32>
    %cst_15 = arith.constant 0.000000e+00 : f32
    %20 = vector.broadcast %cst_15 : f32 to vector<8x32xf32>
    %21 = vector.extract_strided_slice %7 {offsets = [0, 0], sizes = [8, 8], strides = [1, 1]} : vector<8x32xf32> to vector<8x8xf32>
    %22 = vector.extract_strided_slice %8 {offsets = [0, 0], sizes = [8, 8], strides = [1, 1]} : vector<8x32xf32> to vector<8x8xf32>
    %cst_16 = arith.constant dense<0.000000e+00> : vector<8x8xf32>
    %23 = tpu.matmul %21, %22, %cst_16 {dimension_numbers = #tpu.dot_dimension_numbers<[1], [1], [0], [0], [0, 0, 1, 0], [], []>} : vector<8x8xf32>, vector<8x8xf32>, vector<8x8xf32> -> vector<8x8xf32>
    %24 = arith.addf %23, %19 : vector<8x8xf32>
    %cst_17 = arith.constant dense<0xFF800000> : vector<8xf32>
    %25 = vector.multi_reduction <maximumf>, %24, %cst_17 [1] : vector<8x8xf32> to vector<8xf32>
    %26 = vector.shape_cast %25 : vector<8xf32> to vector<8x1xf32>
    %27 = vector.broadcast %26 : vector<8x1xf32> to vector<8x8xf32>
    %28 = arith.subf %24, %27 : vector<8x8xf32>
    %29 = math.exp %28 : vector<8x8xf32>
    %cst_18 = arith.constant dense<0.000000e+00> : vector<8xf32>
    %30 = vector.multi_reduction <add>, %29, %cst_18 [1] : vector<8x8xf32> to vector<8xf32>
    %31 = vector.shape_cast %30 : vector<8xf32> to vector<8x1xf32>
    %32 = tpu.reciprocal %31 {approx = true} : vector<8x1xf32> -> vector<8x1xf32>
    %33 = arith.mulf %31, %32 : vector<8x1xf32>
    %cst_19 = arith.constant 2.000000e+00 : f32
    %34 = vector.broadcast %cst_19 : f32 to vector<8x1xf32>
    %35 = arith.subf %34, %33 : vector<8x1xf32>
    %36 = arith.mulf %32, %35 : vector<8x1xf32>
    %37 = vector.broadcast %36 : vector<8x1xf32> to vector<8x8xf32>
    %38 = arith.mulf %29, %37 : vector<8x8xf32>
    %39 = vector.extract_strided_slice %9 {offsets = [0, 0], sizes = [8, 8], strides = [1, 1]} : vector<8x32xf32> to vector<8x8xf32>
    %cst_20 = arith.constant dense<0.000000e+00> : vector<8x8xf32>
    %40 = tpu.matmul %38, %39, %cst_20 {dimension_numbers = #tpu.dot_dimension_numbers<[1], [0], [0], [1], [0, 0, 1, 1], [], []>} : vector<8x8xf32>, vector<8x8xf32>, vector<8x8xf32> -> vector<8x8xf32>
    %c0_21 = arith.constant 0 : index
    %c0_22 = arith.constant 0 : index
    %41 = vector.load %arg4[%c0_21, %c0_22] : memref<32x32xf32, #tpu.memory_space<vmem>>, vector<8x32xf32>
    %cst_23 = arith.constant dense<0.000000e+00> : vector<8x32xf32>
    %42 = tpu.matmul %40, %41, %cst_23 {dimension_numbers = #tpu.dot_dimension_numbers<[1], [0], [0], [1], [0, 0, 1, 1], [], []>} : vector<8x8xf32>, vector<8x32xf32>, vector<8x32xf32> -> vector<8x32xf32>
    %43 = arith.addf %20, %42 : vector<8x32xf32>
    %44 = vector.extract_strided_slice %7 {offsets = [0, 8], sizes = [8, 8], strides = [1, 1]} : vector<8x32xf32> to vector<8x8xf32>
    %45 = vector.extract_strided_slice %8 {offsets = [0, 8], sizes = [8, 8], strides = [1, 1]} : vector<8x32xf32> to vector<8x8xf32>
    %cst_24 = arith.constant dense<0.000000e+00> : vector<8x8xf32>
    %46 = tpu.matmul %44, %45, %cst_24 {dimension_numbers = #tpu.dot_dimension_numbers<[1], [1], [0], [0], [0, 0, 1, 0], [], []>} : vector<8x8xf32>, vector<8x8xf32>, vector<8x8xf32> -> vector<8x8xf32>
    %47 = arith.addf %46, %19 : vector<8x8xf32>
    %cst_25 = arith.constant dense<0xFF800000> : vector<8xf32>
    %48 = vector.multi_reduction <maximumf>, %47, %cst_25 [1] : vector<8x8xf32> to vector<8xf32>
    %49 = vector.shape_cast %48 : vector<8xf32> to vector<8x1xf32>
    %50 = vector.broadcast %49 : vector<8x1xf32> to vector<8x8xf32>
    %51 = arith.subf %47, %50 : vector<8x8xf32>
    %52 = math.exp %51 : vector<8x8xf32>
    %cst_26 = arith.constant dense<0.000000e+00> : vector<8xf32>
    %53 = vector.multi_reduction <add>, %52, %cst_26 [1] : vector<8x8xf32> to vector<8xf32>
    %54 = vector.shape_cast %53 : vector<8xf32> to vector<8x1xf32>
    %55 = tpu.reciprocal %54 {approx = true} : vector<8x1xf32> -> vector<8x1xf32>
    %56 = arith.mulf %54, %55 : vector<8x1xf32>
    %cst_27 = arith.constant 2.000000e+00 : f32
    %57 = vector.broadcast %cst_27 : f32 to vector<8x1xf32>
    %58 = arith.subf %57, %56 : vector<8x1xf32>
    %59 = arith.mulf %55, %58 : vector<8x1xf32>
    %60 = vector.broadcast %59 : vector<8x1xf32> to vector<8x8xf32>
    %61 = arith.mulf %52, %60 : vector<8x8xf32>
    %62 = vector.extract_strided_slice %9 {offsets = [0, 8], sizes = [8, 8], strides = [1, 1]} : vector<8x32xf32> to vector<8x8xf32>
    %cst_28 = arith.constant dense<0.000000e+00> : vector<8x8xf32>
    %63 = tpu.matmul %61, %62, %cst_28 {dimension_numbers = #tpu.dot_dimension_numbers<[1], [0], [0], [1], [0, 0, 1, 1], [], []>} : vector<8x8xf32>, vector<8x8xf32>, vector<8x8xf32> -> vector<8x8xf32>
    %c8 = arith.constant 8 : index
    %c0_29 = arith.constant 0 : index
    %64 = vector.load %arg4[%c8, %c0_29] : memref<32x32xf32, #tpu.memory_space<vmem>>, vector<8x32xf32>
    %cst_30 = arith.constant dense<0.000000e+00> : vector<8x32xf32>
    %65 = tpu.matmul %63, %64, %cst_30 {dimension_numbers = #tpu.dot_dimension_numbers<[1], [0], [0], [1], [0, 0, 1, 1], [], []>} : vector<8x8xf32>, vector<8x32xf32>, vector<8x32xf32> -> vector<8x32xf32>
    %66 = arith.addf %43, %65 : vector<8x32xf32>
    %67 = vector.extract_strided_slice %7 {offsets = [0, 16], sizes = [8, 8], strides = [1, 1]} : vector<8x32xf32> to vector<8x8xf32>
    %68 = vector.extract_strided_slice %8 {offsets = [0, 16], sizes = [8, 8], strides = [1, 1]} : vector<8x32xf32> to vector<8x8xf32>
    %cst_31 = arith.constant dense<0.000000e+00> : vector<8x8xf32>
    %69 = tpu.matmul %67, %68, %cst_31 {dimension_numbers = #tpu.dot_dimension_numbers<[1], [1], [0], [0], [0, 0, 1, 0], [], []>} : vector<8x8xf32>, vector<8x8xf32>, vector<8x8xf32> -> vector<8x8xf32>
    %70 = arith.addf %69, %19 : vector<8x8xf32>
    %cst_32 = arith.constant dense<0xFF800000> : vector<8xf32>
    %71 = vector.multi_reduction <maximumf>, %70, %cst_32 [1] : vector<8x8xf32> to vector<8xf32>
    %72 = vector.shape_cast %71 : vector<8xf32> to vector<8x1xf32>
    %73 = vector.broadcast %72 : vector<8x1xf32> to vector<8x8xf32>
    %74 = arith.subf %70, %73 : vector<8x8xf32>
    %75 = math.exp %74 : vector<8x8xf32>
    %cst_33 = arith.constant dense<0.000000e+00> : vector<8xf32>
    %76 = vector.multi_reduction <add>, %75, %cst_33 [1] : vector<8x8xf32> to vector<8xf32>
    %77 = vector.shape_cast %76 : vector<8xf32> to vector<8x1xf32>
    %78 = tpu.reciprocal %77 {approx = true} : vector<8x1xf32> -> vector<8x1xf32>
    %79 = arith.mulf %77, %78 : vector<8x1xf32>
    %cst_34 = arith.constant 2.000000e+00 : f32
    %80 = vector.broadcast %cst_34 : f32 to vector<8x1xf32>
    %81 = arith.subf %80, %79 : vector<8x1xf32>
    %82 = arith.mulf %78, %81 : vector<8x1xf32>
    %83 = vector.broadcast %82 : vector<8x1xf32> to vector<8x8xf32>
    %84 = arith.mulf %75, %83 : vector<8x8xf32>
    %85 = vector.extract_strided_slice %9 {offsets = [0, 16], sizes = [8, 8], strides = [1, 1]} : vector<8x32xf32> to vector<8x8xf32>
    %cst_35 = arith.constant dense<0.000000e+00> : vector<8x8xf32>
    %86 = tpu.matmul %84, %85, %cst_35 {dimension_numbers = #tpu.dot_dimension_numbers<[1], [0], [0], [1], [0, 0, 1, 1], [], []>} : vector<8x8xf32>, vector<8x8xf32>, vector<8x8xf32> -> vector<8x8xf32>
    %c16 = arith.constant 16 : index
    %c0_36 = arith.constant 0 : index
    %87 = vector.load %arg4[%c16, %c0_36] : memref<32x32xf32, #tpu.memory_space<vmem>>, vector<8x32xf32>
    %cst_37 = arith.constant dense<0.000000e+00> : vector<8x32xf32>
    %88 = tpu.matmul %86, %87, %cst_37 {dimension_numbers = #tpu.dot_dimension_numbers<[1], [0], [0], [1], [0, 0, 1, 1], [], []>} : vector<8x8xf32>, vector<8x32xf32>, vector<8x32xf32> -> vector<8x32xf32>
    %89 = arith.addf %66, %88 : vector<8x32xf32>
    %90 = vector.extract_strided_slice %7 {offsets = [0, 24], sizes = [8, 8], strides = [1, 1]} : vector<8x32xf32> to vector<8x8xf32>
    %91 = vector.extract_strided_slice %8 {offsets = [0, 24], sizes = [8, 8], strides = [1, 1]} : vector<8x32xf32> to vector<8x8xf32>
    %cst_38 = arith.constant dense<0.000000e+00> : vector<8x8xf32>
    %92 = tpu.matmul %90, %91, %cst_38 {dimension_numbers = #tpu.dot_dimension_numbers<[1], [1], [0], [0], [0, 0, 1, 0], [], []>} : vector<8x8xf32>, vector<8x8xf32>, vector<8x8xf32> -> vector<8x8xf32>
    %93 = arith.addf %92, %19 : vector<8x8xf32>
    %cst_39 = arith.constant dense<0xFF800000> : vector<8xf32>
    %94 = vector.multi_reduction <maximumf>, %93, %cst_39 [1] : vector<8x8xf32> to vector<8xf32>
    %95 = vector.shape_cast %94 : vector<8xf32> to vector<8x1xf32>
    %96 = vector.broadcast %95 : vector<8x1xf32> to vector<8x8xf32>
    %97 = arith.subf %93, %96 : vector<8x8xf32>
    %98 = math.exp %97 : vector<8x8xf32>
    %cst_40 = arith.constant dense<0.000000e+00> : vector<8xf32>
    %99 = vector.multi_reduction <add>, %98, %cst_40 [1] : vector<8x8xf32> to vector<8xf32>
    %100 = vector.shape_cast %99 : vector<8xf32> to vector<8x1xf32>
    %101 = tpu.reciprocal %100 {approx = true} : vector<8x1xf32> -> vector<8x1xf32>
    %102 = arith.mulf %100, %101 : vector<8x1xf32>
    %cst_41 = arith.constant 2.000000e+00 : f32
    %103 = vector.broadcast %cst_41 : f32 to vector<8x1xf32>
    %104 = arith.subf %103, %102 : vector<8x1xf32>
    %105 = arith.mulf %101, %104 : vector<8x1xf32>
    %106 = vector.broadcast %105 : vector<8x1xf32> to vector<8x8xf32>
    %107 = arith.mulf %98, %106 : vector<8x8xf32>
    %108 = vector.extract_strided_slice %9 {offsets = [0, 24], sizes = [8, 8], strides = [1, 1]} : vector<8x32xf32> to vector<8x8xf32>
    %cst_42 = arith.constant dense<0.000000e+00> : vector<8x8xf32>
    %109 = tpu.matmul %107, %108, %cst_42 {dimension_numbers = #tpu.dot_dimension_numbers<[1], [0], [0], [1], [0, 0, 1, 1], [], []>} : vector<8x8xf32>, vector<8x8xf32>, vector<8x8xf32> -> vector<8x8xf32>
    %c24 = arith.constant 24 : index
    %c0_43 = arith.constant 0 : index
    %110 = vector.load %arg4[%c24, %c0_43] : memref<32x32xf32, #tpu.memory_space<vmem>>, vector<8x32xf32>
    %cst_44 = arith.constant dense<0.000000e+00> : vector<8x32xf32>
    %111 = tpu.matmul %109, %110, %cst_44 {dimension_numbers = #tpu.dot_dimension_numbers<[1], [0], [0], [1], [0, 0, 1, 1], [], []>} : vector<8x8xf32>, vector<8x32xf32>, vector<8x32xf32> -> vector<8x32xf32>
    %112 = arith.addf %89, %111 : vector<8x32xf32>
    %c0_45 = arith.constant 0 : index
    %c0_46 = arith.constant 0 : index
    %113 = vector.load %arg5[%c0_45, %c0_46] : memref<1x32xf32, #tpu.memory_space<vmem>>, vector<1x32xf32>
    %114 = vector.broadcast %113 : vector<1x32xf32> to vector<8x32xf32>
    %115 = arith.addf %112, %114 : vector<8x32xf32>
    %c0_47 = arith.constant 0 : index
    %c0_48 = arith.constant 0 : index
    %c0_49 = arith.constant 0 : index
    %116 = vector.load %arg7[%c0_47, %c0_48, %c0_49] : memref<1x8x32xf32, #tpu.memory_space<vmem>>, vector<1x8x32xf32>
    %117 = vector.shape_cast %116 : vector<1x8x32xf32> to vector<8x32xf32>
    %118 = vector.shape_cast %115 : vector<8x32xf32> to vector<1x8x32xf32>
    tpu.vector_store %arg7[%c0_47, %c0_48, %c0_49], %118 {strides = array<i32>} : memref<1x8x32xf32, #tpu.memory_space<vmem>>, vector<1x8x32xf32>,
    return
  }
  func.func @transform_0(%arg0: i32) -> (i32, i32, i32) {
    %c0_i32 = arith.constant 0 : i32
    %c0_i32_0 = arith.constant 0 : i32
    %c0_i32_1 = arith.constant 0 : i32
    return %arg0, %c0_i32, %c0_i32_0 : i32, i32, i32
  }
  func.func @transform_1(%arg0: i32) -> (i32, i32) {
    %c0_i32 = arith.constant 0 : i32
    %c0_i32_0 = arith.constant 0 : i32
    %c0_i32_1 = arith.constant 0 : i32
    return %c0_i32, %c0_i32_0 : i32, i32
  }
  func.func @transform_2(%arg0: i32) -> (i32, i32) {
    %c0_i32 = arith.constant 0 : i32
    %c0_i32_0 = arith.constant 0 : i32
    %c0_i32_1 = arith.constant 0 : i32
    return %c0_i32, %c0_i32_0 : i32, i32
  }
  func.func @transform_3(%arg0: i32) -> (i32, i32) {
    %c0_i32 = arith.constant 0 : i32
    %c0_i32_0 = arith.constant 0 : i32
    %c0_i32_1 = arith.constant 0 : i32
    return %c0_i32, %c0_i32_0 : i32, i32
  }
  func.func @transform_4(%arg0: i32) -> (i32, i32) {
    %c0_i32 = arith.constant 0 : i32
    %c0_i32_0 = arith.constant 0 : i32
    %c0_i32_1 = arith.constant 0 : i32
    return %c0_i32, %c0_i32_0 : i32, i32
  }
  func.func @transform_5(%arg0: i32) -> (i32, i32, i32) {
    %c0_i32 = arith.constant 0 : i32
    %c0_i32_0 = arith.constant 0 : i32
    %c0_i32_1 = arith.constant 0 : i32
    return %arg0, %c0_i32, %c0_i32_0 : i32, i32, i32
  }
  func.func @transform_6(%arg0: i32) -> (i32, i32, i32) {
    %c0_i32 = arith.constant 0 : i32
    %c0_i32_0 = arith.constant 0 : i32
    %c0_i32_1 = arith.constant 0 : i32
    return %arg0, %c0_i32, %c0_i32_0 : i32, i32, i32
  }
  func.func @transform_7(%arg0: i32) -> (i32, i32, i32) {
    %c0_i32 = arith.constant 0 : i32
    %c0_i32_0 = arith.constant 0 : i32
    %c0_i32_1 = arith.constant 0 : i32
    return %arg0, %c0_i32, %c0_i32_0 : i32, i32, i32
  }
  func.func @transform_8(%arg0: i32) -> (i32, i32, i32) {
    %c0_i32 = arith.constant 0 : i32
    %c0_i32_0 = arith.constant 0 : i32
    %c0_i32_1 = arith.constant 0 : i32
    return %arg0, %c0_i32, %c0_i32_0 : i32, i32, i32
  }
}

module attributes {stable_mosaic.version = 11 : i64} {
  func.func @_self_attn_kernel(%arg0: i32, %arg1: memref<1x8x32xf32, #tpu.memory_space<vmem>>, %arg2: memref<32x96xf32, #tpu.memory_space<vmem>>, %arg3: memref<1x96xf32, #tpu.memory_space<vmem>>, %arg4: memref<32x32xf32, #tpu.memory_space<vmem>>, %arg5: memref<1x32xf32, #tpu.memory_space<vmem>>, %arg6: memref<1x1x8xf32, #tpu.memory_space<vmem>>, %arg7: memref<1x8x32xf32, #tpu.memory_space<vmem>>, %arg8: memref<1x8x32xf32, #tpu.memory_space<vmem>>, %arg9: memref<1x8x32xf32, #tpu.memory_space<vmem>>) attributes {dimension_semantics = [#tpu.dimension_semantics<parallel>], iteration_bounds = array<i64: 2>, scalar_prefetch = 0 : i64, scratch_operands = 0 : i64, tpu.core_type = #tpu.core_type<tc>, window_params = [{transform_indices = @transform_0, window_bounds = array<i64: 1, 8, 32>}, {pipeline_mode = #tpu.pipeline_mode<synchronous>, transform_indices = @transform_1, window_bounds = array<i64: 32, 96>}, {pipeline_mode = #tpu.pipeline_mode<synchronous>, transform_indices = @transform_2, window_bounds = array<i64: 1, 96>}, {pipeline_mode = #tpu.pipeline_mode<synchronous>, transform_indices = @transform_3, window_bounds = array<i64: 32, 32>}, {pipeline_mode = #tpu.pipeline_mode<synchronous>, transform_indices = @transform_4, window_bounds = array<i64: 1, 32>}, {transform_indices = @transform_5, window_bounds = array<i64: 1, 1, 8>}, {transform_indices = @transform_6, window_bounds = array<i64: 1, 8, 32>}, {transform_indices = @transform_7, window_bounds = array<i64: 1, 8, 32>}, {transform_indices = @transform_8, window_bounds = array<i64: 1, 8, 32>}]} {
    %c0 = arith.constant 0 : index
    %c0_0 = arith.constant 0 : index
    %c0_1 = arith.constant 0 : index
    %0 = vector.load %arg1[%c0, %c0_0, %c0_1] : memref<1x8x32xf32, #tpu.memory_space<vmem>>, vector<1x8x32xf32>
    %1 = vector.shape_cast %0 : vector<1x8x32xf32> to vector<8x32xf32>
    %c0_2 = arith.constant 0 : index
    %c0_3 = arith.constant 0 : index
    %2 = vector.load %arg2[%c0_2, %c0_3] : memref<32x96xf32, #tpu.memory_space<vmem>>, vector<32x96xf32>
    %cst = arith.constant dense<0.000000e+00> : vector<8x96xf32>
    %3 = tpu.matmul %1, %2, %cst {dimension_numbers = #tpu.dot_dimension_numbers<[1], [0], [0], [1], [0, 0, 1, 1], [], []>} : vector<8x32xf32>, vector<32x96xf32>, vector<8x96xf32> -> vector<8x96xf32>
    %c0_4 = arith.constant 0 : index
    %c0_5 = arith.constant 0 : index
    %4 = vector.load %arg3[%c0_4, %c0_5] : memref<1x96xf32, #tpu.memory_space<vmem>>, vector<1x96xf32>
    %5 = vector.broadcast %4 : vector<1x96xf32> to vector<8x96xf32>
    %6 = arith.addf %3, %5 : vector<8x96xf32>
    %7 = vector.extract_strided_slice %6 {offsets = [0, 0], sizes = [8, 32], strides = [1, 1]} : vector<8x96xf32> to vector<8x32xf32>
    %8 = vector.extract_strided_slice %6 {offsets = [0, 32], sizes = [8, 32], strides = [1, 1]} : vector<8x96xf32> to vector<8x32xf32>
    %9 = vector.extract_strided_slice %6 {offsets = [0, 64], sizes = [8, 32], strides = [1, 1]} : vector<8x96xf32> to vector<8x32xf32>
    %c0_6 = arith.constant 0 : index
    %c0_7 = arith.constant 0 : index
    %c0_8 = arith.constant 0 : index
    %10 = vector.load %arg8[%c0_6, %c0_7, %c0_8] : memref<1x8x32xf32, #tpu.memory_space<vmem>>, vector<1x8x32xf32>
    %11 = vector.shape_cast %10 : vector<1x8x32xf32> to vector<8x32xf32>
    %12 = vector.shape_cast %8 : vector<8x32xf32> to vector<1x8x32xf32>
    tpu.vector_store %arg8[%c0_6, %c0_7, %c0_8], %12 {strides = array<i32>} : memref<1x8x32xf32, #tpu.memory_space<vmem>>, vector<1x8x32xf32>,
    %c0_9 = arith.constant 0 : index
    %c0_10 = arith.constant 0 : index
    %c0_11 = arith.constant 0 : index
    %13 = vector.load %arg9[%c0_9, %c0_10, %c0_11] : memref<1x8x32xf32, #tpu.memory_space<vmem>>, vector<1x8x32xf32>
    %14 = vector.shape_cast %13 : vector<1x8x32xf32> to vector<8x32xf32>
    %15 = vector.shape_cast %9 : vector<8x32xf32> to vector<1x8x32xf32>
    tpu.vector_store %arg9[%c0_9, %c0_10, %c0_11], %15 {strides = array<i32>} : memref<1x8x32xf32, #tpu.memory_space<vmem>>, vector<1x8x32xf32>,
    %c0_12 = arith.constant 0 : index
    %c0_13 = arith.constant 0 : index
    %c0_14 = arith.constant 0 : index
    %16 = vector.load %arg6[%c0_12, %c0_13, %c0_14] : memref<1x1x8xf32, #tpu.memory_space<vmem>>, vector<1x1x8xf32>
    %17 = vector.shape_cast %16 : vector<1x1x8xf32> to vector<1x8xf32>
    %18 = vector.shape_cast %17 : vector<1x8xf32> to vector<1x8xf32>
    %19 = vector.broadcast %18 : vector<1x8xf32> to vector<8x8xf32>
    %cst_15 = arith.constant 0.000000e+00 : f32
    %20 = vector.broadcast %cst_15 : f32 to vector<8x32xf32>
    %21 = vector.extract_strided_slice %7 {offsets = [0, 0], sizes = [8, 8], strides = [1, 1]} : vector<8x32xf32> to vector<8x8xf32>
    %22 = vector.extract_strided_slice %8 {offsets = [0, 0], sizes = [8, 8], strides = [1, 1]} : vector<8x32xf32> to vector<8x8xf32>
    %cst_16 = arith.constant dense<0.000000e+00> : vector<8x8xf32>
    %23 = tpu.matmul %21, %22, %cst_16 {dimension_numbers = #tpu.dot_dimension_numbers<[1], [1], [0], [0], [0, 0, 1, 0], [], []>} : vector<8x8xf32>, vector<8x8xf32>, vector<8x8xf32> -> vector<8x8xf32>
    %24 = arith.addf %23, %19 : vector<8x8xf32>
    %cst_17 = arith.constant dense<0xFF800000> : vector<8xf32>
    %25 = vector.multi_reduction <maximumf>, %24, %cst_17 [1] : vector<8x8xf32> to vector<8xf32>
    %26 = vector.shape_cast %25 : vector<8xf32> to vector<8x1xf32>
    %27 = vector.broadcast %26 : vector<8x1xf32> to vector<8x8xf32>
    %28 = arith.subf %24, %27 : vector<8x8xf32>
    %29 = math.exp %28 : vector<8x8xf32>
    %cst_18 = arith.constant dense<0.000000e+00> : vector<8xf32>
    %30 = vector.multi_reduction <add>, %29, %cst_18 [1] : vector<8x8xf32> to vector<8xf32>
    %31 = vector.shape_cast %30 : vector<8xf32> to vector<8x1xf32>
    %32 = tpu.reciprocal %31 {approx = true} : vector<8x1xf32> -> vector<8x1xf32>
    %33 = arith.mulf %31, %32 : vector<8x1xf32>
    %cst_19 = arith.constant 2.000000e+00 : f32
    %34 = vector.broadcast %cst_19 : f32 to vector<8x1xf32>
    %35 = arith.subf %34, %33 : vector<8x1xf32>
    %36 = arith.mulf %32, %35 : vector<8x1xf32>
    %37 = vector.broadcast %36 : vector<8x1xf32> to vector<8x8xf32>
    %38 = arith.mulf %29, %37 : vector<8x8xf32>
    %39 = vector.extract_strided_slice %9 {offsets = [0, 0], sizes = [8, 8], strides = [1, 1]} : vector<8x32xf32> to vector<8x8xf32>
    %cst_20 = arith.constant dense<0.000000e+00> : vector<8x8xf32>
    %40 = tpu.matmul %38, %39, %cst_20 {dimension_numbers = #tpu.dot_dimension_numbers<[1], [0], [0], [1], [0, 0, 1, 1], [], []>} : vector<8x8xf32>, vector<8x8xf32>, vector<8x8xf32> -> vector<8x8xf32>
    %c0_21 = arith.constant 0 : index
    %c0_22 = arith.constant 0 : index
    %41 = vector.load %arg4[%c0_21, %c0_22] : memref<32x32xf32, #tpu.memory_space<vmem>>, vector<8x32xf32>
    %cst_23 = arith.constant dense<0.000000e+00> : vector<8x32xf32>
    %42 = tpu.matmul %40, %41, %cst_23 {dimension_numbers = #tpu.dot_dimension_numbers<[1], [0], [0], [1], [0, 0, 1, 1], [], []>} : vector<8x8xf32>, vector<8x32xf32>, vector<8x32xf32> -> vector<8x32xf32>
    %43 = arith.addf %20, %42 : vector<8x32xf32>
    %44 = vector.extract_strided_slice %7 {offsets = [0, 8], sizes = [8, 8], strides = [1, 1]} : vector<8x32xf32> to vector<8x8xf32>
    %45 = vector.extract_strided_slice %8 {offsets = [0, 8], sizes = [8, 8], strides = [1, 1]} : vector<8x32xf32> to vector<8x8xf32>
    %cst_24 = arith.constant dense<0.000000e+00> : vector<8x8xf32>
    %46 = tpu.matmul %44, %45, %cst_24 {dimension_numbers = #tpu.dot_dimension_numbers<[1], [1], [0], [0], [0, 0, 1, 0], [], []>} : vector<8x8xf32>, vector<8x8xf32>, vector<8x8xf32> -> vector<8x8xf32>
    %47 = arith.addf %46, %19 : vector<8x8xf32>
    %cst_25 = arith.constant dense<0xFF800000> : vector<8xf32>
    %48 = vector.multi_reduction <maximumf>, %47, %cst_25 [1] : vector<8x8xf32> to vector<8xf32>
    %49 = vector.shape_cast %48 : vector<8xf32> to vector<8x1xf32>
    %50 = vector.broadcast %49 : vector<8x1xf32> to vector<8x8xf32>
    %51 = arith.subf %47, %50 : vector<8x8xf32>
    %52 = math.exp %51 : vector<8x8xf32>
    %cst_26 = arith.constant dense<0.000000e+00> : vector<8xf32>
    %53 = vector.multi_reduction <add>, %52, %cst_26 [1] : vector<8x8xf32> to vector<8xf32>
    %54 = vector.shape_cast %53 : vector<8xf32> to vector<8x1xf32>
    %55 = tpu.reciprocal %54 {approx = true} : vector<8x1xf32> -> vector<8x1xf32>
    %56 = arith.mulf %54, %55 : vector<8x1xf32>
    %cst_27 = arith.constant 2.000000e+00 : f32
    %57 = vector.broadcast %cst_27 : f32 to vector<8x1xf32>
    %58 = arith.subf %57, %56 : vector<8x1xf32>
    %59 = arith.mulf %55, %58 : vector<8x1xf32>
    %60 = vector.broadcast %59 : vector<8x1xf32> to vector<8x8xf32>
    %61 = arith.mulf %52, %60 : vector<8x8xf32>
    %62 = vector.extract_strided_slice %9 {offsets = [0, 8], sizes = [8, 8], strides = [1, 1]} : vector<8x32xf32> to vector<8x8xf32>
    %cst_28 = arith.constant dense<0.000000e+00> : vector<8x8xf32>
    %63 = tpu.matmul %61, %62, %cst_28 {dimension_numbers = #tpu.dot_dimension_numbers<[1], [0], [0], [1], [0, 0, 1, 1], [], []>} : vector<8x8xf32>, vector<8x8xf32>, vector<8x8xf32> -> vector<8x8xf32>
    %c8 = arith.constant 8 : index
    %c0_29 = arith.constant 0 : index
    %64 = vector.load %arg4[%c8, %c0_29] : memref<32x32xf32, #tpu.memory_space<vmem>>, vector<8x32xf32>
    %cst_30 = arith.constant dense<0.000000e+00> : vector<8x32xf32>
    %65 = tpu.matmul %63, %64, %cst_30 {dimension_numbers = #tpu.dot_dimension_numbers<[1], [0], [0], [1], [0, 0, 1, 1], [], []>} : vector<8x8xf32>, vector<8x32xf32>, vector<8x32xf32> -> vector<8x32xf32>
    %66 = arith.addf %43, %65 : vector<8x32xf32>
    %67 = vector.extract_strided_slice %7 {offsets = [0, 16], sizes = [8, 8], strides = [1, 1]} : vector<8x32xf32> to vector<8x8xf32>
    %68 = vector.extract_strided_slice %8 {offsets = [0, 16], sizes = [8, 8], strides = [1, 1]} : vector<8x32xf32> to vector<8x8xf32>
    %cst_31 = arith.constant dense<0.000000e+00> : vector<8x8xf32>
    %69 = tpu.matmul %67, %68, %cst_31 {dimension_numbers = #tpu.dot_dimension_numbers<[1], [1], [0], [0], [0, 0, 1, 0], [], []>} : vector<8x8xf32>, vector<8x8xf32>, vector<8x8xf32> -> vector<8x8xf32>
    %70 = arith.addf %69, %19 : vector<8x8xf32>
    %cst_32 = arith.constant dense<0xFF800000> : vector<8xf32>
    %71 = vector.multi_reduction <maximumf>, %70, %cst_32 [1] : vector<8x8xf32> to vector<8xf32>
    %72 = vector.shape_cast %71 : vector<8xf32> to vector<8x1xf32>
    %73 = vector.broadcast %72 : vector<8x1xf32> to vector<8x8xf32>
    %74 = arith.subf %70, %73 : vector<8x8xf32>
    %75 = math.exp %74 : vector<8x8xf32>
    %cst_33 = arith.constant dense<0.000000e+00> : vector<8xf32>
    %76 = vector.multi_reduction <add>, %75, %cst_33 [1] : vector<8x8xf32> to vector<8xf32>
    %77 = vector.shape_cast %76 : vector<8xf32> to vector<8x1xf32>
    %78 = tpu.reciprocal %77 {approx = true} : vector<8x1xf32> -> vector<8x1xf32>
    %79 = arith.mulf %77, %78 : vector<8x1xf32>
    %cst_34 = arith.constant 2.000000e+00 : f32
    %80 = vector.broadcast %cst_34 : f32 to vector<8x1xf32>
    %81 = arith.subf %80, %79 : vector<8x1xf32>
    %82 = arith.mulf %78, %81 : vector<8x1xf32>
    %83 = vector.broadcast %82 : vector<8x1xf32> to vector<8x8xf32>
    %84 = arith.mulf %75, %83 : vector<8x8xf32>
    %85 = vector.extract_strided_slice %9 {offsets = [0, 16], sizes = [8, 8], strides = [1, 1]} : vector<8x32xf32> to vector<8x8xf32>
    %cst_35 = arith.constant dense<0.000000e+00> : vector<8x8xf32>
    %86 = tpu.matmul %84, %85, %cst_35 {dimension_numbers = #tpu.dot_dimension_numbers<[1], [0], [0], [1], [0, 0, 1, 1], [], []>} : vector<8x8xf32>, vector<8x8xf32>, vector<8x8xf32> -> vector<8x8xf32>
    %c16 = arith.constant 16 : index
    %c0_36 = arith.constant 0 : index
    %87 = vector.load %arg4[%c16, %c0_36] : memref<32x32xf32, #tpu.memory_space<vmem>>, vector<8x32xf32>
    %cst_37 = arith.constant dense<0.000000e+00> : vector<8x32xf32>
    %88 = tpu.matmul %86, %87, %cst_37 {dimension_numbers = #tpu.dot_dimension_numbers<[1], [0], [0], [1], [0, 0, 1, 1], [], []>} : vector<8x8xf32>, vector<8x32xf32>, vector<8x32xf32> -> vector<8x32xf32>
    %89 = arith.addf %66, %88 : vector<8x32xf32>
    %90 = vector.extract_strided_slice %7 {offsets = [0, 24], sizes = [8, 8], strides = [1, 1]} : vector<8x32xf32> to vector<8x8xf32>
    %91 = vector.extract_strided_slice %8 {offsets = [0, 24], sizes = [8, 8], strides = [1, 1]} : vector<8x32xf32> to vector<8x8xf32>
    %cst_38 = arith.constant dense<0.000000e+00> : vector<8x8xf32>
    %92 = tpu.matmul %90, %91, %cst_38 {dimension_numbers = #tpu.dot_dimension_numbers<[1], [1], [0], [0], [0, 0, 1, 0], [], []>} : vector<8x8xf32>, vector<8x8xf32>, vector<8x8xf32> -> vector<8x8xf32>
    %93 = arith.addf %92, %19 : vector<8x8xf32>
    %cst_39 = arith.constant dense<0xFF800000> : vector<8xf32>
    %94 = vector.multi_reduction <maximumf>, %93, %cst_39 [1] : vector<8x8xf32> to vector<8xf32>
    %95 = vector.shape_cast %94 : vector<8xf32> to vector<8x1xf32>
    %96 = vector.broadcast %95 : vector<8x1xf32> to vector<8x8xf32>
    %97 = arith.subf %93, %96 : vector<8x8xf32>
    %98 = math.exp %97 : vector<8x8xf32>
    %cst_40 = arith.constant dense<0.000000e+00> : vector<8xf32>
    %99 = vector.multi_reduction <add>, %98, %cst_40 [1] : vector<8x8xf32> to vector<8xf32>
    %100 = vector.shape_cast %99 : vector<8xf32> to vector<8x1xf32>
    %101 = tpu.reciprocal %100 {approx = true} : vector<8x1xf32> -> vector<8x1xf32>
    %102 = arith.mulf %100, %101 : vector<8x1xf32>
    %cst_41 = arith.constant 2.000000e+00 : f32
    %103 = vector.broadcast %cst_41 : f32 to vector<8x1xf32>
    %104 = arith.subf %103, %102 : vector<8x1xf32>
    %105 = arith.mulf %101, %104 : vector<8x1xf32>
    %106 = vector.broadcast %105 : vector<8x1xf32> to vector<8x8xf32>
    %107 = arith.mulf %98, %106 : vector<8x8xf32>
    %108 = vector.extract_strided_slice %9 {offsets = [0, 24], sizes = [8, 8], strides = [1, 1]} : vector<8x32xf32> to vector<8x8xf32>
    %cst_42 = arith.constant dense<0.000000e+00> : vector<8x8xf32>
    %109 = tpu.matmul %107, %108, %cst_42 {dimension_numbers = #tpu.dot_dimension_numbers<[1], [0], [0], [1], [0, 0, 1, 1], [], []>} : vector<8x8xf32>, vector<8x8xf32>, vector<8x8xf32> -> vector<8x8xf32>
    %c24 = arith.constant 24 : index
    %c0_43 = arith.constant 0 : index
    %110 = vector.load %arg4[%c24, %c0_43] : memref<32x32xf32, #tpu.memory_space<vmem>>, vector<8x32xf32>
    %cst_44 = arith.constant dense<0.000000e+00> : vector<8x32xf32>
    %111 = tpu.matmul %109, %110, %cst_44 {dimension_numbers = #tpu.dot_dimension_numbers<[1], [0], [0], [1], [0, 0, 1, 1], [], []>} : vector<8x8xf32>, vector<8x32xf32>, vector<8x32xf32> -> vector<8x32xf32>
    %112 = arith.addf %89, %111 : vector<8x32xf32>
    %c0_45 = arith.constant 0 : index
    %c0_46 = arith.constant 0 : index
    %113 = vector.load %arg5[%c0_45, %c0_46] : memref<1x32xf32, #tpu.memory_space<vmem>>, vector<1x32xf32>
    %114 = vector.broadcast %113 : vector<1x32xf32> to vector<8x32xf32>
    %115 = arith.addf %112, %114 : vector<8x32xf32>
    %c0_47 = arith.constant 0 : index
    %c0_48 = arith.constant 0 : index
    %c0_49 = arith.constant 0 : index
    %116 = vector.load %arg7[%c0_47, %c0_48, %c0_49] : memref<1x8x32xf32, #tpu.memory_space<vmem>>, vector<1x8x32xf32>
    %117 = vector.shape_cast %116 : vector<1x8x32xf32> to vector<8x32xf32>
    %118 = vector.shape_cast %115 : vector<8x32xf32> to vector<1x8x32xf32>
    tpu.vector_store %arg7[%c0_47, %c0_48, %c0_49], %118 {strides = array<i32>} : memref<1x8x32xf32, #tpu.memory_space<vmem>>, vector<1x8x32xf32>,
    return
  }
  func.func @transform_0(%arg0: i32) -> (i32, i32, i32) {
    %c0_i32 = arith.constant 0 : i32
    %c0_i32_0 = arith.constant 0 : i32
    %c0_i32_1 = arith.constant 0 : i32
    return %arg0, %c0_i32, %c0_i32_0 : i32, i32, i32
  }
  func.func @transform_1(%arg0: i32) -> (i32, i32) {
    %c0_i32 = arith.constant 0 : i32
    %c0_i32_0 = arith.constant 0 : i32
    %c0_i32_1 = arith.constant 0 : i32
    return %c0_i32, %c0_i32_0 : i32, i32
  }
  func.func @transform_2(%arg0: i32) -> (i32, i32) {
    %c0_i32 = arith.constant 0 : i32
    %c0_i32_0 = arith.constant 0 : i32
    %c0_i32_1 = arith.constant 0 : i32
    return %c0_i32, %c0_i32_0 : i32, i32
  }
  func.func @transform_3(%arg0: i32) -> (i32, i32) {
    %c0_i32 = arith.constant 0 : i32
    %c0_i32_0 = arith.constant 0 : i32
    %c0_i32_1 = arith.constant 0 : i32
    return %c0_i32, %c0_i32_0 : i32, i32
  }
  func.func @transform_4(%arg0: i32) -> (i32, i32) {
    %c0_i32 = arith.constant 0 : i32
    %c0_i32_0 = arith.constant 0 : i32
    %c0_i32_1 = arith.constant 0 : i32
    return %c0_i32, %c0_i32_0 : i32, i32
  }
  func.func @transform_5(%arg0: i32) -> (i32, i32, i32) {
    %c0_i32 = arith.constant 0 : i32
    %c0_i32_0 = arith.constant 0 : i32
    %c0_i32_1 = arith.constant 0 : i32
    return %arg0, %c0_i32, %c0_i32_0 : i32, i32, i32
  }
  func.func @transform_6(%arg0: i32) -> (i32, i32, i32) {
    %c0_i32 = arith.constant 0 : i32
    %c0_i32_0 = arith.constant 0 : i32
    %c0_i32_1 = arith.constant 0 : i32
    return %arg0, %c0_i32, %c0_i32_0 : i32, i32, i32
  }
  func.func @transform_7(%arg0: i32) -> (i32, i32, i32) {
    %c0_i32 = arith.constant 0 : i32
    %c0_i32_0 = arith.constant 0 : i32
    %c0_i32_1 = arith.constant 0 : i32
    return %arg0, %c0_i32, %c0_i32_0 : i32, i32, i32
  }
  func.func @transform_8(%arg0: i32) -> (i32, i32, i32) {
    %c0_i32 = arith.constant 0 : i32
    %c0_i32_0 = arith.constant 0 : i32
    %c0_i32_1 = arith.constant 0 : i32
    return %arg0, %c0_i32, %c0_i32_0 : i32, i32, i32
  }
}

</mosaic_0001>

<llo_original>
// kernel: tpu_custom_call.1
$region0: #{tpu_custom_call.1}
  #allocation0 [shape = 'u32[]', space=smem, size = 0x4, offset = 0x4, fixed_abs, tag = 'smem constant byte address 0x4 - core index']
  #allocation1 [shape = 'u32[144,128]{1,0:T(1,128)}', space=vmem, size = 0x12000, scoped, tag = 'internal scratch']
  %s0 = inlined_call_operand.hbm [shape: f32[2,8,32], index: 0, kind: input, shape index: {}]
  %s1 = inlined_call_operand.hbm [shape: f32[32,96], index: 1, kind: input, shape index: {}]
  %s2 = inlined_call_operand.vmem [shape: f32[1,96], index: 2, kind: input, shape index: {}]
  %s3 = inlined_call_operand.hbm [shape: f32[32,32], index: 3, kind: input, shape index: {}]
  %s4 = inlined_call_operand.vmem [shape: f32[1,32], index: 4, kind: input, shape index: {}]
  %s5 = inlined_call_operand.vmem [shape: f32[2,1,8], index: 5, kind: input, shape index: {}]
  %s6 = inlined_call_operand.hbm [shape: f32[2,8,32], index: 6, kind: output, shape index: {0}]
  %s7 = inlined_call_operand.hbm [shape: f32[2,8,32], index: 7, kind: output, shape index: {1}]
  %s8 = inlined_call_operand.hbm [shape: f32[2,8,32], index: 8, kind: output, shape index: {2}]
  %9 = xla_tuple %s6, %s7, %s8
  %s10 = sld [smem:[#allocation0]]
  $region85: #{tpu_custom_call.1} parent=0
    _
  %s12 = ssub.s32 1, %s10
  %s13 = scalar_select 0, %s12, %s10
  $region1: #{tpu_custom_call.1} parent=0
    #allocation2 [shape = 'u8[8192]{0}', space=vmem, size = 0x2000, scoped, tag = 'input window, operand 0']
    #allocation3 [shape = 's32[2]{0}', space=sflag, size = 0x8, scoped, tag = 'scoped memory for tpu_custom_call.1']
    #allocation4 [shape = 's32[2]{0}', space=sflag, size = 0x8, scoped, tag = 'scoped memory for tpu_custom_call.1']
    #allocation5 [shape = 'u8[16384]{0}', space=vmem, size = 0x4000, scoped, tag = 'input window, operand 1, single buffered']
    #allocation6 [shape = 's32[1]{0}', space=sflag, size = 0x4, scoped, tag = 'scoped memory for tpu_custom_call.1']
    #allocation7 [shape = 'u8[16384]{0}', space=vmem, size = 0x4000, scoped, tag = 'input window, operand 3, single buffered']
    #allocation8 [shape = 'u8[8192]{0}', space=vmem, size = 0x2000, scoped, tag = 'output window, operand 0']
    #allocation9 [shape = 'u8[8192]{0}', space=vmem, size = 0x2000, scoped, tag = 'output window, operand 1']
    #allocation10 [shape = 's32[2]{0}', space=sflag, size = 0x8, scoped, tag = 'scoped memory for tpu_custom_call.1']
    #allocation11 [shape = 'u8[8192]{0}', space=vmem, size = 0x2000, scoped, tag = 'output window, operand 2']
    %14 = vsyncpa [#allocation3], 0
    %s15 = scalar_lea.sflag [#allocation3], 1
    %16 = vsyncpa %s15, 0
    %17 = vsyncpa [#allocation6], 0
    %18 = vsyncpa [#allocation4], 0
    %s19 = scalar_lea.sflag [#allocation4], 1
    %20 = vsyncpa %s19, 0
    %21 = vsyncpa [#allocation10], 0
    %s22 = scalar_lea.sflag [#allocation10], 1
    %23 = vsyncpa %s22, 0
    loop: start=0, step=1, limit=4
    $region2: #{tpu_custom_call.1} parent=1 // loop_pre_header
      _
    $region3: #{tpu_custom_call.1} parent=1 // loop_header
      %s25 = sphi 0, %s29
      %p26 = scmp.ge.s32.totalorder %s25, 4
      %s35 = sphi 0, %s37
      %s38 = sphi 0, %s35
      %s39 = sphi 0, %s38
      %s55 = sphi 0, %s39
      %s59 = sphi 0, %s59
      %s61 = sphi 0, %s59
      %s62 = sphi 0, %s61
      %s76 = sphi 0, %s62
      %s80 = sphi 0, %s80
      %s82 = sphi 0, %s80
      %s83 = sphi 0, %s82
      %s97 = sphi 0, %s83
      %s101 = sphi 0, %s101
      %s103 = sphi 0, %s101
      %s104 = sphi 0, %s103
      %s118 = sphi 0, %s104
      %s122 = sphi 0, %s122
      %s124 = sphi 0, %s122
      %s125 = sphi 0, %s124
      %s139 = sphi 0, %s125
      %s145 = sphi 0, %s147
      %s148 = sphi 0, %s145
      %s149 = sphi 0, %s148
      %s165 = sphi 0, %s149
      %s171 = sphi 0, %s173
      %s174 = sphi 0, %s171
      %s175 = sphi 0, %s174
      %s191 = sphi 0, %s175
      %s197 = sphi 0, %s199
      %s200 = sphi 0, %s197
      %s201 = sphi 0, %s200
      %s217 = sphi 0, %s201
      %s223 = sphi 0, %s225
      %s226 = sphi 0, %s223
      %s227 = sphi 0, %s226
      %s243 = sphi 0, %s227
    $region4: #{tpu_custom_call.1} parent=1 // loop_header_branch
      %28 = sbr.rel (%p26) target = $region8
    $region5: #{tpu_custom_call.1} parent=1 // loop_body
      %s30 = ssub.s32 %s25, 1
      %s31 = ssub.s32 %s25, 2
      %s32 = sadd.s32 %s25, 1
      %s33 = ssub.s32 %s25, %s32
      %p34 = scmp.eq.s32.totalorder %s33, 0
      %s36 = sadd.s32 %s35, 1
      %s37 = scalar_select %p34, %s35, %s36
      %p40 = pneg %p34
      %p41 = scmp.eq.s32.totalorder %s25, 1
      %p42 = por %p40, %p41
      %p43 = scmp.ne.s32.totalorder %s35, %s38
      %p44 = scmp.eq.s32.totalorder %s25, 0
      %p45 = por %p43, %p44
      %p46 = scmp.ne.s32.totalorder %s35, %s38
      %p47 = scmp.eq.s32.totalorder %s30, 1
      %p48 = por %p46, %p47
      %p49 = scmp.ne.s32.totalorder %s38, %s39
      %p50 = scmp.eq.s32.totalorder %s30, 0
      %p51 = por %p49, %p50
      %p52 = scmp.ne.s32.totalorder %s38, %s39
      %p53 = scmp.eq.s32.totalorder %s31, 1
      %p54 = por %p52, %p53
      %p56 = scmp.ne.s32.totalorder %s39, %s55
      %p57 = scmp.eq.s32.totalorder %s31, 0
      %p58 = por %p56, %p57
      %s60 = sadd.s32 %s59, 1
      %p63 = scmp.eq.s32.totalorder %s25, 1
      %p64 = scmp.ne.s32.totalorder %s59, %s61
      %p65 = scmp.eq.s32.totalorder %s25, 0
      %p66 = por %p64, %p65
      %p67 = scmp.ne.s32.totalorder %s59, %s61
      %p68 = scmp.eq.s32.totalorder %s30, 1
      %p69 = por %p67, %p68
      %p70 = scmp.ne.s32.totalorder %s61, %s62
      %p71 = scmp.eq.s32.totalorder %s30, 0
      %p72 = por %p70, %p71
      %p73 = scmp.ne.s32.totalorder %s61, %s62
      %p74 = scmp.eq.s32.totalorder %s31, 1
      %p75 = por %p73, %p74
      %p77 = scmp.ne.s32.totalorder %s62, %s76
      %p78 = scmp.eq.s32.totalorder %s31, 0
      %p79 = por %p77, %p78
      %s81 = sadd.s32 %s80, 1
      %p84 = scmp.eq.s32.totalorder %s25, 1
      %p85 = scmp.ne.s32.totalorder %s80, %s82
      %p86 = scmp.eq.s32.totalorder %s25, 0
      %p87 = por %p85, %p86
      %p88 = scmp.ne.s32.totalorder %s80, %s82
      %p89 = scmp.eq.s32.totalorder %s30, 1
      %p90 = por %p88, %p89
      %p91 = scmp.ne.s32.totalorder %s82, %s83
      %p92 = scmp.eq.s32.totalorder %s30, 0
      %p93 = por %p91, %p92
      %p94 = scmp.ne.s32.totalorder %s82, %s83
      %p95 = scmp.eq.s32.totalorder %s31, 1
      %p96 = por %p94, %p95
      %p98 = scmp.ne.s32.totalorder %s83, %s97
      %p99 = scmp.eq.s32.totalorder %s31, 0
      %p100 = por %p98, %p99
      %s102 = sadd.s32 %s101, 1
      %p105 = scmp.eq.s32.totalorder %s25, 1
      %p106 = scmp.ne.s32.totalorder %s101, %s103
      %p107 = scmp.eq.s32.totalorder %s25, 0
      %p108 = por %p106, %p107
      %p109 = scmp.ne.s32.totalorder %s101, %s103
      %p110 = scmp.eq.s32.totalorder %s30, 1
      %p111 = por %p109, %p110
      %p112 = scmp.ne.s32.totalorder %s103, %s104
      %p113 = scmp.eq.s32.totalorder %s30, 0
      %p114 = por %p112, %p113
      %p115 = scmp.ne.s32.totalorder %s103, %s104
      %p116 = scmp.eq.s32.totalorder %s31, 1
      %p117 = por %p115, %p116
      %p119 = scmp.ne.s32.totalorder %s104, %s118
      %p120 = scmp.eq.s32.totalorder %s31, 0
      %p121 = por %p119, %p120
      %s123 = sadd.s32 %s122, 1
      %p126 = scmp.eq.s32.totalorder %s25, 1
      %p127 = scmp.ne.s32.totalorder %s122, %s124
      %p128 = scmp.eq.s32.totalorder %s25, 0
      %p129 = por %p127, %p128
      %p130 = scmp.ne.s32.totalorder %s122, %s124
      %p131 = scmp.eq.s32.totalorder %s30, 1
      %p132 = por %p130, %p131
      %p133 = scmp.ne.s32.totalorder %s124, %s125
      %p134 = scmp.eq.s32.totalorder %s30, 0
      %p135 = por %p133, %p134
      %p136 = scmp.ne.s32.totalorder %s124, %s125
      %p137 = scmp.eq.s32.totalorder %s31, 1
      %p138 = por %p136, %p137
      %p140 = scmp.ne.s32.totalorder %s125, %s139
      %p141 = scmp.eq.s32.totalorder %s31, 0
      %p142 = por %p140, %p141
      %s143 = ssub.s32 %s25, %s32
      %p144 = scmp.eq.s32.totalorder %s143, 0
      %s146 = sadd.s32 %s145, 1
      %s147 = scalar_select %p144, %s145, %s146
      %p150 = pneg %p144
      %p151 = scmp.eq.s32.totalorder %s25, 1
      %p152 = por %p150, %p151
      %p153 = scmp.ne.s32.totalorder %s145, %s148
      %p154 = scmp.eq.s32.totalorder %s25, 0
      %p155 = por %p153, %p154
      %p156 = scmp.ne.s32.totalorder %s145, %s148
      %p157 = scmp.eq.s32.totalorder %s30, 1
      %p158 = por %p156, %p157
      %p159 = scmp.ne.s32.totalorder %s148, %s149
      %p160 = scmp.eq.s32.totalorder %s30, 0
      %p161 = por %p159, %p160
      %p162 = scmp.ne.s32.totalorder %s148, %s149
      %p163 = scmp.eq.s32.totalorder %s31, 1
      %p164 = por %p162, %p163
      %p166 = scmp.ne.s32.totalorder %s149, %s165
      %p167 = scmp.eq.s32.totalorder %s31, 0
      %p168 = por %p166, %p167
      %s169 = ssub.s32 %s25, %s32
      %p170 = scmp.eq.s32.totalorder %s169, 0
      %s172 = sadd.s32 %s171, 1
      %s173 = scalar_select %p170, %s171, %s172
      %p176 = pneg %p170
      %p177 = scmp.eq.s32.totalorder %s25, 1
      %p178 = por %p176, %p177
      %p179 = scmp.ne.s32.totalorder %s171, %s174
      %p180 = scmp.eq.s32.totalorder %s25, 0
      %p181 = por %p179, %p180
      %p182 = scmp.ne.s32.totalorder %s171, %s174
      %p183 = scmp.eq.s32.totalorder %s30, 1
      %p184 = por %p182, %p183
      %p185 = scmp.ne.s32.totalorder %s174, %s175
      %p186 = scmp.eq.s32.totalorder %s30, 0
      %p187 = por %p185, %p186
      %p188 = scmp.ne.s32.totalorder %s174, %s175
      %p189 = scmp.eq.s32.totalorder %s31, 1
      %p190 = por %p188, %p189
      %p192 = scmp.ne.s32.totalorder %s175, %s191
      %p193 = scmp.eq.s32.totalorder %s31, 0
      %p194 = por %p192, %p193
      %s195 = ssub.s32 %s25, %s32
      %p196 = scmp.eq.s32.totalorder %s195, 0
      %s198 = sadd.s32 %s197, 1
      %s199 = scalar_select %p196, %s197, %s198
      %p202 = pneg %p196
      %p203 = scmp.eq.s32.totalorder %s25, 1
      %p204 = por %p202, %p203
      %p205 = scmp.ne.s32.totalorder %s197, %s200
      %p206 = scmp.eq.s32.totalorder %s25, 0
      %p207 = por %p205, %p206
      %p208 = scmp.ne.s32.totalorder %s197, %s200
      %p209 = scmp.eq.s32.totalorder %s30, 1
      %p210 = por %p208, %p209
      %p211 = scmp.ne.s32.totalorder %s200, %s201
      %p212 = scmp.eq.s32.totalorder %s30, 0
      %p213 = por %p211, %p212
      %p214 = scmp.ne.s32.totalorder %s200, %s201
      %p215 = scmp.eq.s32.totalorder %s31, 1
      %p216 = por %p214, %p215
      %p218 = scmp.ne.s32.totalorder %s201, %s217
      %p219 = scmp.eq.s32.totalorder %s31, 0
      %p220 = por %p218, %p219
      %s221 = ssub.s32 %s25, %s32
      %p222 = scmp.eq.s32.totalorder %s221, 0
      %s224 = sadd.s32 %s223, 1
      %s225 = scalar_select %p222, %s223, %s224
      %p228 = pneg %p222
      %p229 = scmp.eq.s32.totalorder %s25, 1
      %p230 = por %p228, %p229
      %p231 = scmp.ne.s32.totalorder %s223, %s226
      %p232 = scmp.eq.s32.totalorder %s25, 0
      %p233 = por %p231, %p232
      %p234 = scmp.ne.s32.totalorder %s223, %s226
      %p235 = scmp.eq.s32.totalorder %s30, 1
      %p236 = por %p234, %p235
      %p237 = scmp.ne.s32.totalorder %s226, %s227
      %p238 = scmp.eq.s32.totalorder %s30, 0
      %p239 = por %p237, %p238
      %p240 = scmp.ne.s32.totalorder %s226, %s227
      %p241 = scmp.eq.s32.totalorder %s31, 1
      %p242 = por %p240, %p241
      %p244 = scmp.ne.s32.totalorder %s227, %s243
      %p245 = scmp.eq.s32.totalorder %s31, 0
      %p246 = por %p244, %p245
      %p247 = scmp.le.s32.totalorder 1, %s25
      %p248 = scmp.lt.s32.totalorder %s25, 3
      %p249 = pnand %p247, %p248
      %p250 = pneg %p249
      // Predicated region
      $region9: #{tpu_custom_call.1} parent=5 // pred_check
        _
      $region10: #{tpu_custom_call.1} parent=5 // pred_check_branch
        %252 = sbr.rel (%p249) target = $region12
      $region11: #{tpu_custom_call.1} parent=5 // pred_region
        %s253 = ssub.s32 %s25, 1
        // Predicated region
        $region13: #{tpu_custom_call.1} parent=11 // pred_check
          %p254 = pneg %p72
        $region14: #{tpu_custom_call.1} parent=11 // pred_check_branch
          %256 = sbr.rel (%p254) target = $region16
        $region15: #{tpu_custom_call.1} parent=11 // pred_region
          %s258 = ssub.s32 512, 512
          %259 = vsyncadd [#allocation6], %s258
          %s260 = sshll.u32 [#allocation5], 4
          %s261 = int_to_ptr.vmem [resolvable:$true] %s260
          %266 = dma.hbm_to_vmem [thread:$0]  %s1, 512, %s261, [#allocation6], 128, 128, 8
        $region16: #{tpu_custom_call.1} parent=11 // pred_fallthru
          _
        // Predicated region
        $region17: #{tpu_custom_call.1} parent=11 // pred_check
          %p267 = pneg %p93
        $region18: #{tpu_custom_call.1} parent=11 // pred_check_branch
          %269 = sbr.rel (%p267) target = $region20
        $region19: #{tpu_custom_call.1} parent=11 // pred_region
          _
        $region20: #{tpu_custom_call.1} parent=11 // pred_fallthru
          _
        // Predicated region
        $region21: #{tpu_custom_call.1} parent=11 // pred_check
          %p270 = pneg %p114
        $region22: #{tpu_custom_call.1} parent=11 // pred_check_branch
          %272 = sbr.rel (%p270) target = $region24
        $region23: #{tpu_custom_call.1} parent=11 // pred_region
          %s274 = ssub.s32 512, 512
          %275 = vsyncadd [#allocation6], %s274
          %s276 = sshll.u32 [#allocation7], 4
          %s277 = int_to_ptr.vmem [resolvable:$true] %s276
          %282 = dma.hbm_to_vmem [thread:$0]  %s3, 512, %s277, [#allocation6], 128, 128, 8
        $region24: #{tpu_custom_call.1} parent=11 // pred_fallthru
          _
        // Predicated region
        $region25: #{tpu_custom_call.1} parent=11 // pred_check
          %p283 = pneg %p135
        $region26: #{tpu_custom_call.1} parent=11 // pred_check_branch
          %285 = sbr.rel (%p283) target = $region28
        $region27: #{tpu_custom_call.1} parent=11 // pred_region
          _
        $region28: #{tpu_custom_call.1} parent=11 // pred_fallthru
          _
      $region12: #{tpu_custom_call.1} parent=5 // pred_fallthru
        _
      %p286 = scmp.lt.s32.totalorder %s25, 2
      // Predicated region
      $region29: #{tpu_custom_call.1} parent=5 // pred_check
        %p287 = pneg %p286
      $region30: #{tpu_custom_call.1} parent=5 // pred_check_branch
        %289 = sbr.rel (%p287) target = $region32
      $region31: #{tpu_custom_call.1} parent=5 // pred_region
        // Predicated region
        $region33: #{tpu_custom_call.1} parent=31 // pred_check
          %p290 = pneg %p45
        $region34: #{tpu_custom_call.1} parent=31 // pred_check_branch
          %292 = sbr.rel (%p290) target = $region36
        $region35: #{tpu_custom_call.1} parent=31 // pred_region
          %s293 = sand.u32 %s35, 1
          %s294 = scalar_lea.sflag [#allocation3], %s293
          %s295 = sand.u32 %s35, 1
          %s296 = smul.addr %s295, 8
          %s297 = scalar_lea.vmem [#allocation2], %s296
          %s299 = ssub.s32 128, 128
          %300 = vsyncadd %s294, %s299
          %s301 = smul.addr %s25, 128
          %s302 = scalar_lea.hbm %s0, %s301
          %s304 = sshll.u32 %s297, 4
          %s305 = int_to_ptr.vmem [resolvable:$true] %s304
          %307 = dma.hbm_to_vmem [thread:$0]  %s302, 128, %s305, %s294
        $region36: #{tpu_custom_call.1} parent=31 // pred_fallthru
          _
        // Predicated region
        $region37: #{tpu_custom_call.1} parent=31 // pred_check
          %p308 = pneg %p155
        $region38: #{tpu_custom_call.1} parent=31 // pred_check_branch
          %310 = sbr.rel (%p308) target = $region40
        $region39: #{tpu_custom_call.1} parent=31 // pred_region
          %p311 = scmp.lt.s32.totalorder %s25, 1
          %s312 = scalar_select %p311, %s25, 1
          %s313 = scalar_lea.vmem %s5, %s312
        $region40: #{tpu_custom_call.1} parent=31 // pred_fallthru
          _
      $region32: #{tpu_custom_call.1} parent=5 // pred_fallthru
        _
      %p314 = scmp.le.s32.totalorder 1, %s25
      %p315 = scmp.lt.s32.totalorder %s25, 3
      %p316 = pnand %p314, %p315
      %p317 = pneg %p316
      // Predicated region
      $region41: #{tpu_custom_call.1} parent=5 // pred_check
        _
      $region42: #{tpu_custom_call.1} parent=5 // pred_check_branch
        %319 = sbr.rel (%p316) target = $region44
      $region43: #{tpu_custom_call.1} parent=5 // pred_region
        %s320 = ssub.s32 %s25, 1
        %s321 = sand.u32 %s38, 1
        %s322 = scalar_lea.sflag [#allocation3], %s321
        %s323 = sand.u32 %s38, 1
        %s324 = smul.addr %s323, 8
        %s325 = scalar_lea.vmem [#allocation2], %s324
        // Predicated region
        $region45: #{tpu_custom_call.1} parent=43 // pred_check
          %p326 = pneg %p51
        $region46: #{tpu_custom_call.1} parent=43 // pred_check_branch
          %328 = sbr.rel (%p326) target = $region48
        $region47: #{tpu_custom_call.1} parent=43 // pred_region
          %329 = dma.done %s322, 128
        $region48: #{tpu_custom_call.1} parent=43 // pred_fallthru
          _
        // Predicated region
        $region49: #{tpu_custom_call.1} parent=43 // pred_check
          %p330 = pneg %p72
        $region50: #{tpu_custom_call.1} parent=43 // pred_check_branch
          %332 = sbr.rel (%p330) target = $region52
        $region51: #{tpu_custom_call.1} parent=43 // pred_region
          %333 = dma.done [#allocation6], 512
        $region52: #{tpu_custom_call.1} parent=43 // pred_fallthru
          _
        // Predicated region
        $region53: #{tpu_custom_call.1} parent=43 // pred_check
          %p334 = pneg %p114
        $region54: #{tpu_custom_call.1} parent=43 // pred_check_branch
          %336 = sbr.rel (%p334) target = $region56
        $region55: #{tpu_custom_call.1} parent=43 // pred_region
          %337 = dma.done [#allocation6], 512
        $region56: #{tpu_custom_call.1} parent=43 // pred_fallthru
          _
        %s338 = sand.u32 %s38, 1
        %s339 = scalar_lea.sflag [#allocation3], %s338
        %s340 = sand.u32 %s38, 1
        %s341 = smul.addr %s340, 8
        %s342 = scalar_lea.vmem [#allocation2], %s341
        %p343 = pneg %p51
        %p344 = pneg %p48
        %p345 = pneg %p72
        %p346 = pneg %p69
        %p347 = pneg %p93
        %p348 = pneg %p90
        %p349 = pneg %p114
        %p350 = pneg %p111
        %p351 = pneg %p135
        %p352 = pneg %p132
        %p353 = scmp.lt.s32.totalorder %s30, 1
        %s354 = scalar_select %p353, %s30, 1
        %s355 = scalar_lea.vmem %s5, %s354
        %p356 = pneg %p161
        %p357 = pneg %p158
        %p358 = pneg %p187
        %p359 = pneg %p184
        %s360 = sand.u32 %s174, 1
        %s361 = scalar_lea.sflag [#allocation4], %s360
        %s362 = sand.u32 %s174, 1
        %s363 = smul.addr %s362, 8
        %s364 = scalar_lea.vmem [#allocation8], %s363
        %p365 = pneg %p213
        %p366 = pneg %p210
        %s367 = sand.u32 %s30, 1
        %s368 = scalar_lea.sflag [#allocation10], %s367
        %s369 = sand.u32 %s200, 1
        %s370 = smul.addr %s369, 8
        %s371 = scalar_lea.vmem [#allocation9], %s370
        %p372 = pneg %p239
        %p373 = pneg %p236
        %s374 = sand.u32 %s30, 1
        %s375 = scalar_lea.sflag [#allocation10], %s374
        %s376 = sand.u32 %s226, 1
        %s377 = smul.addr %s376, 8
        %s378 = scalar_lea.vmem [#allocation11], %s377
        %p379 = scmp.lt.s32.totalorder %s30, 1
        %s380 = scalar_select %p379, %s30, 1
        %s381 = scalar_lea.vmem %s5, %s380
        %v382 = vld [vmem:[%s325] sm:$0xff]
        %v383 = vld [vmem:[#allocation5] sm:$0xff]
        %v384 = vld [vmem:[#allocation5 + $0x8] sm:$0xff]
        %v385 = vld [vmem:[#allocation5 + $0x10] sm:$0xff]
        %v386 = vld [vmem:[#allocation5 + $0x18] sm:$0xff]
        %v387 = vld [vmem:[%s2] sm:$0x1]
        %v389 = vlaneseq
        %v390 = vshrl.u32 %v389, 7
        %v391 = vsub.s32 0, %v390
        %v392 = vrot.slane %v387, %v391
        %vm394 = vcmask 261120
        %v396 = vsel %vm394, %v382, 0
        %398 = vmatprep.subr.mxu0 0.0
        %399 = vmatpush1.msra.mxu0 %v383
        %400 = vmatprep.subr.mxu0 0.0
        %401 = vmatpush1.msra.mxu0 %v384
        %402 = vmatprep.subr.mxu0 0.0
        %403 = vmatpush1.msra.mxu0 %v385
        %404 = vmatprep.subr.mxu0 0.0
        %405 = vmatpush1.msra.mxu0 %v386
        %406 = vmatprep.subr.mxu0 0.0
        %407 = vmatpush1.msra.mxu0 0.0
        %408 = vmatprep.subr.mxu0 0.0
        %409 = vmatpush1.msra.mxu0 0.0
        %410 = vmatprep.subr.mxu0 0.0
        %411 = vmatpush1.msra.mxu0 0.0
        %412 = vmatprep.subr.mxu0 0.0
        %413 = vmatpush1.msra.mxu0 0.0
        %414 = vmatprep.subr.mxu0 0.0
        %415 = vmatpush1.msra.mxu0 0.0
        %416 = vmatprep.subr.mxu0 0.0
        %417 = vmatpush1.msra.mxu0 0.0
        %418 = vmatprep.subr.mxu0 0.0
        %419 = vmatpush1.msra.mxu0 0.0
        %420 = vmatprep.subr.mxu0 0.0
        %421 = vmatpush1.msra.mxu0 0.0
        %422 = vmatprep.subr.mxu0 0.0
        %423 = vmatpush1.msra.mxu0 0.0
        %424 = vmatprep.subr.mxu0 0.0
        %425 = vmatpush1.msra.mxu0 0.0
        %426 = vmatprep.subr.mxu0 0.0
        %427 = vmatpush1.msra.mxu0 0.0
        %428 = vmatprep.subr.mxu0 0.0
        %429 = vmatpush1.msra.mxu0 0.0
        %430 = vmatprep.subr.mxu0 0.0
        %431 = vmatpush1.msra.mxu0 0.0
        %432 = vmatprep.subr.mxu0 0.0
        %433 = vmatpush1.msra.mxu0 0.0
        %434 = vmatprep.subr.mxu0 0.0
        %435 = vmatpush1.msra.mxu0 0.0
        %436 = vmatprep.subr.mxu0 0.0
        %437 = vmatpush1.msra.mxu0 0.0
        %438 = vmatprep.subr.mxu0 0.0
        %439 = vmatpush1.msra.mxu0 0.0
        %440 = vmatprep.subr.mxu0 0.0
        %441 = vmatpush1.msra.mxu0 0.0
        %442 = vmatprep.subr.mxu0 0.0
        %443 = vmatpush1.msra.mxu0 0.0
        %444 = vmatprep.subr.mxu0 0.0
        %445 = vmatpush1.msra.mxu0 0.0
        %446 = vmatprep.subr.mxu0 0.0
        %447 = vmatpush1.msra.mxu0 0.0
        %448 = vmatprep.subr.mxu0 0.0
        %449 = vmatpush1.msra.mxu0 0.0
        %450 = vmatprep.subr.mxu0 0.0
        %451 = vmatpush1.msra.mxu0 0.0
        %452 = vmatprep.subr.mxu0 0.0
        %453 = vmatpush1.msra.mxu0 0.0
        %454 = vmatprep.subr.mxu0 0.0
        %455 = vmatpush1.msra.mxu0 0.0
        %456 = vmatprep.subr.mxu0 0.0
        %457 = vmatpush1.msra.mxu0 0.0
        %458 = vmatprep.subr.mxu0 0.0
        %459 = vmatpush1.msra.mxu0 0.0
        %460 = vmatprep.subr.mxu0 0.0
        %461 = vmatpush1.msra.mxu0 0.0
        %462 = vmatprep.mubr.f32.mxu0 0.0
        %463 = vmatmul.mubr.f32.gmra.mrb[0].mxu0 %v396
        %v464 = vpop.f32.mrb[0].mxu0
        %v465 = vadd.f32 %v392, %v464
        %v466 = vpop.f32.mrb[0].mxu0
        %467 = vdwg.mxu0
        %469 = vrot.lane.b32.xlu0 %v465, 96
        %v470 = vpop.permute.xlu0 %469
        %472 = vst.msk [vmem:[%s371] sm:$0xff] %vm394, %v470
        %473 = vrot.lane.b32.xlu0 %v465, 64
        %v474 = vpop.permute.xlu0 %473
        %476 = vst.msk [vmem:[%s378] sm:$0xff] %vm394, %v474
        %v477 = vld [vmem:[%s381] sm:$0x1]
        %v479 = vlaneseq
        %v480 = vshrl.u32 %v479, 7
        %v481 = vsub.s32 0, %v480
        %v482 = vrot.slane %v477, %v481
        %vm484 = vcmask 64512
        %v485 = vsel %vm484, %v465, 0
        %v487 = vsel %vm484, %v470, 0
        %489 = vmatprep.subr.mxu0 0.0
        %490 = vmatpush1.xpose.msra.mxu0 %v487
        %491 = vmatprep.subr.mxu0 0.0
        %492 = vmatpush1.xpose.msra.mxu0 0.0
        %493 = vmatprep.subr.mxu0 0.0
        %494 = vmatpush1.xpose.msra.mxu0 0.0
        %495 = vmatprep.subr.mxu0 0.0
        %496 = vmatpush1.xpose.msra.mxu0 0.0
        %497 = vmatprep.subr.mxu0 0.0
        %498 = vmatpush1.xpose.msra.mxu0 0.0
        %499 = vmatprep.subr.mxu0 0.0
        %500 = vmatpush1.xpose.msra.mxu0 0.0
        %501 = vmatprep.subr.mxu0 0.0
        %502 = vmatpush1.xpose.msra.mxu0 0.0
        %503 = vmatprep.subr.mxu0 0.0
        %504 = vmatpush1.xpose.msra.mxu0 0.0
        %505 = vmatprep.subr.mxu0 0.0
        %506 = vmatpush1.xpose.msra.mxu0 0.0
        %507 = vmatprep.subr.mxu0 0.0
        %508 = vmatpush1.xpose.msra.mxu0 0.0
        %509 = vmatprep.subr.mxu0 0.0
        %510 = vmatpush1.xpose.msra.mxu0 0.0
        %511 = vmatprep.subr.mxu0 0.0
        %512 = vmatpush1.xpose.msra.mxu0 0.0
        %513 = vmatprep.subr.mxu0 0.0
        %514 = vmatpush1.xpose.msra.mxu0 0.0
        %515 = vmatprep.subr.mxu0 0.0
        %516 = vmatpush1.xpose.msra.mxu0 0.0
        %517 = vmatprep.subr.mxu0 0.0
        %518 = vmatpush1.xpose.msra.mxu0 0.0
        %519 = vmatprep.subr.mxu0 0.0
        %520 = vmatpush1.xpose.msra.mxu0 0.0
        %521 = vmatprep.subr.mxu0 0.0
        %522 = vmatpush1.xpose.msra.mxu0 0.0
        %523 = vmatprep.subr.mxu0 0.0
        %524 = vmatpush1.xpose.msra.mxu0 0.0
        %525 = vmatprep.subr.mxu0 0.0
        %526 = vmatpush1.xpose.msra.mxu0 0.0
        %527 = vmatprep.subr.mxu0 0.0
        %528 = vmatpush1.xpose.msra.mxu0 0.0
        %529 = vmatprep.subr.mxu0 0.0
        %530 = vmatpush1.xpose.msra.mxu0 0.0
        %531 = vmatprep.subr.mxu0 0.0
        %532 = vmatpush1.xpose.msra.mxu0 0.0
        %533 = vmatprep.subr.mxu0 0.0
        %534 = vmatpush1.xpose.msra.mxu0 0.0
        %535 = vmatprep.subr.mxu0 0.0
        %536 = vmatpush1.xpose.msra.mxu0 0.0
        %537 = vmatprep.subr.mxu0 0.0
        %538 = vmatpush1.xpose.msra.mxu0 0.0
        %539 = vmatprep.subr.mxu0 0.0
        %540 = vmatpush1.xpose.msra.mxu0 0.0
        %541 = vmatprep.subr.mxu0 0.0
        %542 = vmatpush1.xpose.msra.mxu0 0.0
        %543 = vmatprep.subr.mxu0 0.0
        %544 = vmatpush1.xpose.msra.mxu0 0.0
        %545 = vmatprep.subr.mxu0 0.0
        %546 = vmatpush1.xpose.msra.mxu0 0.0
        %547 = vmatprep.subr.mxu0 0.0
        %548 = vmatpush1.xpose.msra.mxu0 0.0
        %549 = vmatprep.subr.mxu0 0.0
        %550 = vmatpush1.xpose.msra.mxu0 0.0
        %551 = vmatprep.subr.mxu0 0.0
        %552 = vmatpush1.xpose.msra.mxu0 0.0
        %553 = vmatprep.mubr.f32.mxu0 0.0
        %554 = vmatmul.mubr.f32.gmra.mrb[0].mxu0 %v485
        %v555 = vpop.f32.mrb[0].mxu0
        %v556 = vadd.f32 %v482, %v555
        %v557 = vpop.f32.mrb[0].mxu0
        %558 = vdwg.mxu0
        %v559 = vsel %vm484, %v556, -inf
        %560 = vmax.xlane.f32.xlu0 %v559
        %v561 = vpop.xlane.xlu0 %560
        %v562 = vsub.f32 %v556, %v561
        %v563 = vmul.f32 %v562, 1.442695
        %v564 = vpow.pop %v563
        %v565 = vsel %vm484, %v564, 0.0
        %566 = vadd.xlane.f32.xlu0 %v565
        %v567 = vpop.xlane.xlu0 %566
        %v568 = vrcp.pop %v567
        %v569 = vmul.f32 %v567, %v568
        %v570 = vsub.f32 2.0, %v569
        %v571 = vmul.f32 %v568, %v570
        %v572 = vmul.f32 %v564, %v571
        %v574 = vsel %vm484, %v572, 0
        %576 = vmatprep.subr.mxu0 0.0
        %577 = vmatpush1.msra.mxu0 %v474
        %578 = vmatprep.subr.mxu0 0.0
        %579 = vmatpush1.msra.mxu0 0.0
        %580 = vmatprep.subr.mxu0 0.0
        %581 = vmatpush1.msra.mxu0 0.0
        %582 = vmatprep.subr.mxu0 0.0
        %583 = vmatpush1.msra.mxu0 0.0
        %584 = vmatprep.subr.mxu0 0.0
        %585 = vmatpush1.msra.mxu0 0.0
        %586 = vmatprep.subr.mxu0 0.0
        %587 = vmatpush1.msra.mxu0 0.0
        %588 = vmatprep.subr.mxu0 0.0
        %589 = vmatpush1.msra.mxu0 0.0
        %590 = vmatprep.subr.mxu0 0.0
        %591 = vmatpush1.msra.mxu0 0.0
        %592 = vmatprep.subr.mxu0 0.0
        %593 = vmatpush1.msra.mxu0 0.0
        %594 = vmatprep.subr.mxu0 0.0
        %595 = vmatpush1.msra.mxu0 0.0
        %596 = vmatprep.subr.mxu0 0.0
        %597 = vmatpush1.msra.mxu0 0.0
        %598 = vmatprep.subr.mxu0 0.0
        %599 = vmatpush1.msra.mxu0 0.0
        %600 = vmatprep.subr.mxu0 0.0
        %601 = vmatpush1.msra.mxu0 0.0
        %602 = vmatprep.subr.mxu0 0.0
        %603 = vmatpush1.msra.mxu0 0.0
        %604 = vmatprep.subr.mxu0 0.0
        %605 = vmatpush1.msra.mxu0 0.0
        %606 = vmatprep.subr.mxu0 0.0
        %607 = vmatpush1.msra.mxu0 0.0
        %608 = vmatprep.subr.mxu0 0.0
        %609 = vmatpush1.msra.mxu0 0.0
        %610 = vmatprep.subr.mxu0 0.0
        %611 = vmatpush1.msra.mxu0 0.0
        %612 = vmatprep.subr.mxu0 0.0
        %613 = vmatpush1.msra.mxu0 0.0
        %614 = vmatprep.subr.mxu0 0.0
        %615 = vmatpush1.msra.mxu0 0.0
        %616 = vmatprep.subr.mxu0 0.0
        %617 = vmatpush1.msra.mxu0 0.0
        %618 = vmatprep.subr.mxu0 0.0
        %619 = vmatpush1.msra.mxu0 0.0
        %620 = vmatprep.subr.mxu0 0.0
        %621 = vmatpush1.msra.mxu0 0.0
        %622 = vmatprep.subr.mxu0 0.0
        %623 = vmatpush1.msra.mxu0 0.0
        %624 = vmatprep.subr.mxu0 0.0
        %625 = vmatpush1.msra.mxu0 0.0
        %626 = vmatprep.subr.mxu0 0.0
        %627 = vmatpush1.msra.mxu0 0.0
        %628 = vmatprep.subr.mxu0 0.0
        %629 = vmatpush1.msra.mxu0 0.0
        %630 = vmatprep.subr.mxu0 0.0
        %631 = vmatpush1.msra.mxu0 0.0
        %632 = vmatprep.subr.mxu0 0.0
        %633 = vmatpush1.msra.mxu0 0.0
        %634 = vmatprep.subr.mxu0 0.0
        %635 = vmatpush1.msra.mxu0 0.0
        %636 = vmatprep.subr.mxu0 0.0
        %637 = vmatpush1.msra.mxu0 0.0
        %638 = vmatprep.subr.mxu0 0.0
        %639 = vmatpush1.msra.mxu0 0.0
        %640 = vmatprep.mubr.f32.mxu0 0.0
        %641 = vmatmul.mubr.f32.gmra.mrb[0].mxu0 %v574
        %v642 = vpop.f32.mrb[0].mxu0
        %v643 = vadd.f32 0.0, %v642
        %v644 = vpop.f32.mrb[0].mxu0
        %645 = vdwg.mxu0
        %v646 = vld [vmem:[#allocation7] sm:$0xff]
        %647 = vrot.lane.b32.xlu0 %v465, 120
        %v648 = vpop.permute.xlu0 %647
        %649 = vrot.lane.b32.xlu0 %v465, 88
        %v650 = vpop.permute.xlu0 %649
        %v651 = vsel %vm484, %v648, 0
        %v653 = vsel %vm484, %v650, 0
        %655 = vmatprep.subr.mxu0 0.0
        %656 = vmatpush1.xpose.msra.mxu0 %v653
        %657 = vmatprep.subr.mxu0 0.0
        %658 = vmatpush1.xpose.msra.mxu0 0.0
        %659 = vmatprep.subr.mxu0 0.0
        %660 = vmatpush1.xpose.msra.mxu0 0.0
        %661 = vmatprep.subr.mxu0 0.0
        %662 = vmatpush1.xpose.msra.mxu0 0.0
        %663 = vmatprep.subr.mxu0 0.0
        %664 = vmatpush1.xpose.msra.mxu0 0.0
        %665 = vmatprep.subr.mxu0 0.0
        %666 = vmatpush1.xpose.msra.mxu0 0.0
        %667 = vmatprep.subr.mxu0 0.0
        %668 = vmatpush1.xpose.msra.mxu0 0.0
        %669 = vmatprep.subr.mxu0 0.0
        %670 = vmatpush1.xpose.msra.mxu0 0.0
        %671 = vmatprep.subr.mxu0 0.0
        %672 = vmatpush1.xpose.msra.mxu0 0.0
        %673 = vmatprep.subr.mxu0 0.0
        %674 = vmatpush1.xpose.msra.mxu0 0.0
        %675 = vmatprep.subr.mxu0 0.0
        %676 = vmatpush1.xpose.msra.mxu0 0.0
        %677 = vmatprep.subr.mxu0 0.0
        %678 = vmatpush1.xpose.msra.mxu0 0.0
        %679 = vmatprep.subr.mxu0 0.0
        %680 = vmatpush1.xpose.msra.mxu0 0.0
        %681 = vmatprep.subr.mxu0 0.0
        %682 = vmatpush1.xpose.msra.mxu0 0.0
        %683 = vmatprep.subr.mxu0 0.0
        %684 = vmatpush1.xpose.msra.mxu0 0.0
        %685 = vmatprep.subr.mxu0 0.0
        %686 = vmatpush1.xpose.msra.mxu0 0.0
        %687 = vmatprep.subr.mxu0 0.0
        %688 = vmatpush1.xpose.msra.mxu0 0.0
        %689 = vmatprep.subr.mxu0 0.0
        %690 = vmatpush1.xpose.msra.mxu0 0.0
        %691 = vmatprep.subr.mxu0 0.0
        %692 = vmatpush1.xpose.msra.mxu0 0.0
        %693 = vmatprep.subr.mxu0 0.0
        %694 = vmatpush1.xpose.msra.mxu0 0.0
        %695 = vmatprep.subr.mxu0 0.0
        %696 = vmatpush1.xpose.msra.mxu0 0.0
        %697 = vmatprep.subr.mxu0 0.0
        %698 = vmatpush1.xpose.msra.mxu0 0.0
        %699 = vmatprep.subr.mxu0 0.0
        %700 = vmatpush1.xpose.msra.mxu0 0.0
        %701 = vmatprep.subr.mxu0 0.0
        %702 = vmatpush1.xpose.msra.mxu0 0.0
        %703 = vmatprep.subr.mxu0 0.0
        %704 = vmatpush1.xpose.msra.mxu0 0.0
        %705 = vmatprep.subr.mxu0 0.0
        %706 = vmatpush1.xpose.msra.mxu0 0.0
        %707 = vmatprep.subr.mxu0 0.0
        %708 = vmatpush1.xpose.msra.mxu0 0.0
        %709 = vmatprep.subr.mxu0 0.0
        %710 = vmatpush1.xpose.msra.mxu0 0.0
        %711 = vmatprep.subr.mxu0 0.0
        %712 = vmatpush1.xpose.msra.mxu0 0.0
        %713 = vmatprep.subr.mxu0 0.0
        %714 = vmatpush1.xpose.msra.mxu0 0.0
        %715 = vmatprep.subr.mxu0 0.0
        %716 = vmatpush1.xpose.msra.mxu0 0.0
        %717 = vmatprep.subr.mxu0 0.0
        %718 = vmatpush1.xpose.msra.mxu0 0.0
        %719 = vmatprep.mubr.f32.mxu0 0.0
        %720 = vmatmul.mubr.f32.gmra.mrb[0].mxu0 %v651
        %v721 = vpop.f32.mrb[0].mxu0
        %v722 = vadd.f32 %v482, %v721
        %v723 = vpop.f32.mrb[0].mxu0
        %724 = vdwg.mxu0
        %v725 = vsel %vm484, %v722, -inf
        %726 = vmax.xlane.f32.xlu0 %v725
        %v727 = vpop.xlane.xlu0 %726
        %v728 = vsub.f32 %v722, %v727
        %v729 = vmul.f32 %v728, 1.442695
        %v730 = vpow.pop %v729
        %v731 = vsel %vm484, %v730, 0.0
        %732 = vadd.xlane.f32.xlu0 %v731
        %v733 = vpop.xlane.xlu0 %732
        %v734 = vrcp.pop %v733
        %v735 = vmul.f32 %v733, %v734
        %v736 = vsub.f32 2.0, %v735
        %v737 = vmul.f32 %v734, %v736
        %v738 = vmul.f32 %v730, %v737
        %739 = vrot.lane.b32.xlu0 %v465, 56
        %v740 = vpop.permute.xlu0 %739
        %v743 = vsel %vm484, %v738, 0
        %745 = vmatprep.subr.mxu0 0.0
        %746 = vmatpush1.msra.mxu0 %v740
        %747 = vmatprep.subr.mxu0 0.0
        %748 = vmatpush1.msra.mxu0 0.0
        %749 = vmatprep.subr.mxu0 0.0
        %750 = vmatpush1.msra.mxu0 0.0
        %751 = vmatprep.subr.mxu0 0.0
        %752 = vmatpush1.msra.mxu0 0.0
        %753 = vmatprep.subr.mxu0 0.0
        %754 = vmatpush1.msra.mxu0 0.0
        %755 = vmatprep.subr.mxu0 0.0
        %756 = vmatpush1.msra.mxu0 0.0
        %757 = vmatprep.subr.mxu0 0.0
        %758 = vmatpush1.msra.mxu0 0.0
        %759 = vmatprep.subr.mxu0 0.0
        %760 = vmatpush1.msra.mxu0 0.0
        %761 = vmatprep.subr.mxu0 0.0
        %762 = vmatpush1.msra.mxu0 0.0
        %763 = vmatprep.subr.mxu0 0.0
        %764 = vmatpush1.msra.mxu0 0.0
        %765 = vmatprep.subr.mxu0 0.0
        %766 = vmatpush1.msra.mxu0 0.0
        %767 = vmatprep.subr.mxu0 0.0
        %768 = vmatpush1.msra.mxu0 0.0
        %769 = vmatprep.subr.mxu0 0.0
        %770 = vmatpush1.msra.mxu0 0.0
        %771 = vmatprep.subr.mxu0 0.0
        %772 = vmatpush1.msra.mxu0 0.0
        %773 = vmatprep.subr.mxu0 0.0
        %774 = vmatpush1.msra.mxu0 0.0
        %775 = vmatprep.subr.mxu0 0.0
        %776 = vmatpush1.msra.mxu0 0.0
        %777 = vmatprep.subr.mxu0 0.0
        %778 = vmatpush1.msra.mxu0 0.0
        %779 = vmatprep.subr.mxu0 0.0
        %780 = vmatpush1.msra.mxu0 0.0
        %781 = vmatprep.subr.mxu0 0.0
        %782 = vmatpush1.msra.mxu0 0.0
        %783 = vmatprep.subr.mxu0 0.0
        %784 = vmatpush1.msra.mxu0 0.0
        %785 = vmatprep.subr.mxu0 0.0
        %786 = vmatpush1.msra.mxu0 0.0
        %787 = vmatprep.subr.mxu0 0.0
        %788 = vmatpush1.msra.mxu0 0.0
        %789 = vmatprep.subr.mxu0 0.0
        %790 = vmatpush1.msra.mxu0 0.0
        %791 = vmatprep.subr.mxu0 0.0
        %792 = vmatpush1.msra.mxu0 0.0
        %793 = vmatprep.subr.mxu0 0.0
        %794 = vmatpush1.msra.mxu0 0.0
        %795 = vmatprep.subr.mxu0 0.0
        %796 = vmatpush1.msra.mxu0 0.0
        %797 = vmatprep.subr.mxu0 0.0
        %798 = vmatpush1.msra.mxu0 0.0
        %799 = vmatprep.subr.mxu0 0.0
        %800 = vmatpush1.msra.mxu0 0.0
        %801 = vmatprep.subr.mxu0 0.0
        %802 = vmatpush1.msra.mxu0 0.0
        %803 = vmatprep.subr.mxu0 0.0
        %804 = vmatpush1.msra.mxu0 0.0
        %805 = vmatprep.subr.mxu0 0.0
        %806 = vmatpush1.msra.mxu0 0.0
        %807 = vmatprep.subr.mxu0 0.0
        %808 = vmatpush1.msra.mxu0 0.0
        %809 = vmatprep.mubr.f32.mxu0 0.0
        %810 = vmatmul.mubr.f32.gmra.mrb[0].mxu0 %v743
        %v811 = vpop.f32.mrb[0].mxu0
        %v812 = vadd.f32 0.0, %v811
        %v813 = vpop.f32.mrb[0].mxu0
        %814 = vdwg.mxu0
        %v815 = vld [vmem:[#allocation7 + $0x8] sm:$0xff]
        %v817 = vsel %vm484, %v812, 0
        %819 = vmatprep.subr.mxu0 0.0
        %820 = vmatpush1.msra.mxu0 %v815
        %821 = vmatprep.subr.mxu0 0.0
        %822 = vmatpush1.msra.mxu0 0.0
        %823 = vmatprep.subr.mxu0 0.0
        %824 = vmatpush1.msra.mxu0 0.0
        %825 = vmatprep.subr.mxu0 0.0
        %826 = vmatpush1.msra.mxu0 0.0
        %827 = vmatprep.subr.mxu0 0.0
        %828 = vmatpush1.msra.mxu0 0.0
        %829 = vmatprep.subr.mxu0 0.0
        %830 = vmatpush1.msra.mxu0 0.0
        %831 = vmatprep.subr.mxu0 0.0
        %832 = vmatpush1.msra.mxu0 0.0
        %833 = vmatprep.subr.mxu0 0.0
        %834 = vmatpush1.msra.mxu0 0.0
        %835 = vmatprep.subr.mxu0 0.0
        %836 = vmatpush1.msra.mxu0 0.0
        %837 = vmatprep.subr.mxu0 0.0
        %838 = vmatpush1.msra.mxu0 0.0
        %839 = vmatprep.subr.mxu0 0.0
        %840 = vmatpush1.msra.mxu0 0.0
        %841 = vmatprep.subr.mxu0 0.0
        %842 = vmatpush1.msra.mxu0 0.0
        %843 = vmatprep.subr.mxu0 0.0
        %844 = vmatpush1.msra.mxu0 0.0
        %845 = vmatprep.subr.mxu0 0.0
        %846 = vmatpush1.msra.mxu0 0.0
        %847 = vmatprep.subr.mxu0 0.0
        %848 = vmatpush1.msra.mxu0 0.0
        %849 = vmatprep.subr.mxu0 0.0
        %850 = vmatpush1.msra.mxu0 0.0
        %851 = vmatprep.subr.mxu0 0.0
        %852 = vmatpush1.msra.mxu0 0.0
        %853 = vmatprep.subr.mxu0 0.0
        %854 = vmatpush1.msra.mxu0 0.0
        %855 = vmatprep.subr.mxu0 0.0
        %856 = vmatpush1.msra.mxu0 0.0
        %857 = vmatprep.subr.mxu0 0.0
        %858 = vmatpush1.msra.mxu0 0.0
        %859 = vmatprep.subr.mxu0 0.0
        %860 = vmatpush1.msra.mxu0 0.0
        %861 = vmatprep.subr.mxu0 0.0
        %862 = vmatpush1.msra.mxu0 0.0
        %863 = vmatprep.subr.mxu0 0.0
        %864 = vmatpush1.msra.mxu0 0.0
        %865 = vmatprep.subr.mxu0 0.0
        %866 = vmatpush1.msra.mxu0 0.0
        %867 = vmatprep.subr.mxu0 0.0
        %868 = vmatpush1.msra.mxu0 0.0
        %869 = vmatprep.subr.mxu0 0.0
        %870 = vmatpush1.msra.mxu0 0.0
        %871 = vmatprep.subr.mxu0 0.0
        %872 = vmatpush1.msra.mxu0 0.0
        %873 = vmatprep.subr.mxu0 0.0
        %874 = vmatpush1.msra.mxu0 0.0
        %875 = vmatprep.subr.mxu0 0.0
        %876 = vmatpush1.msra.mxu0 0.0
        %877 = vmatprep.subr.mxu0 0.0
        %878 = vmatpush1.msra.mxu0 0.0
        %879 = vmatprep.subr.mxu0 0.0
        %880 = vmatpush1.msra.mxu0 0.0
        %881 = vmatprep.subr.mxu0 0.0
        %882 = vmatpush1.msra.mxu0 0.0
        %883 = vmatprep.mubr.f32.mxu0 0.0
        %884 = vmatmul.mubr.f32.gmra.mrb[0].mxu0 %v817
        %v885 = vpop.f32.mrb[0].mxu0
        %v886 = vadd.f32 0.0, %v885
        %v887 = vpop.f32.mrb[0].mxu0
        %888 = vdwg.mxu0
        %v890 = vsel %vm484, %v643, 0
        %892 = vmatprep.subr.mxu0 0.0
        %893 = vmatpush1.msra.mxu0 %v646
        %894 = vmatprep.subr.mxu0 0.0
        %895 = vmatpush1.msra.mxu0 0.0
        %896 = vmatprep.subr.mxu0 0.0
        %897 = vmatpush1.msra.mxu0 0.0
        %898 = vmatprep.subr.mxu0 0.0
        %899 = vmatpush1.msra.mxu0 0.0
        %900 = vmatprep.subr.mxu0 0.0
        %901 = vmatpush1.msra.mxu0 0.0
        %902 = vmatprep.subr.mxu0 0.0
        %903 = vmatpush1.msra.mxu0 0.0
        %904 = vmatprep.subr.mxu0 0.0
        %905 = vmatpush1.msra.mxu0 0.0
        %906 = vmatprep.subr.mxu0 0.0
        %907 = vmatpush1.msra.mxu0 0.0
        %908 = vmatprep.subr.mxu0 0.0
        %909 = vmatpush1.msra.mxu0 0.0
        %910 = vmatprep.subr.mxu0 0.0
        %911 = vmatpush1.msra.mxu0 0.0
        %912 = vmatprep.subr.mxu0 0.0
        %913 = vmatpush1.msra.mxu0 0.0
        %914 = vmatprep.subr.mxu0 0.0
        %915 = vmatpush1.msra.mxu0 0.0
        %916 = vmatprep.subr.mxu0 0.0
        %917 = vmatpush1.msra.mxu0 0.0
        %918 = vmatprep.subr.mxu0 0.0
        %919 = vmatpush1.msra.mxu0 0.0
        %920 = vmatprep.subr.mxu0 0.0
        %921 = vmatpush1.msra.mxu0 0.0
        %922 = vmatprep.subr.mxu0 0.0
        %923 = vmatpush1.msra.mxu0 0.0
        %924 = vmatprep.subr.mxu0 0.0
        %925 = vmatpush1.msra.mxu0 0.0
        %926 = vmatprep.subr.mxu0 0.0
        %927 = vmatpush1.msra.mxu0 0.0
        %928 = vmatprep.subr.mxu0 0.0
        %929 = vmatpush1.msra.mxu0 0.0
        %930 = vmatprep.subr.mxu0 0.0
        %931 = vmatpush1.msra.mxu0 0.0
        %932 = vmatprep.subr.mxu0 0.0
        %933 = vmatpush1.msra.mxu0 0.0
        %934 = vmatprep.subr.mxu0 0.0
        %935 = vmatpush1.msra.mxu0 0.0
        %936 = vmatprep.subr.mxu0 0.0
        %937 = vmatpush1.msra.mxu0 0.0
        %938 = vmatprep.subr.mxu0 0.0
        %939 = vmatpush1.msra.mxu0 0.0
        %940 = vmatprep.subr.mxu0 0.0
        %941 = vmatpush1.msra.mxu0 0.0
        %942 = vmatprep.subr.mxu0 0.0
        %943 = vmatpush1.msra.mxu0 0.0
        %944 = vmatprep.subr.mxu0 0.0
        %945 = vmatpush1.msra.mxu0 0.0
        %946 = vmatprep.subr.mxu0 0.0
        %947 = vmatpush1.msra.mxu0 0.0
        %948 = vmatprep.subr.mxu0 0.0
        %949 = vmatpush1.msra.mxu0 0.0
        %950 = vmatprep.subr.mxu0 0.0
        %951 = vmatpush1.msra.mxu0 0.0
        %952 = vmatprep.subr.mxu0 0.0
        %953 = vmatpush1.msra.mxu0 0.0
        %954 = vmatprep.subr.mxu0 0.0
        %955 = vmatpush1.msra.mxu0 0.0
        %956 = vmatprep.mubr.f32.mxu0 0.0
        %957 = vmatmul.mubr.f32.gmra.mrb[0].mxu0 %v890
        %v958 = vpop.f32.mrb[0].mxu0
        %v959 = vadd.f32 %v886, %v958
        %v960 = vpop.f32.mrb[0].mxu0
        %961 = vdwg.mxu0
        %962 = vrot.lane.b32.xlu0 %v465, 112
        %v963 = vpop.permute.xlu0 %962
        %964 = vrot.lane.b32.xlu0 %v465, 80
        %v965 = vpop.permute.xlu0 %964
        %v966 = vsel %vm484, %v963, 0
        %v968 = vsel %vm484, %v965, 0
        %970 = vmatprep.subr.mxu0 0.0
        %971 = vmatpush1.xpose.msra.mxu0 %v968
        %972 = vmatprep.subr.mxu0 0.0
        %973 = vmatpush1.xpose.msra.mxu0 0.0
        %974 = vmatprep.subr.mxu0 0.0
        %975 = vmatpush1.xpose.msra.mxu0 0.0
        %976 = vmatprep.subr.mxu0 0.0
        %977 = vmatpush1.xpose.msra.mxu0 0.0
        %978 = vmatprep.subr.mxu0 0.0
        %979 = vmatpush1.xpose.msra.mxu0 0.0
        %980 = vmatprep.subr.mxu0 0.0
        %981 = vmatpush1.xpose.msra.mxu0 0.0
        %982 = vmatprep.subr.mxu0 0.0
        %983 = vmatpush1.xpose.msra.mxu0 0.0
        %984 = vmatprep.subr.mxu0 0.0
        %985 = vmatpush1.xpose.msra.mxu0 0.0
        %986 = vmatprep.subr.mxu0 0.0
        %987 = vmatpush1.xpose.msra.mxu0 0.0
        %988 = vmatprep.subr.mxu0 0.0
        %989 = vmatpush1.xpose.msra.mxu0 0.0
        %990 = vmatprep.subr.mxu0 0.0
        %991 = vmatpush1.xpose.msra.mxu0 0.0
        %992 = vmatprep.subr.mxu0 0.0
        %993 = vmatpush1.xpose.msra.mxu0 0.0
        %994 = vmatprep.subr.mxu0 0.0
        %995 = vmatpush1.xpose.msra.mxu0 0.0
        %996 = vmatprep.subr.mxu0 0.0
        %997 = vmatpush1.xpose.msra.mxu0 0.0
        %998 = vmatprep.subr.mxu0 0.0
        %999 = vmatpush1.xpose.msra.mxu0 0.0
        %1000 = vmatprep.subr.mxu0 0.0
        %1001 = vmatpush1.xpose.msra.mxu0 0.0
        %1002 = vmatprep.subr.mxu0 0.0
        %1003 = vmatpush1.xpose.msra.mxu0 0.0
        %1004 = vmatprep.subr.mxu0 0.0
        %1005 = vmatpush1.xpose.msra.mxu0 0.0
        %1006 = vmatprep.subr.mxu0 0.0
        %1007 = vmatpush1.xpose.msra.mxu0 0.0
        %1008 = vmatprep.subr.mxu0 0.0
        %1009 = vmatpush1.xpose.msra.mxu0 0.0
        %1010 = vmatprep.subr.mxu0 0.0
        %1011 = vmatpush1.xpose.msra.mxu0 0.0
        %1012 = vmatprep.subr.mxu0 0.0
        %1013 = vmatpush1.xpose.msra.mxu0 0.0
        %1014 = vmatprep.subr.mxu0 0.0
        %1015 = vmatpush1.xpose.msra.mxu0 0.0
        %1016 = vmatprep.subr.mxu0 0.0
        %1017 = vmatpush1.xpose.msra.mxu0 0.0
        %1018 = vmatprep.subr.mxu0 0.0
        %1019 = vmatpush1.xpose.msra.mxu0 0.0
        %1020 = vmatprep.subr.mxu0 0.0
        %1021 = vmatpush1.xpose.msra.mxu0 0.0
        %1022 = vmatprep.subr.mxu0 0.0
        %1023 = vmatpush1.xpose.msra.mxu0 0.0
        %1024 = vmatprep.subr.mxu0 0.0
        %1025 = vmatpush1.xpose.msra.mxu0 0.0
        %1026 = vmatprep.subr.mxu0 0.0
        %1027 = vmatpush1.xpose.msra.mxu0 0.0
        %1028 = vmatprep.subr.mxu0 0.0
        %1029 = vmatpush1.xpose.msra.mxu0 0.0
        %1030 = vmatprep.subr.mxu0 0.0
        %1031 = vmatpush1.xpose.msra.mxu0 0.0
        %1032 = vmatprep.subr.mxu0 0.0
        %1033 = vmatpush1.xpose.msra.mxu0 0.0
        %1034 = vmatprep.mubr.f32.mxu0 0.0
        %1035 = vmatmul.mubr.f32.gmra.mrb[0].mxu0 %v966
        %v1036 = vpop.f32.mrb[0].mxu0
        %v1037 = vadd.f32 %v482, %v1036
        %v1038 = vpop.f32.mrb[0].mxu0
        %1039 = vdwg.mxu0
        %v1040 = vsel %vm484, %v1037, -inf
        %1041 = vmax.xlane.f32.xlu0 %v1040
        %v1042 = vpop.xlane.xlu0 %1041
        %v1043 = vsub.f32 %v1037, %v1042
        %v1044 = vmul.f32 %v1043, 1.442695
        %v1045 = vpow.pop %v1044
        %v1046 = vsel %vm484, %v1045, 0.0
        %1047 = vadd.xlane.f32.xlu0 %v1046
        %v1048 = vpop.xlane.xlu0 %1047
        %v1049 = vrcp.pop %v1048
        %v1050 = vmul.f32 %v1048, %v1049
        %v1051 = vsub.f32 2.0, %v1050
        %v1052 = vmul.f32 %v1049, %v1051
        %v1053 = vmul.f32 %v1045, %v1052
        %1054 = vrot.lane.b32.xlu0 %v465, 48
        %v1055 = vpop.permute.xlu0 %1054
        %v1058 = vsel %vm484, %v1053, 0
        %1060 = vmatprep.subr.mxu0 0.0
        %1061 = vmatpush1.msra.mxu0 %v1055
        %1062 = vmatprep.subr.mxu0 0.0
        %1063 = vmatpush1.msra.mxu0 0.0
        %1064 = vmatprep.subr.mxu0 0.0
        %1065 = vmatpush1.msra.mxu0 0.0
        %1066 = vmatprep.subr.mxu0 0.0
        %1067 = vmatpush1.msra.mxu0 0.0
        %1068 = vmatprep.subr.mxu0 0.0
        %1069 = vmatpush1.msra.mxu0 0.0
        %1070 = vmatprep.subr.mxu0 0.0
        %1071 = vmatpush1.msra.mxu0 0.0
        %1072 = vmatprep.subr.mxu0 0.0
        %1073 = vmatpush1.msra.mxu0 0.0
        %1074 = vmatprep.subr.mxu0 0.0
        %1075 = vmatpush1.msra.mxu0 0.0
        %1076 = vmatprep.subr.mxu0 0.0
        %1077 = vmatpush1.msra.mxu0 0.0
        %1078 = vmatprep.subr.mxu0 0.0
        %1079 = vmatpush1.msra.mxu0 0.0
        %1080 = vmatprep.subr.mxu0 0.0
        %1081 = vmatpush1.msra.mxu0 0.0
        %1082 = vmatprep.subr.mxu0 0.0
        %1083 = vmatpush1.msra.mxu0 0.0
        %1084 = vmatprep.subr.mxu0 0.0
        %1085 = vmatpush1.msra.mxu0 0.0
        %1086 = vmatprep.subr.mxu0 0.0
        %1087 = vmatpush1.msra.mxu0 0.0
        %1088 = vmatprep.subr.mxu0 0.0
        %1089 = vmatpush1.msra.mxu0 0.0
        %1090 = vmatprep.subr.mxu0 0.0
        %1091 = vmatpush1.msra.mxu0 0.0
        %1092 = vmatprep.subr.mxu0 0.0
        %1093 = vmatpush1.msra.mxu0 0.0
        %1094 = vmatprep.subr.mxu0 0.0
        %1095 = vmatpush1.msra.mxu0 0.0
        %1096 = vmatprep.subr.mxu0 0.0
        %1097 = vmatpush1.msra.mxu0 0.0
        %1098 = vmatprep.subr.mxu0 0.0
        %1099 = vmatpush1.msra.mxu0 0.0
        %1100 = vmatprep.subr.mxu0 0.0
        %1101 = vmatpush1.msra.mxu0 0.0
        %1102 = vmatprep.subr.mxu0 0.0
        %1103 = vmatpush1.msra.mxu0 0.0
        %1104 = vmatprep.subr.mxu0 0.0
        %1105 = vmatpush1.msra.mxu0 0.0
        %1106 = vmatprep.subr.mxu0 0.0
        %1107 = vmatpush1.msra.mxu0 0.0
        %1108 = vmatprep.subr.mxu0 0.0
        %1109 = vmatpush1.msra.mxu0 0.0
        %1110 = vmatprep.subr.mxu0 0.0
        %1111 = vmatpush1.msra.mxu0 0.0
        %1112 = vmatprep.subr.mxu0 0.0
        %1113 = vmatpush1.msra.mxu0 0.0
        %1114 = vmatprep.subr.mxu0 0.0
        %1115 = vmatpush1.msra.mxu0 0.0
        %1116 = vmatprep.subr.mxu0 0.0
        %1117 = vmatpush1.msra.mxu0 0.0
        %1118 = vmatprep.subr.mxu0 0.0
        %1119 = vmatpush1.msra.mxu0 0.0
        %1120 = vmatprep.subr.mxu0 0.0
        %1121 = vmatpush1.msra.mxu0 0.0
        %1122 = vmatprep.subr.mxu0 0.0
        %1123 = vmatpush1.msra.mxu0 0.0
        %1124 = vmatprep.mubr.f32.mxu0 0.0
        %1125 = vmatmul.mubr.f32.gmra.mrb[0].mxu0 %v1058
        %v1126 = vpop.f32.mrb[0].mxu0
        %v1127 = vadd.f32 0.0, %v1126
        %v1128 = vpop.f32.mrb[0].mxu0
        %1129 = vdwg.mxu0
        %v1130 = vld [vmem:[#allocation7 + $0x10] sm:$0xff]
        %v1132 = vsel %vm484, %v1127, 0
        %1134 = vmatprep.subr.mxu0 0.0
        %1135 = vmatpush1.msra.mxu0 %v1130
        %1136 = vmatprep.subr.mxu0 0.0
        %1137 = vmatpush1.msra.mxu0 0.0
        %1138 = vmatprep.subr.mxu0 0.0
        %1139 = vmatpush1.msra.mxu0 0.0
        %1140 = vmatprep.subr.mxu0 0.0
        %1141 = vmatpush1.msra.mxu0 0.0
        %1142 = vmatprep.subr.mxu0 0.0
        %1143 = vmatpush1.msra.mxu0 0.0
        %1144 = vmatprep.subr.mxu0 0.0
        %1145 = vmatpush1.msra.mxu0 0.0
        %1146 = vmatprep.subr.mxu0 0.0
        %1147 = vmatpush1.msra.mxu0 0.0
        %1148 = vmatprep.subr.mxu0 0.0
        %1149 = vmatpush1.msra.mxu0 0.0
        %1150 = vmatprep.subr.mxu0 0.0
        %1151 = vmatpush1.msra.mxu0 0.0
        %1152 = vmatprep.subr.mxu0 0.0
        %1153 = vmatpush1.msra.mxu0 0.0
        %1154 = vmatprep.subr.mxu0 0.0
        %1155 = vmatpush1.msra.mxu0 0.0
        %1156 = vmatprep.subr.mxu0 0.0
        %1157 = vmatpush1.msra.mxu0 0.0
        %1158 = vmatprep.subr.mxu0 0.0
        %1159 = vmatpush1.msra.mxu0 0.0
        %1160 = vmatprep.subr.mxu0 0.0
        %1161 = vmatpush1.msra.mxu0 0.0
        %1162 = vmatprep.subr.mxu0 0.0
        %1163 = vmatpush1.msra.mxu0 0.0
        %1164 = vmatprep.subr.mxu0 0.0
        %1165 = vmatpush1.msra.mxu0 0.0
        %1166 = vmatprep.subr.mxu0 0.0
        %1167 = vmatpush1.msra.mxu0 0.0
        %1168 = vmatprep.subr.mxu0 0.0
        %1169 = vmatpush1.msra.mxu0 0.0
        %1170 = vmatprep.subr.mxu0 0.0
        %1171 = vmatpush1.msra.mxu0 0.0
        %1172 = vmatprep.subr.mxu0 0.0
        %1173 = vmatpush1.msra.mxu0 0.0
        %1174 = vmatprep.subr.mxu0 0.0
        %1175 = vmatpush1.msra.mxu0 0.0
        %1176 = vmatprep.subr.mxu0 0.0
        %1177 = vmatpush1.msra.mxu0 0.0
        %1178 = vmatprep.subr.mxu0 0.0
        %1179 = vmatpush1.msra.mxu0 0.0
        %1180 = vmatprep.subr.mxu0 0.0
        %1181 = vmatpush1.msra.mxu0 0.0
        %1182 = vmatprep.subr.mxu0 0.0
        %1183 = vmatpush1.msra.mxu0 0.0
        %1184 = vmatprep.subr.mxu0 0.0
        %1185 = vmatpush1.msra.mxu0 0.0
        %1186 = vmatprep.subr.mxu0 0.0
        %1187 = vmatpush1.msra.mxu0 0.0
        %1188 = vmatprep.subr.mxu0 0.0
        %1189 = vmatpush1.msra.mxu0 0.0
        %1190 = vmatprep.subr.mxu0 0.0
        %1191 = vmatpush1.msra.mxu0 0.0
        %1192 = vmatprep.subr.mxu0 0.0
        %1193 = vmatpush1.msra.mxu0 0.0
        %1194 = vmatprep.subr.mxu0 0.0
        %1195 = vmatpush1.msra.mxu0 0.0
        %1196 = vmatprep.subr.mxu0 0.0
        %1197 = vmatpush1.msra.mxu0 0.0
        %1198 = vmatprep.mubr.f32.mxu0 0.0
        %1199 = vmatmul.mubr.f32.gmra.mrb[0].mxu0 %v1132
        %v1200 = vpop.f32.mrb[0].mxu0
        %v1201 = vadd.f32 0.0, %v1200
        %v1202 = vpop.f32.mrb[0].mxu0
        %1203 = vdwg.mxu0
        %v1204 = vadd.f32 %v959, %v1201
        %1205 = vrot.lane.b32.xlu0 %v465, 104
        %v1206 = vpop.permute.xlu0 %1205
        %1207 = vrot.lane.b32.xlu0 %v465, 72
        %v1208 = vpop.permute.xlu0 %1207
        %v1209 = vsel %vm484, %v1206, 0
        %v1211 = vsel %vm484, %v1208, 0
        %1213 = vmatprep.subr.mxu0 0.0
        %1214 = vmatpush1.xpose.msra.mxu0 %v1211
        %1215 = vmatprep.subr.mxu0 0.0
        %1216 = vmatpush1.xpose.msra.mxu0 0.0
        %1217 = vmatprep.subr.mxu0 0.0
        %1218 = vmatpush1.xpose.msra.mxu0 0.0
        %1219 = vmatprep.subr.mxu0 0.0
        %1220 = vmatpush1.xpose.msra.mxu0 0.0
        %1221 = vmatprep.subr.mxu0 0.0
        %1222 = vmatpush1.xpose.msra.mxu0 0.0
        %1223 = vmatprep.subr.mxu0 0.0
        %1224 = vmatpush1.xpose.msra.mxu0 0.0
        %1225 = vmatprep.subr.mxu0 0.0
        %1226 = vmatpush1.xpose.msra.mxu0 0.0
        %1227 = vmatprep.subr.mxu0 0.0
        %1228 = vmatpush1.xpose.msra.mxu0 0.0
        %1229 = vmatprep.subr.mxu0 0.0
        %1230 = vmatpush1.xpose.msra.mxu0 0.0
        %1231 = vmatprep.subr.mxu0 0.0
        %1232 = vmatpush1.xpose.msra.mxu0 0.0
        %1233 = vmatprep.subr.mxu0 0.0
        %1234 = vmatpush1.xpose.msra.mxu0 0.0
        %1235 = vmatprep.subr.mxu0 0.0
        %1236 = vmatpush1.xpose.msra.mxu0 0.0
        %1237 = vmatprep.subr.mxu0 0.0
        %1238 = vmatpush1.xpose.msra.mxu0 0.0
        %1239 = vmatprep.subr.mxu0 0.0
        %1240 = vmatpush1.xpose.msra.mxu0 0.0
        %1241 = vmatprep.subr.mxu0 0.0
        %1242 = vmatpush1.xpose.msra.mxu0 0.0
        %1243 = vmatprep.subr.mxu0 0.0
        %1244 = vmatpush1.xpose.msra.mxu0 0.0
        %1245 = vmatprep.subr.mxu0 0.0
        %1246 = vmatpush1.xpose.msra.mxu0 0.0
        %1247 = vmatprep.subr.mxu0 0.0
        %1248 = vmatpush1.xpose.msra.mxu0 0.0
        %1249 = vmatprep.subr.mxu0 0.0
        %1250 = vmatpush1.xpose.msra.mxu0 0.0
        %1251 = vmatprep.subr.mxu0 0.0
        %1252 = vmatpush1.xpose.msra.mxu0 0.0
        %1253 = vmatprep.subr.mxu0 0.0
        %1254 = vmatpush1.xpose.msra.mxu0 0.0
        %1255 = vmatprep.subr.mxu0 0.0
        %1256 = vmatpush1.xpose.msra.mxu0 0.0
        %1257 = vmatprep.subr.mxu0 0.0
        %1258 = vmatpush1.xpose.msra.mxu0 0.0
        %1259 = vmatprep.subr.mxu0 0.0
        %1260 = vmatpush1.xpose.msra.mxu0 0.0
        %1261 = vmatprep.subr.mxu0 0.0
        %1262 = vmatpush1.xpose.msra.mxu0 0.0
        %1263 = vmatprep.subr.mxu0 0.0
        %1264 = vmatpush1.xpose.msra.mxu0 0.0
        %1265 = vmatprep.subr.mxu0 0.0
        %1266 = vmatpush1.xpose.msra.mxu0 0.0
        %1267 = vmatprep.subr.mxu0 0.0
        %1268 = vmatpush1.xpose.msra.mxu0 0.0
        %1269 = vmatprep.subr.mxu0 0.0
        %1270 = vmatpush1.xpose.msra.mxu0 0.0
        %1271 = vmatprep.subr.mxu0 0.0
        %1272 = vmatpush1.xpose.msra.mxu0 0.0
        %1273 = vmatprep.subr.mxu0 0.0
        %1274 = vmatpush1.xpose.msra.mxu0 0.0
        %1275 = vmatprep.subr.mxu0 0.0
        %1276 = vmatpush1.xpose.msra.mxu0 0.0
        %1277 = vmatprep.mubr.f32.mxu0 0.0
        %1278 = vmatmul.mubr.f32.gmra.mrb[0].mxu0 %v1209
        %v1279 = vpop.f32.mrb[0].mxu0
        %v1280 = vadd.f32 %v482, %v1279
        %v1281 = vpop.f32.mrb[0].mxu0
        %1282 = vdwg.mxu0
        %v1283 = vsel %vm484, %v1280, -inf
        %1284 = vmax.xlane.f32.xlu0 %v1283
        %v1285 = vpop.xlane.xlu0 %1284
        %v1286 = vsub.f32 %v1280, %v1285
        %v1287 = vmul.f32 %v1286, 1.442695
        %v1288 = vpow.pop %v1287
        %v1289 = vsel %vm484, %v1288, 0.0
        %1290 = vadd.xlane.f32.xlu0 %v1289
        %v1291 = vpop.xlane.xlu0 %1290
        %v1292 = vrcp.pop %v1291
        %v1293 = vmul.f32 %v1291, %v1292
        %v1294 = vsub.f32 2.0, %v1293
        %v1295 = vmul.f32 %v1292, %v1294
        %v1296 = vmul.f32 %v1288, %v1295
        %1297 = vrot.lane.b32.xlu0 %v465, 40
        %v1298 = vpop.permute.xlu0 %1297
        %v1301 = vsel %vm484, %v1296, 0
        %1303 = vmatprep.subr.mxu0 0.0
        %1304 = vmatpush1.msra.mxu0 %v1298
        %1305 = vmatprep.subr.mxu0 0.0
        %1306 = vmatpush1.msra.mxu0 0.0
        %1307 = vmatprep.subr.mxu0 0.0
        %1308 = vmatpush1.msra.mxu0 0.0
        %1309 = vmatprep.subr.mxu0 0.0
        %1310 = vmatpush1.msra.mxu0 0.0
        %1311 = vmatprep.subr.mxu0 0.0
        %1312 = vmatpush1.msra.mxu0 0.0
        %1313 = vmatprep.subr.mxu0 0.0
        %1314 = vmatpush1.msra.mxu0 0.0
        %1315 = vmatprep.subr.mxu0 0.0
        %1316 = vmatpush1.msra.mxu0 0.0
        %1317 = vmatprep.subr.mxu0 0.0
        %1318 = vmatpush1.msra.mxu0 0.0
        %1319 = vmatprep.subr.mxu0 0.0
        %1320 = vmatpush1.msra.mxu0 0.0
        %1321 = vmatprep.subr.mxu0 0.0
        %1322 = vmatpush1.msra.mxu0 0.0
        %1323 = vmatprep.subr.mxu0 0.0
        %1324 = vmatpush1.msra.mxu0 0.0
        %1325 = vmatprep.subr.mxu0 0.0
        %1326 = vmatpush1.msra.mxu0 0.0
        %1327 = vmatprep.subr.mxu0 0.0
        %1328 = vmatpush1.msra.mxu0 0.0
        %1329 = vmatprep.subr.mxu0 0.0
        %1330 = vmatpush1.msra.mxu0 0.0
        %1331 = vmatprep.subr.mxu0 0.0
        %1332 = vmatpush1.msra.mxu0 0.0
        %1333 = vmatprep.subr.mxu0 0.0
        %1334 = vmatpush1.msra.mxu0 0.0
        %1335 = vmatprep.subr.mxu0 0.0
        %1336 = vmatpush1.msra.mxu0 0.0
        %1337 = vmatprep.subr.mxu0 0.0
        %1338 = vmatpush1.msra.mxu0 0.0
        %1339 = vmatprep.subr.mxu0 0.0
        %1340 = vmatpush1.msra.mxu0 0.0
        %1341 = vmatprep.subr.mxu0 0.0
        %1342 = vmatpush1.msra.mxu0 0.0
        %1343 = vmatprep.subr.mxu0 0.0
        %1344 = vmatpush1.msra.mxu0 0.0
        %1345 = vmatprep.subr.mxu0 0.0
        %1346 = vmatpush1.msra.mxu0 0.0
        %1347 = vmatprep.subr.mxu0 0.0
        %1348 = vmatpush1.msra.mxu0 0.0
        %1349 = vmatprep.subr.mxu0 0.0
        %1350 = vmatpush1.msra.mxu0 0.0
        %1351 = vmatprep.subr.mxu0 0.0
        %1352 = vmatpush1.msra.mxu0 0.0
        %1353 = vmatprep.subr.mxu0 0.0
        %1354 = vmatpush1.msra.mxu0 0.0
        %1355 = vmatprep.subr.mxu0 0.0
        %1356 = vmatpush1.msra.mxu0 0.0
        %1357 = vmatprep.subr.mxu0 0.0
        %1358 = vmatpush1.msra.mxu0 0.0
        %1359 = vmatprep.subr.mxu0 0.0
        %1360 = vmatpush1.msra.mxu0 0.0
        %1361 = vmatprep.subr.mxu0 0.0
        %1362 = vmatpush1.msra.mxu0 0.0
        %1363 = vmatprep.subr.mxu0 0.0
        %1364 = vmatpush1.msra.mxu0 0.0
        %1365 = vmatprep.subr.mxu0 0.0
        %1366 = vmatpush1.msra.mxu0 0.0
        %1367 = vmatprep.mubr.f32.mxu0 0.0
        %1368 = vmatmul.mubr.f32.gmra.mrb[0].mxu0 %v1301
        %v1369 = vpop.f32.mrb[0].mxu0
        %v1370 = vadd.f32 0.0, %v1369
        %v1371 = vpop.f32.mrb[0].mxu0
        %1372 = vdwg.mxu0
        %v1373 = vld [vmem:[#allocation7 + $0x18] sm:$0xff]
        %v1375 = vsel %vm484, %v1370, 0
        %1377 = vmatprep.subr.mxu0 0.0
        %1378 = vmatpush1.msra.mxu0 %v1373
        %1379 = vmatprep.subr.mxu0 0.0
        %1380 = vmatpush1.msra.mxu0 0.0
        %1381 = vmatprep.subr.mxu0 0.0
        %1382 = vmatpush1.msra.mxu0 0.0
        %1383 = vmatprep.subr.mxu0 0.0
        %1384 = vmatpush1.msra.mxu0 0.0
        %1385 = vmatprep.subr.mxu0 0.0
        %1386 = vmatpush1.msra.mxu0 0.0
        %1387 = vmatprep.subr.mxu0 0.0
        %1388 = vmatpush1.msra.mxu0 0.0
        %1389 = vmatprep.subr.mxu0 0.0
        %1390 = vmatpush1.msra.mxu0 0.0
        %1391 = vmatprep.subr.mxu0 0.0
        %1392 = vmatpush1.msra.mxu0 0.0
        %1393 = vmatprep.subr.mxu0 0.0
        %1394 = vmatpush1.msra.mxu0 0.0
        %1395 = vmatprep.subr.mxu0 0.0
        %1396 = vmatpush1.msra.mxu0 0.0
        %1397 = vmatprep.subr.mxu0 0.0
        %1398 = vmatpush1.msra.mxu0 0.0
        %1399 = vmatprep.subr.mxu0 0.0
        %1400 = vmatpush1.msra.mxu0 0.0
        %1401 = vmatprep.subr.mxu0 0.0
        %1402 = vmatpush1.msra.mxu0 0.0
        %1403 = vmatprep.subr.mxu0 0.0
        %1404 = vmatpush1.msra.mxu0 0.0
        %1405 = vmatprep.subr.mxu0 0.0
        %1406 = vmatpush1.msra.mxu0 0.0
        %1407 = vmatprep.subr.mxu0 0.0
        %1408 = vmatpush1.msra.mxu0 0.0
        %1409 = vmatprep.subr.mxu0 0.0
        %1410 = vmatpush1.msra.mxu0 0.0
        %1411 = vmatprep.subr.mxu0 0.0
        %1412 = vmatpush1.msra.mxu0 0.0
        %1413 = vmatprep.subr.mxu0 0.0
        %1414 = vmatpush1.msra.mxu0 0.0
        %1415 = vmatprep.subr.mxu0 0.0
        %1416 = vmatpush1.msra.mxu0 0.0
        %1417 = vmatprep.subr.mxu0 0.0
        %1418 = vmatpush1.msra.mxu0 0.0
        %1419 = vmatprep.subr.mxu0 0.0
        %1420 = vmatpush1.msra.mxu0 0.0
        %1421 = vmatprep.subr.mxu0 0.0
        %1422 = vmatpush1.msra.mxu0 0.0
        %1423 = vmatprep.subr.mxu0 0.0
        %1424 = vmatpush1.msra.mxu0 0.0
        %1425 = vmatprep.subr.mxu0 0.0
        %1426 = vmatpush1.msra.mxu0 0.0
        %1427 = vmatprep.subr.mxu0 0.0
        %1428 = vmatpush1.msra.mxu0 0.0
        %1429 = vmatprep.subr.mxu0 0.0
        %1430 = vmatpush1.msra.mxu0 0.0
        %1431 = vmatprep.subr.mxu0 0.0
        %1432 = vmatpush1.msra.mxu0 0.0
        %1433 = vmatprep.subr.mxu0 0.0
        %1434 = vmatpush1.msra.mxu0 0.0
        %1435 = vmatprep.subr.mxu0 0.0
        %1436 = vmatpush1.msra.mxu0 0.0
        %1437 = vmatprep.subr.mxu0 0.0
        %1438 = vmatpush1.msra.mxu0 0.0
        %1439 = vmatprep.subr.mxu0 0.0
        %1440 = vmatpush1.msra.mxu0 0.0
        %1441 = vmatprep.mubr.f32.mxu0 0.0
        %1442 = vmatmul.mubr.f32.gmra.mrb[0].mxu0 %v1375
        %v1443 = vpop.f32.mrb[0].mxu0
        %v1444 = vadd.f32 0.0, %v1443
        %v1445 = vpop.f32.mrb[0].mxu0
        %1446 = vdwg.mxu0
        %v1447 = vadd.f32 %v1204, %v1444
        %v1448 = vld [vmem:[%s4] sm:$0x1]
        %v1450 = vlaneseq
        %v1451 = vshrl.u32 %v1450, 7
        %v1452 = vsub.s32 0, %v1451
        %v1453 = vrot.slane %v1448, %v1452
        %v1455 = vadd.f32 %v1447, %v1453
        %1456 = vst.msk [vmem:[%s364] sm:$0xff] %vm394, %v1455
        %s1457 = sand.u32 %s174, 1
        %s1458 = scalar_lea.sflag [#allocation4], %s1457
        %s1459 = sand.u32 %s174, 1
        %s1460 = smul.addr %s1459, 8
        %s1461 = scalar_lea.vmem [#allocation8], %s1460
        %s1462 = sand.u32 %s30, 1
        %s1463 = scalar_lea.sflag [#allocation10], %s1462
        %s1464 = sand.u32 %s200, 1
        %s1465 = smul.addr %s1464, 8
        %s1466 = scalar_lea.vmem [#allocation9], %s1465
        %s1467 = sand.u32 %s30, 1
        %s1468 = scalar_lea.sflag [#allocation10], %s1467
        %s1469 = sand.u32 %s226, 1
        %s1470 = smul.addr %s1469, 8
        %s1471 = scalar_lea.vmem [#allocation11], %s1470
        // Predicated region
        $region57: #{tpu_custom_call.1} parent=43 // pred_check
          %p1472 = pneg %p184
        $region58: #{tpu_custom_call.1} parent=43 // pred_check_branch
          %1474 = sbr.rel (%p1472) target = $region60
        $region59: #{tpu_custom_call.1} parent=43 // pred_region
          %s1476 = ssub.s32 128, 128
          %1477 = vsyncadd %s1458, %s1476
          %s1478 = smul.addr %s30, 128
          %s1479 = scalar_lea.hbm %s6, %s1478
          %s1481 = sshll.u32 %s1461, 4
          %s1482 = int_to_ptr.vmem [resolvable:$true] %s1481
          %1484 = dma.vmem_to_hbm [thread:$0]  %s1482, 128, %s1479, %s1458
        $region60: #{tpu_custom_call.1} parent=43 // pred_fallthru
          _
        // Predicated region
        $region61: #{tpu_custom_call.1} parent=43 // pred_check
          %p1485 = pneg %p210
        $region62: #{tpu_custom_call.1} parent=43 // pred_check_branch
          %1487 = sbr.rel (%p1485) target = $region64
        $region63: #{tpu_custom_call.1} parent=43 // pred_region
          %s1489 = ssub.s32 128, 128
          %1490 = vsyncadd %s1463, %s1489
          %s1491 = smul.addr %s30, 128
          %s1492 = scalar_lea.hbm %s7, %s1491
          %s1494 = sshll.u32 %s1466, 4
          %s1495 = int_to_ptr.vmem [resolvable:$true] %s1494
          %1497 = dma.vmem_to_hbm [thread:$0]  %s1495, 128, %s1492, %s1463
        $region64: #{tpu_custom_call.1} parent=43 // pred_fallthru
          _
        // Predicated region
        $region65: #{tpu_custom_call.1} parent=43 // pred_check
          %p1498 = pneg %p236
        $region66: #{tpu_custom_call.1} parent=43 // pred_check_branch
          %1500 = sbr.rel (%p1498) target = $region68
        $region67: #{tpu_custom_call.1} parent=43 // pred_region
          %s1502 = ssub.s32 128, 128
          %1503 = vsyncadd %s1468, %s1502
          %s1504 = smul.addr %s30, 128
          %s1505 = scalar_lea.hbm %s8, %s1504
          %s1507 = sshll.u32 %s1471, 4
          %s1508 = int_to_ptr.vmem [resolvable:$true] %s1507
          %1510 = dma.vmem_to_hbm [thread:$0]  %s1508, 128, %s1505, %s1468
        $region68: #{tpu_custom_call.1} parent=43 // pred_fallthru
          _
      $region44: #{tpu_custom_call.1} parent=5 // pred_fallthru
        _
      %p1511 = scmp.le.s32.totalorder 2, %s25
      // Predicated region
      $region69: #{tpu_custom_call.1} parent=5 // pred_check
        %p1512 = pneg %p1511
      $region70: #{tpu_custom_call.1} parent=5 // pred_check_branch
        %1514 = sbr.rel (%p1512) target = $region72
      $region71: #{tpu_custom_call.1} parent=5 // pred_region
        %s1515 = ssub.s32 %s25, 2
        // Predicated region
        $region73: #{tpu_custom_call.1} parent=71 // pred_check
          %p1516 = pneg %p190
        $region74: #{tpu_custom_call.1} parent=71 // pred_check_branch
          %1518 = sbr.rel (%p1516) target = $region76
        $region75: #{tpu_custom_call.1} parent=71 // pred_region
          %s1519 = sand.u32 %s175, 1
          %s1520 = scalar_lea.sflag [#allocation4], %s1519
          %s1521 = sand.u32 %s175, 1
          %s1522 = smul.addr %s1521, 8
          %s1523 = scalar_lea.vmem [#allocation8], %s1522
          %1524 = dma.done %s1520, 128
        $region76: #{tpu_custom_call.1} parent=71 // pred_fallthru
          _
        // Predicated region
        $region77: #{tpu_custom_call.1} parent=71 // pred_check
          %p1525 = pneg %p216
        $region78: #{tpu_custom_call.1} parent=71 // pred_check_branch
          %1527 = sbr.rel (%p1525) target = $region80
        $region79: #{tpu_custom_call.1} parent=71 // pred_region
          %s1528 = sand.u32 %s31, 1
          %s1529 = scalar_lea.sflag [#allocation10], %s1528
          %s1530 = sand.u32 %s201, 1
          %s1531 = smul.addr %s1530, 8
          %s1532 = scalar_lea.vmem [#allocation9], %s1531
          %1533 = dma.done %s1529, 128
        $region80: #{tpu_custom_call.1} parent=71 // pred_fallthru
          _
        // Predicated region
        $region81: #{tpu_custom_call.1} parent=71 // pred_check
          %p1534 = pneg %p242
        $region82: #{tpu_custom_call.1} parent=71 // pred_check_branch
          %1536 = sbr.rel (%p1534) target = $region84
        $region83: #{tpu_custom_call.1} parent=71 // pred_region
          %s1537 = sand.u32 %s31, 1
          %s1538 = scalar_lea.sflag [#allocation10], %s1537
          %s1539 = sand.u32 %s227, 1
          %s1540 = smul.addr %s1539, 8
          %s1541 = scalar_lea.vmem [#allocation11], %s1540
          %1542 = dma.done %s1538, 128
        $region84: #{tpu_custom_call.1} parent=71 // pred_fallthru
          _
      $region72: #{tpu_custom_call.1} parent=5 // pred_fallthru
        _
    $region6: #{tpu_custom_call.1} parent=1 // loop_footer
      %s29 = sadd.s32 1, %s25
    $region7: #{tpu_custom_call.1} parent=1 // loop_footer_branch
      %24 = sbr.rel target = $region3
    $region8: #{tpu_custom_call.1} parent=1 // loop_exit
      _
    %1543 = vsyncpa [#allocation3], 1
    %s1544 = scalar_lea.sflag [#allocation3], 1
    %1545 = vsyncpa %s1544, 1
    %1546 = vsyncpa [#allocation6], 1
    %1547 = vsyncpa [#allocation4], 1
    %s1548 = scalar_lea.sflag [#allocation4], 1
    %1549 = vsyncpa %s1548, 1
    %1550 = vsyncpa [#allocation10], 1
    %s1551 = scalar_lea.sflag [#allocation10], 1
    %1552 = vsyncpa %s1551, 1

// kernel: tpu_custom_call.1
$region0: #{tpu_custom_call.1}
  #allocation0 [shape = 'u32[]', space=smem, size = 0x4, offset = 0x4, fixed_abs, tag = 'smem constant byte address 0x4 - core index']
  #allocation1 [shape = 'u32[144,128]{1,0:T(1,128)}', space=vmem, size = 0x12000, scoped, tag = 'internal scratch']
  %s0 = inlined_call_operand.hbm [shape: f32[2,8,32], index: 0, kind: input, shape index: {}]
  %s1 = inlined_call_operand.hbm [shape: f32[32,96], index: 1, kind: input, shape index: {}]
  %s2 = inlined_call_operand.vmem [shape: f32[1,96], index: 2, kind: input, shape index: {}]
  %s3 = inlined_call_operand.hbm [shape: f32[32,32], index: 3, kind: input, shape index: {}]
  %s4 = inlined_call_operand.vmem [shape: f32[1,32], index: 4, kind: input, shape index: {}]
  %s5 = inlined_call_operand.vmem [shape: f32[2,1,8], index: 5, kind: input, shape index: {}]
  %s6 = inlined_call_operand.hbm [shape: f32[2,8,32], index: 6, kind: output, shape index: {0}]
  %s7 = inlined_call_operand.hbm [shape: f32[2,8,32], index: 7, kind: output, shape index: {1}]
  %s8 = inlined_call_operand.hbm [shape: f32[2,8,32], index: 8, kind: output, shape index: {2}]
  %9 = xla_tuple %s6, %s7, %s8
  %s10 = sld [smem:[#allocation0]]
  $region85: #{tpu_custom_call.1} parent=0
    _
  %s12 = ssub.s32 1, %s10
  %s13 = scalar_select 0, %s12, %s10
  $region1: #{tpu_custom_call.1} parent=0
    #allocation2 [shape = 'u8[8192]{0}', space=vmem, size = 0x2000, scoped, tag = 'input window, operand 0']
    #allocation3 [shape = 's32[2]{0}', space=sflag, size = 0x8, scoped, tag = 'scoped memory for tpu_custom_call.1']
    #allocation4 [shape = 's32[2]{0}', space=sflag, size = 0x8, scoped, tag = 'scoped memory for tpu_custom_call.1']
    #allocation5 [shape = 'u8[16384]{0}', space=vmem, size = 0x4000, scoped, tag = 'input window, operand 1, single buffered']
    #allocation6 [shape = 's32[1]{0}', space=sflag, size = 0x4, scoped, tag = 'scoped memory for tpu_custom_call.1']
    #allocation7 [shape = 'u8[16384]{0}', space=vmem, size = 0x4000, scoped, tag = 'input window, operand 3, single buffered']
    #allocation8 [shape = 'u8[8192]{0}', space=vmem, size = 0x2000, scoped, tag = 'output window, operand 0']
    #allocation9 [shape = 'u8[8192]{0}', space=vmem, size = 0x2000, scoped, tag = 'output window, operand 1']
    #allocation10 [shape = 's32[2]{0}', space=sflag, size = 0x8, scoped, tag = 'scoped memory for tpu_custom_call.1']
    #allocation11 [shape = 'u8[8192]{0}', space=vmem, size = 0x2000, scoped, tag = 'output window, operand 2']
    %14 = vsyncpa [#allocation3], 0
    %s15 = scalar_lea.sflag [#allocation3], 1
    %16 = vsyncpa %s15, 0
    %17 = vsyncpa [#allocation6], 0
    %18 = vsyncpa [#allocation4], 0
    %s19 = scalar_lea.sflag [#allocation4], 1
    %20 = vsyncpa %s19, 0
    %21 = vsyncpa [#allocation10], 0
    %s22 = scalar_lea.sflag [#allocation10], 1
    %23 = vsyncpa %s22, 0
    loop: start=0, step=1, limit=4
    $region2: #{tpu_custom_call.1} parent=1 // loop_pre_header
      _
    $region3: #{tpu_custom_call.1} parent=1 // loop_header
      %s25 = sphi 0, %s29
      %p26 = scmp.ge.s32.totalorder %s25, 4
      %s35 = sphi 0, %s37
      %s38 = sphi 0, %s35
      %s39 = sphi 0, %s38
      %s55 = sphi 0, %s39
      %s59 = sphi 0, %s59
      %s61 = sphi 0, %s59
      %s62 = sphi 0, %s61
      %s76 = sphi 0, %s62
      %s80 = sphi 0, %s80
      %s82 = sphi 0, %s80
      %s83 = sphi 0, %s82
      %s97 = sphi 0, %s83
      %s101 = sphi 0, %s101
      %s103 = sphi 0, %s101
      %s104 = sphi 0, %s103
      %s118 = sphi 0, %s104
      %s122 = sphi 0, %s122
      %s124 = sphi 0, %s122
      %s125 = sphi 0, %s124
      %s139 = sphi 0, %s125
      %s145 = sphi 0, %s147
      %s148 = sphi 0, %s145
      %s149 = sphi 0, %s148
      %s165 = sphi 0, %s149
      %s171 = sphi 0, %s173
      %s174 = sphi 0, %s171
      %s175 = sphi 0, %s174
      %s191 = sphi 0, %s175
      %s197 = sphi 0, %s199
      %s200 = sphi 0, %s197
      %s201 = sphi 0, %s200
      %s217 = sphi 0, %s201
      %s223 = sphi 0, %s225
      %s226 = sphi 0, %s223
      %s227 = sphi 0, %s226
      %s243 = sphi 0, %s227
    $region4: #{tpu_custom_call.1} parent=1 // loop_header_branch
      %28 = sbr.rel (%p26) target = $region8
    $region5: #{tpu_custom_call.1} parent=1 // loop_body
      %s30 = ssub.s32 %s25, 1
      %s31 = ssub.s32 %s25, 2
      %s32 = sadd.s32 %s25, 1
      %s33 = ssub.s32 %s25, %s32
      %p34 = scmp.eq.s32.totalorder %s33, 0
      %s36 = sadd.s32 %s35, 1
      %s37 = scalar_select %p34, %s35, %s36
      %p40 = pneg %p34
      %p41 = scmp.eq.s32.totalorder %s25, 1
      %p42 = por %p40, %p41
      %p43 = scmp.ne.s32.totalorder %s35, %s38
      %p44 = scmp.eq.s32.totalorder %s25, 0
      %p45 = por %p43, %p44
      %p46 = scmp.ne.s32.totalorder %s35, %s38
      %p47 = scmp.eq.s32.totalorder %s30, 1
      %p48 = por %p46, %p47
      %p49 = scmp.ne.s32.totalorder %s38, %s39
      %p50 = scmp.eq.s32.totalorder %s30, 0
      %p51 = por %p49, %p50
      %p52 = scmp.ne.s32.totalorder %s38, %s39
      %p53 = scmp.eq.s32.totalorder %s31, 1
      %p54 = por %p52, %p53
      %p56 = scmp.ne.s32.totalorder %s39, %s55
      %p57 = scmp.eq.s32.totalorder %s31, 0
      %p58 = por %p56, %p57
      %s60 = sadd.s32 %s59, 1
      %p63 = scmp.eq.s32.totalorder %s25, 1
      %p64 = scmp.ne.s32.totalorder %s59, %s61
      %p65 = scmp.eq.s32.totalorder %s25, 0
      %p66 = por %p64, %p65
      %p67 = scmp.ne.s32.totalorder %s59, %s61
      %p68 = scmp.eq.s32.totalorder %s30, 1
      %p69 = por %p67, %p68
      %p70 = scmp.ne.s32.totalorder %s61, %s62
      %p71 = scmp.eq.s32.totalorder %s30, 0
      %p72 = por %p70, %p71
      %p73 = scmp.ne.s32.totalorder %s61, %s62
      %p74 = scmp.eq.s32.totalorder %s31, 1
      %p75 = por %p73, %p74
      %p77 = scmp.ne.s32.totalorder %s62, %s76
      %p78 = scmp.eq.s32.totalorder %s31, 0
      %p79 = por %p77, %p78
      %s81 = sadd.s32 %s80, 1
      %p84 = scmp.eq.s32.totalorder %s25, 1
      %p85 = scmp.ne.s32.totalorder %s80, %s82
      %p86 = scmp.eq.s32.totalorder %s25, 0
      %p87 = por %p85, %p86
      %p88 = scmp.ne.s32.totalorder %s80, %s82
      %p89 = scmp.eq.s32.totalorder %s30, 1
      %p90 = por %p88, %p89
      %p91 = scmp.ne.s32.totalorder %s82, %s83
      %p92 = scmp.eq.s32.totalorder %s30, 0
      %p93 = por %p91, %p92
      %p94 = scmp.ne.s32.totalorder %s82, %s83
      %p95 = scmp.eq.s32.totalorder %s31, 1
      %p96 = por %p94, %p95
      %p98 = scmp.ne.s32.totalorder %s83, %s97
      %p99 = scmp.eq.s32.totalorder %s31, 0
      %p100 = por %p98, %p99
      %s102 = sadd.s32 %s101, 1
      %p105 = scmp.eq.s32.totalorder %s25, 1
      %p106 = scmp.ne.s32.totalorder %s101, %s103
      %p107 = scmp.eq.s32.totalorder %s25, 0
      %p108 = por %p106, %p107
      %p109 = scmp.ne.s32.totalorder %s101, %s103
      %p110 = scmp.eq.s32.totalorder %s30, 1
      %p111 = por %p109, %p110
      %p112 = scmp.ne.s32.totalorder %s103, %s104
      %p113 = scmp.eq.s32.totalorder %s30, 0
      %p114 = por %p112, %p113
      %p115 = scmp.ne.s32.totalorder %s103, %s104
      %p116 = scmp.eq.s32.totalorder %s31, 1
      %p117 = por %p115, %p116
      %p119 = scmp.ne.s32.totalorder %s104, %s118
      %p120 = scmp.eq.s32.totalorder %s31, 0
      %p121 = por %p119, %p120
      %s123 = sadd.s32 %s122, 1
      %p126 = scmp.eq.s32.totalorder %s25, 1
      %p127 = scmp.ne.s32.totalorder %s122, %s124
      %p128 = scmp.eq.s32.totalorder %s25, 0
      %p129 = por %p127, %p128
      %p130 = scmp.ne.s32.totalorder %s122, %s124
      %p131 = scmp.eq.s32.totalorder %s30, 1
      %p132 = por %p130, %p131
      %p133 = scmp.ne.s32.totalorder %s124, %s125
      %p134 = scmp.eq.s32.totalorder %s30, 0
      %p135 = por %p133, %p134
      %p136 = scmp.ne.s32.totalorder %s124, %s125
      %p137 = scmp.eq.s32.totalorder %s31, 1
      %p138 = por %p136, %p137
      %p140 = scmp.ne.s32.totalorder %s125, %s139
      %p141 = scmp.eq.s32.totalorder %s31, 0
      %p142 = por %p140, %p141
      %s143 = ssub.s32 %s25, %s32
      %p144 = scmp.eq.s32.totalorder %s143, 0
      %s146 = sadd.s32 %s145, 1
      %s147 = scalar_select %p144, %s145, %s146
      %p150 = pneg %p144
      %p151 = scmp.eq.s32.totalorder %s25, 1
      %p152 = por %p150, %p151
      %p153 = scmp.ne.s32.totalorder %s145, %s148
      %p154 = scmp.eq.s32.totalorder %s25, 0
      %p155 = por %p153, %p154
      %p156 = scmp.ne.s32.totalorder %s145, %s148
      %p157 = scmp.eq.s32.totalorder %s30, 1
      %p158 = por %p156, %p157
      %p159 = scmp.ne.s32.totalorder %s148, %s149
      %p160 = scmp.eq.s32.totalorder %s30, 0
      %p161 = por %p159, %p160
      %p162 = scmp.ne.s32.totalorder %s148, %s149
      %p163 = scmp.eq.s32.totalorder %s31, 1
      %p164 = por %p162, %p163
      %p166 = scmp.ne.s32.totalorder %s149, %s165
      %p167 = scmp.eq.s32.totalorder %s31, 0
      %p168 = por %p166, %p167
      %s169 = ssub.s32 %s25, %s32
      %p170 = scmp.eq.s32.totalorder %s169, 0
      %s172 = sadd.s32 %s171, 1
      %s173 = scalar_select %p170, %s171, %s172
      %p176 = pneg %p170
      %p177 = scmp.eq.s32.totalorder %s25, 1
      %p178 = por %p176, %p177
      %p179 = scmp.ne.s32.totalorder %s171, %s174
      %p180 = scmp.eq.s32.totalorder %s25, 0
      %p181 = por %p179, %p180
      %p182 = scmp.ne.s32.totalorder %s171, %s174
      %p183 = scmp.eq.s32.totalorder %s30, 1
      %p184 = por %p182, %p183
      %p185 = scmp.ne.s32.totalorder %s174, %s175
      %p186 = scmp.eq.s32.totalorder %s30, 0
      %p187 = por %p185, %p186
      %p188 = scmp.ne.s32.totalorder %s174, %s175
      %p189 = scmp.eq.s32.totalorder %s31, 1
      %p190 = por %p188, %p189
      %p192 = scmp.ne.s32.totalorder %s175, %s191
      %p193 = scmp.eq.s32.totalorder %s31, 0
      %p194 = por %p192, %p193
      %s195 = ssub.s32 %s25, %s32
      %p196 = scmp.eq.s32.totalorder %s195, 0
      %s198 = sadd.s32 %s197, 1
      %s199 = scalar_select %p196, %s197, %s198
      %p202 = pneg %p196
      %p203 = scmp.eq.s32.totalorder %s25, 1
      %p204 = por %p202, %p203
      %p205 = scmp.ne.s32.totalorder %s197, %s200
      %p206 = scmp.eq.s32.totalorder %s25, 0
      %p207 = por %p205, %p206
      %p208 = scmp.ne.s32.totalorder %s197, %s200
      %p209 = scmp.eq.s32.totalorder %s30, 1
      %p210 = por %p208, %p209
      %p211 = scmp.ne.s32.totalorder %s200, %s201
      %p212 = scmp.eq.s32.totalorder %s30, 0
      %p213 = por %p211, %p212
      %p214 = scmp.ne.s32.totalorder %s200, %s201
      %p215 = scmp.eq.s32.totalorder %s31, 1
      %p216 = por %p214, %p215
      %p218 = scmp.ne.s32.totalorder %s201, %s217
      %p219 = scmp.eq.s32.totalorder %s31, 0
      %p220 = por %p218, %p219
      %s221 = ssub.s32 %s25, %s32
      %p222 = scmp.eq.s32.totalorder %s221, 0
      %s224 = sadd.s32 %s223, 1
      %s225 = scalar_select %p222, %s223, %s224
      %p228 = pneg %p222
      %p229 = scmp.eq.s32.totalorder %s25, 1
      %p230 = por %p228, %p229
      %p231 = scmp.ne.s32.totalorder %s223, %s226
      %p232 = scmp.eq.s32.totalorder %s25, 0
      %p233 = por %p231, %p232
      %p234 = scmp.ne.s32.totalorder %s223, %s226
      %p235 = scmp.eq.s32.totalorder %s30, 1
      %p236 = por %p234, %p235
      %p237 = scmp.ne.s32.totalorder %s226, %s227
      %p238 = scmp.eq.s32.totalorder %s30, 0
      %p239 = por %p237, %p238
      %p240 = scmp.ne.s32.totalorder %s226, %s227
      %p241 = scmp.eq.s32.totalorder %s31, 1
      %p242 = por %p240, %p241
      %p244 = scmp.ne.s32.totalorder %s227, %s243
      %p245 = scmp.eq.s32.totalorder %s31, 0
      %p246 = por %p244, %p245
      %p247 = scmp.le.s32.totalorder 1, %s25
      %p248 = scmp.lt.s32.totalorder %s25, 3
      %p249 = pnand %p247, %p248
      %p250 = pneg %p249
      // Predicated region
      $region9: #{tpu_custom_call.1} parent=5 // pred_check
        _
      $region10: #{tpu_custom_call.1} parent=5 // pred_check_branch
        %252 = sbr.rel (%p249) target = $region12
      $region11: #{tpu_custom_call.1} parent=5 // pred_region
        %s253 = ssub.s32 %s25, 1
        // Predicated region
        $region13: #{tpu_custom_call.1} parent=11 // pred_check
          %p254 = pneg %p72
        $region14: #{tpu_custom_call.1} parent=11 // pred_check_branch
          %256 = sbr.rel (%p254) target = $region16
        $region15: #{tpu_custom_call.1} parent=11 // pred_region
          %s258 = ssub.s32 512, 512
          %259 = vsyncadd [#allocation6], %s258
          %s260 = sshll.u32 [#allocation5], 4
          %s261 = int_to_ptr.vmem [resolvable:$true] %s260
          %266 = dma.hbm_to_vmem [thread:$0]  %s1, 512, %s261, [#allocation6], 128, 128, 8
        $region16: #{tpu_custom_call.1} parent=11 // pred_fallthru
          _
        // Predicated region
        $region17: #{tpu_custom_call.1} parent=11 // pred_check
          %p267 = pneg %p93
        $region18: #{tpu_custom_call.1} parent=11 // pred_check_branch
          %269 = sbr.rel (%p267) target = $region20
        $region19: #{tpu_custom_call.1} parent=11 // pred_region
          _
        $region20: #{tpu_custom_call.1} parent=11 // pred_fallthru
          _
        // Predicated region
        $region21: #{tpu_custom_call.1} parent=11 // pred_check
          %p270 = pneg %p114
        $region22: #{tpu_custom_call.1} parent=11 // pred_check_branch
          %272 = sbr.rel (%p270) target = $region24
        $region23: #{tpu_custom_call.1} parent=11 // pred_region
          %s274 = ssub.s32 512, 512
          %275 = vsyncadd [#allocation6], %s274
          %s276 = sshll.u32 [#allocation7], 4
          %s277 = int_to_ptr.vmem [resolvable:$true] %s276
          %282 = dma.hbm_to_vmem [thread:$0]  %s3, 512, %s277, [#allocation6], 128, 128, 8
        $region24: #{tpu_custom_call.1} parent=11 // pred_fallthru
          _
        // Predicated region
        $region25: #{tpu_custom_call.1} parent=11 // pred_check
          %p283 = pneg %p135
        $region26: #{tpu_custom_call.1} parent=11 // pred_check_branch
          %285 = sbr.rel (%p283) target = $region28
        $region27: #{tpu_custom_call.1} parent=11 // pred_region
          _
        $region28: #{tpu_custom_call.1} parent=11 // pred_fallthru
          _
      $region12: #{tpu_custom_call.1} parent=5 // pred_fallthru
        _
      %p286 = scmp.lt.s32.totalorder %s25, 2
      // Predicated region
      $region29: #{tpu_custom_call.1} parent=5 // pred_check
        %p287 = pneg %p286
      $region30: #{tpu_custom_call.1} parent=5 // pred_check_branch
        %289 = sbr.rel (%p287) target = $region32
      $region31: #{tpu_custom_call.1} parent=5 // pred_region
        // Predicated region
        $region33: #{tpu_custom_call.1} parent=31 // pred_check
          %p290 = pneg %p45
        $region34: #{tpu_custom_call.1} parent=31 // pred_check_branch
          %292 = sbr.rel (%p290) target = $region36
        $region35: #{tpu_custom_call.1} parent=31 // pred_region
          %s293 = sand.u32 %s35, 1
          %s294 = scalar_lea.sflag [#allocation3], %s293
          %s295 = sand.u32 %s35, 1
          %s296 = smul.addr %s295, 8
          %s297 = scalar_lea.vmem [#allocation2], %s296
          %s299 = ssub.s32 128, 128
          %300 = vsyncadd %s294, %s299
          %s301 = smul.addr %s25, 128
          %s302 = scalar_lea.hbm %s0, %s301
          %s304 = sshll.u32 %s297, 4
          %s305 = int_to_ptr.vmem [resolvable:$true] %s304
          %307 = dma.hbm_to_vmem [thread:$0]  %s302, 128, %s305, %s294
        $region36: #{tpu_custom_call.1} parent=31 // pred_fallthru
          _
        // Predicated region
        $region37: #{tpu_custom_call.1} parent=31 // pred_check
          %p308 = pneg %p155
        $region38: #{tpu_custom_call.1} parent=31 // pred_check_branch
          %310 = sbr.rel (%p308) target = $region40
        $region39: #{tpu_custom_call.1} parent=31 // pred_region
          %p311 = scmp.lt.s32.totalorder %s25, 1
          %s312 = scalar_select %p311, %s25, 1
          %s313 = scalar_lea.vmem %s5, %s312
        $region40: #{tpu_custom_call.1} parent=31 // pred_fallthru
          _
      $region32: #{tpu_custom_call.1} parent=5 // pred_fallthru
        _
      %p314 = scmp.le.s32.totalorder 1, %s25
      %p315 = scmp.lt.s32.totalorder %s25, 3
      %p316 = pnand %p314, %p315
      %p317 = pneg %p316
      // Predicated region
      $region41: #{tpu_custom_call.1} parent=5 // pred_check
        _
      $region42: #{tpu_custom_call.1} parent=5 // pred_check_branch
        %319 = sbr.rel (%p316) target = $region44
      $region43: #{tpu_custom_call.1} parent=5 // pred_region
        %s320 = ssub.s32 %s25, 1
        %s321 = sand.u32 %s38, 1
        %s322 = scalar_lea.sflag [#allocation3], %s321
        %s323 = sand.u32 %s38, 1
        %s324 = smul.addr %s323, 8
        %s325 = scalar_lea.vmem [#allocation2], %s324
        // Predicated region
        $region45: #{tpu_custom_call.1} parent=43 // pred_check
          %p326 = pneg %p51
        $region46: #{tpu_custom_call.1} parent=43 // pred_check_branch
          %328 = sbr.rel (%p326) target = $region48
        $region47: #{tpu_custom_call.1} parent=43 // pred_region
          %329 = dma.done %s322, 128
        $region48: #{tpu_custom_call.1} parent=43 // pred_fallthru
          _
        // Predicated region
        $region49: #{tpu_custom_call.1} parent=43 // pred_check
          %p330 = pneg %p72
        $region50: #{tpu_custom_call.1} parent=43 // pred_check_branch
          %332 = sbr.rel (%p330) target = $region52
        $region51: #{tpu_custom_call.1} parent=43 // pred_region
          %333 = dma.done [#allocation6], 512
        $region52: #{tpu_custom_call.1} parent=43 // pred_fallthru
          _
        // Predicated region
        $region53: #{tpu_custom_call.1} parent=43 // pred_check
          %p334 = pneg %p114
        $region54: #{tpu_custom_call.1} parent=43 // pred_check_branch
          %336 = sbr.rel (%p334) target = $region56
        $region55: #{tpu_custom_call.1} parent=43 // pred_region
          %337 = dma.done [#allocation6], 512
        $region56: #{tpu_custom_call.1} parent=43 // pred_fallthru
          _
        %s338 = sand.u32 %s38, 1
        %s339 = scalar_lea.sflag [#allocation3], %s338
        %s340 = sand.u32 %s38, 1
        %s341 = smul.addr %s340, 8
        %s342 = scalar_lea.vmem [#allocation2], %s341
        %p343 = pneg %p51
        %p344 = pneg %p48
        %p345 = pneg %p72
        %p346 = pneg %p69
        %p347 = pneg %p93
        %p348 = pneg %p90
        %p349 = pneg %p114
        %p350 = pneg %p111
        %p351 = pneg %p135
        %p352 = pneg %p132
        %p353 = scmp.lt.s32.totalorder %s30, 1
        %s354 = scalar_select %p353, %s30, 1
        %s355 = scalar_lea.vmem %s5, %s354
        %p356 = pneg %p161
        %p357 = pneg %p158
        %p358 = pneg %p187
        %p359 = pneg %p184
        %s360 = sand.u32 %s174, 1
        %s361 = scalar_lea.sflag [#allocation4], %s360
        %s362 = sand.u32 %s174, 1
        %s363 = smul.addr %s362, 8
        %s364 = scalar_lea.vmem [#allocation8], %s363
        %p365 = pneg %p213
        %p366 = pneg %p210
        %s367 = sand.u32 %s30, 1
        %s368 = scalar_lea.sflag [#allocation10], %s367
        %s369 = sand.u32 %s200, 1
        %s370 = smul.addr %s369, 8
        %s371 = scalar_lea.vmem [#allocation9], %s370
        %p372 = pneg %p239
        %p373 = pneg %p236
        %s374 = sand.u32 %s30, 1
        %s375 = scalar_lea.sflag [#allocation10], %s374
        %s376 = sand.u32 %s226, 1
        %s377 = smul.addr %s376, 8
        %s378 = scalar_lea.vmem [#allocation11], %s377
        %p379 = scmp.lt.s32.totalorder %s30, 1
        %s380 = scalar_select %p379, %s30, 1
        %s381 = scalar_lea.vmem %s5, %s380
        %v382 = vld [vmem:[%s325] sm:$0xff]
        %v383 = vld [vmem:[#allocation5] sm:$0xff]
        %v384 = vld [vmem:[#allocation5 + $0x8] sm:$0xff]
        %v385 = vld [vmem:[#allocation5 + $0x10] sm:$0xff]
        %v386 = vld [vmem:[#allocation5 + $0x18] sm:$0xff]
        %v387 = vld [vmem:[%s2] sm:$0x1]
        %v389 = vlaneseq
        %v390 = vshrl.u32 %v389, 7
        %v391 = vsub.s32 0, %v390
        %v392 = vrot.slane %v387, %v391
        %vm394 = vcmask 261120
        %v396 = vsel %vm394, %v382, 0
        %398 = vmatprep.subr.mxu0 0.0
        %399 = vmatpush1.msra.mxu0 %v383
        %400 = vmatprep.subr.mxu0 0.0
        %401 = vmatpush1.msra.mxu0 %v384
        %402 = vmatprep.subr.mxu0 0.0
        %403 = vmatpush1.msra.mxu0 %v385
        %404 = vmatprep.subr.mxu0 0.0
        %405 = vmatpush1.msra.mxu0 %v386
        %406 = vmatprep.subr.mxu0 0.0
        %407 = vmatpush1.msra.mxu0 0.0
        %408 = vmatprep.subr.mxu0 0.0
        %409 = vmatpush1.msra.mxu0 0.0
        %410 = vmatprep.subr.mxu0 0.0
        %411 = vmatpush1.msra.mxu0 0.0
        %412 = vmatprep.subr.mxu0 0.0
        %413 = vmatpush1.msra.mxu0 0.0
        %414 = vmatprep.subr.mxu0 0.0
        %415 = vmatpush1.msra.mxu0 0.0
        %416 = vmatprep.subr.mxu0 0.0
        %417 = vmatpush1.msra.mxu0 0.0
        %418 = vmatprep.subr.mxu0 0.0
        %419 = vmatpush1.msra.mxu0 0.0
        %420 = vmatprep.subr.mxu0 0.0
        %421 = vmatpush1.msra.mxu0 0.0
        %422 = vmatprep.subr.mxu0 0.0
        %423 = vmatpush1.msra.mxu0 0.0
        %424 = vmatprep.subr.mxu0 0.0
        %425 = vmatpush1.msra.mxu0 0.0
        %426 = vmatprep.subr.mxu0 0.0
        %427 = vmatpush1.msra.mxu0 0.0
        %428 = vmatprep.subr.mxu0 0.0
        %429 = vmatpush1.msra.mxu0 0.0
        %430 = vmatprep.subr.mxu0 0.0
        %431 = vmatpush1.msra.mxu0 0.0
        %432 = vmatprep.subr.mxu0 0.0
        %433 = vmatpush1.msra.mxu0 0.0
        %434 = vmatprep.subr.mxu0 0.0
        %435 = vmatpush1.msra.mxu0 0.0
        %436 = vmatprep.subr.mxu0 0.0
        %437 = vmatpush1.msra.mxu0 0.0
        %438 = vmatprep.subr.mxu0 0.0
        %439 = vmatpush1.msra.mxu0 0.0
        %440 = vmatprep.subr.mxu0 0.0
        %441 = vmatpush1.msra.mxu0 0.0
        %442 = vmatprep.subr.mxu0 0.0
        %443 = vmatpush1.msra.mxu0 0.0
        %444 = vmatprep.subr.mxu0 0.0
        %445 = vmatpush1.msra.mxu0 0.0
        %446 = vmatprep.subr.mxu0 0.0
        %447 = vmatpush1.msra.mxu0 0.0
        %448 = vmatprep.subr.mxu0 0.0
        %449 = vmatpush1.msra.mxu0 0.0
        %450 = vmatprep.subr.mxu0 0.0
        %451 = vmatpush1.msra.mxu0 0.0
        %452 = vmatprep.subr.mxu0 0.0
        %453 = vmatpush1.msra.mxu0 0.0
        %454 = vmatprep.subr.mxu0 0.0
        %455 = vmatpush1.msra.mxu0 0.0
        %456 = vmatprep.subr.mxu0 0.0
        %457 = vmatpush1.msra.mxu0 0.0
        %458 = vmatprep.subr.mxu0 0.0
        %459 = vmatpush1.msra.mxu0 0.0
        %460 = vmatprep.subr.mxu0 0.0
        %461 = vmatpush1.msra.mxu0 0.0
        %462 = vmatprep.mubr.f32.mxu0 0.0
        %463 = vmatmul.mubr.f32.gmra.mrb[0].mxu0 %v396
        %v464 = vpop.f32.mrb[0].mxu0
        %v465 = vadd.f32 %v392, %v464
        %v466 = vpop.f32.mrb[0].mxu0
        %467 = vdwg.mxu0
        %469 = vrot.lane.b32.xlu0 %v465, 96
        %v470 = vpop.permute.xlu0 %469
        %472 = vst.msk [vmem:[%s371] sm:$0xff] %vm394, %v470
        %473 = vrot.lane.b32.xlu0 %v465, 64
        %v474 = vpop.permute.xlu0 %473
        %476 = vst.msk [vmem:[%s378] sm:$0xff] %vm394, %v474
        %v477 = vld [vmem:[%s381] sm:$0x1]
        %v479 = vlaneseq
        %v480 = vshrl.u32 %v479, 7
        %v481 = vsub.s32 0, %v480
        %v482 = vrot.slane %v477, %v481
        %vm484 = vcmask 64512
        %v485 = vsel %vm484, %v465, 0
        %v487 = vsel %vm484, %v470, 0
        %489 = vmatprep.subr.mxu0 0.0
        %490 = vmatpush1.xpose.msra.mxu0 %v487
        %491 = vmatprep.subr.mxu0 0.0
        %492 = vmatpush1.xpose.msra.mxu0 0.0
        %493 = vmatprep.subr.mxu0 0.0
        %494 = vmatpush1.xpose.msra.mxu0 0.0
        %495 = vmatprep.subr.mxu0 0.0
        %496 = vmatpush1.xpose.msra.mxu0 0.0
        %497 = vmatprep.subr.mxu0 0.0
        %498 = vmatpush1.xpose.msra.mxu0 0.0
        %499 = vmatprep.subr.mxu0 0.0
        %500 = vmatpush1.xpose.msra.mxu0 0.0
        %501 = vmatprep.subr.mxu0 0.0
        %502 = vmatpush1.xpose.msra.mxu0 0.0
        %503 = vmatprep.subr.mxu0 0.0
        %504 = vmatpush1.xpose.msra.mxu0 0.0
        %505 = vmatprep.subr.mxu0 0.0
        %506 = vmatpush1.xpose.msra.mxu0 0.0
        %507 = vmatprep.subr.mxu0 0.0
        %508 = vmatpush1.xpose.msra.mxu0 0.0
        %509 = vmatprep.subr.mxu0 0.0
        %510 = vmatpush1.xpose.msra.mxu0 0.0
        %511 = vmatprep.subr.mxu0 0.0
        %512 = vmatpush1.xpose.msra.mxu0 0.0
        %513 = vmatprep.subr.mxu0 0.0
        %514 = vmatpush1.xpose.msra.mxu0 0.0
        %515 = vmatprep.subr.mxu0 0.0
        %516 = vmatpush1.xpose.msra.mxu0 0.0
        %517 = vmatprep.subr.mxu0 0.0
        %518 = vmatpush1.xpose.msra.mxu0 0.0
        %519 = vmatprep.subr.mxu0 0.0
        %520 = vmatpush1.xpose.msra.mxu0 0.0
        %521 = vmatprep.subr.mxu0 0.0
        %522 = vmatpush1.xpose.msra.mxu0 0.0
        %523 = vmatprep.subr.mxu0 0.0
        %524 = vmatpush1.xpose.msra.mxu0 0.0
        %525 = vmatprep.subr.mxu0 0.0
        %526 = vmatpush1.xpose.msra.mxu0 0.0
        %527 = vmatprep.subr.mxu0 0.0
        %528 = vmatpush1.xpose.msra.mxu0 0.0
        %529 = vmatprep.subr.mxu0 0.0
        %530 = vmatpush1.xpose.msra.mxu0 0.0
        %531 = vmatprep.subr.mxu0 0.0
        %532 = vmatpush1.xpose.msra.mxu0 0.0
        %533 = vmatprep.subr.mxu0 0.0
        %534 = vmatpush1.xpose.msra.mxu0 0.0
        %535 = vmatprep.subr.mxu0 0.0
        %536 = vmatpush1.xpose.msra.mxu0 0.0
        %537 = vmatprep.subr.mxu0 0.0
        %538 = vmatpush1.xpose.msra.mxu0 0.0
        %539 = vmatprep.subr.mxu0 0.0
        %540 = vmatpush1.xpose.msra.mxu0 0.0
        %541 = vmatprep.subr.mxu0 0.0
        %542 = vmatpush1.xpose.msra.mxu0 0.0
        %543 = vmatprep.subr.mxu0 0.0
        %544 = vmatpush1.xpose.msra.mxu0 0.0
        %545 = vmatprep.subr.mxu0 0.0
        %546 = vmatpush1.xpose.msra.mxu0 0.0
        %547 = vmatprep.subr.mxu0 0.0
        %548 = vmatpush1.xpose.msra.mxu0 0.0
        %549 = vmatprep.subr.mxu0 0.0
        %550 = vmatpush1.xpose.msra.mxu0 0.0
        %551 = vmatprep.subr.mxu0 0.0
        %552 = vmatpush1.xpose.msra.mxu0 0.0
        %553 = vmatprep.mubr.f32.mxu0 0.0
        %554 = vmatmul.mubr.f32.gmra.mrb[0].mxu0 %v485
        %v555 = vpop.f32.mrb[0].mxu0
        %v556 = vadd.f32 %v482, %v555
        %v557 = vpop.f32.mrb[0].mxu0
        %558 = vdwg.mxu0
        %v559 = vsel %vm484, %v556, -inf
        %560 = vmax.xlane.f32.xlu0 %v559
        %v561 = vpop.xlane.xlu0 %560
        %v562 = vsub.f32 %v556, %v561
        %v563 = vmul.f32 %v562, 1.442695
        %v564 = vpow.pop %v563
        %v565 = vsel %vm484, %v564, 0.0
        %566 = vadd.xlane.f32.xlu0 %v565
        %v567 = vpop.xlane.xlu0 %566
        %v568 = vrcp.pop %v567
        %v569 = vmul.f32 %v567, %v568
        %v570 = vsub.f32 2.0, %v569
        %v571 = vmul.f32 %v568, %v570
        %v572 = vmul.f32 %v564, %v571
        %v574 = vsel %vm484, %v572, 0
        %576 = vmatprep.subr.mxu0 0.0
        %577 = vmatpush1.msra.mxu0 %v474
        %578 = vmatprep.subr.mxu0 0.0
        %579 = vmatpush1.msra.mxu0 0.0
        %580 = vmatprep.subr.mxu0 0.0
        %581 = vmatpush1.msra.mxu0 0.0
        %582 = vmatprep.subr.mxu0 0.0
        %583 = vmatpush1.msra.mxu0 0.0
        %584 = vmatprep.subr.mxu0 0.0
        %585 = vmatpush1.msra.mxu0 0.0
        %586 = vmatprep.subr.mxu0 0.0
        %587 = vmatpush1.msra.mxu0 0.0
        %588 = vmatprep.subr.mxu0 0.0
        %589 = vmatpush1.msra.mxu0 0.0
        %590 = vmatprep.subr.mxu0 0.0
        %591 = vmatpush1.msra.mxu0 0.0
        %592 = vmatprep.subr.mxu0 0.0
        %593 = vmatpush1.msra.mxu0 0.0
        %594 = vmatprep.subr.mxu0 0.0
        %595 = vmatpush1.msra.mxu0 0.0
        %596 = vmatprep.subr.mxu0 0.0
        %597 = vmatpush1.msra.mxu0 0.0
        %598 = vmatprep.subr.mxu0 0.0
        %599 = vmatpush1.msra.mxu0 0.0
        %600 = vmatprep.subr.mxu0 0.0
        %601 = vmatpush1.msra.mxu0 0.0
        %602 = vmatprep.subr.mxu0 0.0
        %603 = vmatpush1.msra.mxu0 0.0
        %604 = vmatprep.subr.mxu0 0.0
        %605 = vmatpush1.msra.mxu0 0.0
        %606 = vmatprep.subr.mxu0 0.0
        %607 = vmatpush1.msra.mxu0 0.0
        %608 = vmatprep.subr.mxu0 0.0
        %609 = vmatpush1.msra.mxu0 0.0
        %610 = vmatprep.subr.mxu0 0.0
        %611 = vmatpush1.msra.mxu0 0.0
        %612 = vmatprep.subr.mxu0 0.0
        %613 = vmatpush1.msra.mxu0 0.0
        %614 = vmatprep.subr.mxu0 0.0
        %615 = vmatpush1.msra.mxu0 0.0
        %616 = vmatprep.subr.mxu0 0.0
        %617 = vmatpush1.msra.mxu0 0.0
        %618 = vmatprep.subr.mxu0 0.0
        %619 = vmatpush1.msra.mxu0 0.0
        %620 = vmatprep.subr.mxu0 0.0
        %621 = vmatpush1.msra.mxu0 0.0
        %622 = vmatprep.subr.mxu0 0.0
        %623 = vmatpush1.msra.mxu0 0.0
        %624 = vmatprep.subr.mxu0 0.0
        %625 = vmatpush1.msra.mxu0 0.0
        %626 = vmatprep.subr.mxu0 0.0
        %627 = vmatpush1.msra.mxu0 0.0
        %628 = vmatprep.subr.mxu0 0.0
        %629 = vmatpush1.msra.mxu0 0.0
        %630 = vmatprep.subr.mxu0 0.0
        %631 = vmatpush1.msra.mxu0 0.0
        %632 = vmatprep.subr.mxu0 0.0
        %633 = vmatpush1.msra.mxu0 0.0
        %634 = vmatprep.subr.mxu0 0.0
        %635 = vmatpush1.msra.mxu0 0.0
        %636 = vmatprep.subr.mxu0 0.0
        %637 = vmatpush1.msra.mxu0 0.0
        %638 = vmatprep.subr.mxu0 0.0
        %639 = vmatpush1.msra.mxu0 0.0
        %640 = vmatprep.mubr.f32.mxu0 0.0
        %641 = vmatmul.mubr.f32.gmra.mrb[0].mxu0 %v574
        %v642 = vpop.f32.mrb[0].mxu0
        %v643 = vadd.f32 0.0, %v642
        %v644 = vpop.f32.mrb[0].mxu0
        %645 = vdwg.mxu0
        %v646 = vld [vmem:[#allocation7] sm:$0xff]
        %647 = vrot.lane.b32.xlu0 %v465, 120
        %v648 = vpop.permute.xlu0 %647
        %649 = vrot.lane.b32.xlu0 %v465, 88
        %v650 = vpop.permute.xlu0 %649
        %v651 = vsel %vm484, %v648, 0
        %v653 = vsel %vm484, %v650, 0
        %655 = vmatprep.subr.mxu0 0.0
        %656 = vmatpush1.xpose.msra.mxu0 %v653
        %657 = vmatprep.subr.mxu0 0.0
        %658 = vmatpush1.xpose.msra.mxu0 0.0
        %659 = vmatprep.subr.mxu0 0.0
        %660 = vmatpush1.xpose.msra.mxu0 0.0
        %661 = vmatprep.subr.mxu0 0.0
        %662 = vmatpush1.xpose.msra.mxu0 0.0
        %663 = vmatprep.subr.mxu0 0.0
        %664 = vmatpush1.xpose.msra.mxu0 0.0
        %665 = vmatprep.subr.mxu0 0.0
        %666 = vmatpush1.xpose.msra.mxu0 0.0
        %667 = vmatprep.subr.mxu0 0.0
        %668 = vmatpush1.xpose.msra.mxu0 0.0
        %669 = vmatprep.subr.mxu0 0.0
        %670 = vmatpush1.xpose.msra.mxu0 0.0
        %671 = vmatprep.subr.mxu0 0.0
        %672 = vmatpush1.xpose.msra.mxu0 0.0
        %673 = vmatprep.subr.mxu0 0.0
        %674 = vmatpush1.xpose.msra.mxu0 0.0
        %675 = vmatprep.subr.mxu0 0.0
        %676 = vmatpush1.xpose.msra.mxu0 0.0
        %677 = vmatprep.subr.mxu0 0.0
        %678 = vmatpush1.xpose.msra.mxu0 0.0
        %679 = vmatprep.subr.mxu0 0.0
        %680 = vmatpush1.xpose.msra.mxu0 0.0
        %681 = vmatprep.subr.mxu0 0.0
        %682 = vmatpush1.xpose.msra.mxu0 0.0
        %683 = vmatprep.subr.mxu0 0.0
        %684 = vmatpush1.xpose.msra.mxu0 0.0
        %685 = vmatprep.subr.mxu0 0.0
        %686 = vmatpush1.xpose.msra.mxu0 0.0
        %687 = vmatprep.subr.mxu0 0.0
        %688 = vmatpush1.xpose.msra.mxu0 0.0
        %689 = vmatprep.subr.mxu0 0.0
        %690 = vmatpush1.xpose.msra.mxu0 0.0
        %691 = vmatprep.subr.mxu0 0.0
        %692 = vmatpush1.xpose.msra.mxu0 0.0
        %693 = vmatprep.subr.mxu0 0.0
        %694 = vmatpush1.xpose.msra.mxu0 0.0
        %695 = vmatprep.subr.mxu0 0.0
        %696 = vmatpush1.xpose.msra.mxu0 0.0
        %697 = vmatprep.subr.mxu0 0.0
        %698 = vmatpush1.xpose.msra.mxu0 0.0
        %699 = vmatprep.subr.mxu0 0.0
        %700 = vmatpush1.xpose.msra.mxu0 0.0
        %701 = vmatprep.subr.mxu0 0.0
        %702 = vmatpush1.xpose.msra.mxu0 0.0
        %703 = vmatprep.subr.mxu0 0.0
        %704 = vmatpush1.xpose.msra.mxu0 0.0
        %705 = vmatprep.subr.mxu0 0.0
        %706 = vmatpush1.xpose.msra.mxu0 0.0
        %707 = vmatprep.subr.mxu0 0.0
        %708 = vmatpush1.xpose.msra.mxu0 0.0
        %709 = vmatprep.subr.mxu0 0.0
        %710 = vmatpush1.xpose.msra.mxu0 0.0
        %711 = vmatprep.subr.mxu0 0.0
        %712 = vmatpush1.xpose.msra.mxu0 0.0
        %713 = vmatprep.subr.mxu0 0.0
        %714 = vmatpush1.xpose.msra.mxu0 0.0
        %715 = vmatprep.subr.mxu0 0.0
        %716 = vmatpush1.xpose.msra.mxu0 0.0
        %717 = vmatprep.subr.mxu0 0.0
        %718 = vmatpush1.xpose.msra.mxu0 0.0
        %719 = vmatprep.mubr.f32.mxu0 0.0
        %720 = vmatmul.mubr.f32.gmra.mrb[0].mxu0 %v651
        %v721 = vpop.f32.mrb[0].mxu0
        %v722 = vadd.f32 %v482, %v721
        %v723 = vpop.f32.mrb[0].mxu0
        %724 = vdwg.mxu0
        %v725 = vsel %vm484, %v722, -inf
        %726 = vmax.xlane.f32.xlu0 %v725
        %v727 = vpop.xlane.xlu0 %726
        %v728 = vsub.f32 %v722, %v727
        %v729 = vmul.f32 %v728, 1.442695
        %v730 = vpow.pop %v729
        %v731 = vsel %vm484, %v730, 0.0
        %732 = vadd.xlane.f32.xlu0 %v731
        %v733 = vpop.xlane.xlu0 %732
        %v734 = vrcp.pop %v733
        %v735 = vmul.f32 %v733, %v734
        %v736 = vsub.f32 2.0, %v735
        %v737 = vmul.f32 %v734, %v736
        %v738 = vmul.f32 %v730, %v737
        %739 = vrot.lane.b32.xlu0 %v465, 56
        %v740 = vpop.permute.xlu0 %739
        %v743 = vsel %vm484, %v738, 0
        %745 = vmatprep.subr.mxu0 0.0
        %746 = vmatpush1.msra.mxu0 %v740
        %747 = vmatprep.subr.mxu0 0.0
        %748 = vmatpush1.msra.mxu0 0.0
        %749 = vmatprep.subr.mxu0 0.0
        %750 = vmatpush1.msra.mxu0 0.0
        %751 = vmatprep.subr.mxu0 0.0
        %752 = vmatpush1.msra.mxu0 0.0
        %753 = vmatprep.subr.mxu0 0.0
        %754 = vmatpush1.msra.mxu0 0.0
        %755 = vmatprep.subr.mxu0 0.0
        %756 = vmatpush1.msra.mxu0 0.0
        %757 = vmatprep.subr.mxu0 0.0
        %758 = vmatpush1.msra.mxu0 0.0
        %759 = vmatprep.subr.mxu0 0.0
        %760 = vmatpush1.msra.mxu0 0.0
        %761 = vmatprep.subr.mxu0 0.0
        %762 = vmatpush1.msra.mxu0 0.0
        %763 = vmatprep.subr.mxu0 0.0
        %764 = vmatpush1.msra.mxu0 0.0
        %765 = vmatprep.subr.mxu0 0.0
        %766 = vmatpush1.msra.mxu0 0.0
        %767 = vmatprep.subr.mxu0 0.0
        %768 = vmatpush1.msra.mxu0 0.0
        %769 = vmatprep.subr.mxu0 0.0
        %770 = vmatpush1.msra.mxu0 0.0
        %771 = vmatprep.subr.mxu0 0.0
        %772 = vmatpush1.msra.mxu0 0.0
        %773 = vmatprep.subr.mxu0 0.0
        %774 = vmatpush1.msra.mxu0 0.0
        %775 = vmatprep.subr.mxu0 0.0
        %776 = vmatpush1.msra.mxu0 0.0
        %777 = vmatprep.subr.mxu0 0.0
        %778 = vmatpush1.msra.mxu0 0.0
        %779 = vmatprep.subr.mxu0 0.0
        %780 = vmatpush1.msra.mxu0 0.0
        %781 = vmatprep.subr.mxu0 0.0
        %782 = vmatpush1.msra.mxu0 0.0
        %783 = vmatprep.subr.mxu0 0.0
        %784 = vmatpush1.msra.mxu0 0.0
        %785 = vmatprep.subr.mxu0 0.0
        %786 = vmatpush1.msra.mxu0 0.0
        %787 = vmatprep.subr.mxu0 0.0
        %788 = vmatpush1.msra.mxu0 0.0
        %789 = vmatprep.subr.mxu0 0.0
        %790 = vmatpush1.msra.mxu0 0.0
        %791 = vmatprep.subr.mxu0 0.0
        %792 = vmatpush1.msra.mxu0 0.0
        %793 = vmatprep.subr.mxu0 0.0
        %794 = vmatpush1.msra.mxu0 0.0
        %795 = vmatprep.subr.mxu0 0.0
        %796 = vmatpush1.msra.mxu0 0.0
        %797 = vmatprep.subr.mxu0 0.0
        %798 = vmatpush1.msra.mxu0 0.0
        %799 = vmatprep.subr.mxu0 0.0
        %800 = vmatpush1.msra.mxu0 0.0
        %801 = vmatprep.subr.mxu0 0.0
        %802 = vmatpush1.msra.mxu0 0.0
        %803 = vmatprep.subr.mxu0 0.0
        %804 = vmatpush1.msra.mxu0 0.0
        %805 = vmatprep.subr.mxu0 0.0
        %806 = vmatpush1.msra.mxu0 0.0
        %807 = vmatprep.subr.mxu0 0.0
        %808 = vmatpush1.msra.mxu0 0.0
        %809 = vmatprep.mubr.f32.mxu0 0.0
        %810 = vmatmul.mubr.f32.gmra.mrb[0].mxu0 %v743
        %v811 = vpop.f32.mrb[0].mxu0
        %v812 = vadd.f32 0.0, %v811
        %v813 = vpop.f32.mrb[0].mxu0
        %814 = vdwg.mxu0
        %v815 = vld [vmem:[#allocation7 + $0x8] sm:$0xff]
        %v817 = vsel %vm484, %v812, 0
        %819 = vmatprep.subr.mxu0 0.0
        %820 = vmatpush1.msra.mxu0 %v815
        %821 = vmatprep.subr.mxu0 0.0
        %822 = vmatpush1.msra.mxu0 0.0
        %823 = vmatprep.subr.mxu0 0.0
        %824 = vmatpush1.msra.mxu0 0.0
        %825 = vmatprep.subr.mxu0 0.0
        %826 = vmatpush1.msra.mxu0 0.0
        %827 = vmatprep.subr.mxu0 0.0
        %828 = vmatpush1.msra.mxu0 0.0
        %829 = vmatprep.subr.mxu0 0.0
        %830 = vmatpush1.msra.mxu0 0.0
        %831 = vmatprep.subr.mxu0 0.0
        %832 = vmatpush1.msra.mxu0 0.0
        %833 = vmatprep.subr.mxu0 0.0
        %834 = vmatpush1.msra.mxu0 0.0
        %835 = vmatprep.subr.mxu0 0.0
        %836 = vmatpush1.msra.mxu0 0.0
        %837 = vmatprep.subr.mxu0 0.0
        %838 = vmatpush1.msra.mxu0 0.0
        %839 = vmatprep.subr.mxu0 0.0
        %840 = vmatpush1.msra.mxu0 0.0
        %841 = vmatprep.subr.mxu0 0.0
        %842 = vmatpush1.msra.mxu0 0.0
        %843 = vmatprep.subr.mxu0 0.0
        %844 = vmatpush1.msra.mxu0 0.0
        %845 = vmatprep.subr.mxu0 0.0
        %846 = vmatpush1.msra.mxu0 0.0
        %847 = vmatprep.subr.mxu0 0.0
        %848 = vmatpush1.msra.mxu0 0.0
        %849 = vmatprep.subr.mxu0 0.0
        %850 = vmatpush1.msra.mxu0 0.0
        %851 = vmatprep.subr.mxu0 0.0
        %852 = vmatpush1.msra.mxu0 0.0
        %853 = vmatprep.subr.mxu0 0.0
        %854 = vmatpush1.msra.mxu0 0.0
        %855 = vmatprep.subr.mxu0 0.0
        %856 = vmatpush1.msra.mxu0 0.0
        %857 = vmatprep.subr.mxu0 0.0
        %858 = vmatpush1.msra.mxu0 0.0
        %859 = vmatprep.subr.mxu0 0.0
        %860 = vmatpush1.msra.mxu0 0.0
        %861 = vmatprep.subr.mxu0 0.0
        %862 = vmatpush1.msra.mxu0 0.0
        %863 = vmatprep.subr.mxu0 0.0
        %864 = vmatpush1.msra.mxu0 0.0
        %865 = vmatprep.subr.mxu0 0.0
        %866 = vmatpush1.msra.mxu0 0.0
        %867 = vmatprep.subr.mxu0 0.0
        %868 = vmatpush1.msra.mxu0 0.0
        %869 = vmatprep.subr.mxu0 0.0
        %870 = vmatpush1.msra.mxu0 0.0
        %871 = vmatprep.subr.mxu0 0.0
        %872 = vmatpush1.msra.mxu0 0.0
        %873 = vmatprep.subr.mxu0 0.0
        %874 = vmatpush1.msra.mxu0 0.0
        %875 = vmatprep.subr.mxu0 0.0
        %876 = vmatpush1.msra.mxu0 0.0
        %877 = vmatprep.subr.mxu0 0.0
        %878 = vmatpush1.msra.mxu0 0.0
        %879 = vmatprep.subr.mxu0 0.0
        %880 = vmatpush1.msra.mxu0 0.0
        %881 = vmatprep.subr.mxu0 0.0
        %882 = vmatpush1.msra.mxu0 0.0
        %883 = vmatprep.mubr.f32.mxu0 0.0
        %884 = vmatmul.mubr.f32.gmra.mrb[0].mxu0 %v817
        %v885 = vpop.f32.mrb[0].mxu0
        %v886 = vadd.f32 0.0, %v885
        %v887 = vpop.f32.mrb[0].mxu0
        %888 = vdwg.mxu0
        %v890 = vsel %vm484, %v643, 0
        %892 = vmatprep.subr.mxu0 0.0
        %893 = vmatpush1.msra.mxu0 %v646
        %894 = vmatprep.subr.mxu0 0.0
        %895 = vmatpush1.msra.mxu0 0.0
        %896 = vmatprep.subr.mxu0 0.0
        %897 = vmatpush1.msra.mxu0 0.0
        %898 = vmatprep.subr.mxu0 0.0
        %899 = vmatpush1.msra.mxu0 0.0
        %900 = vmatprep.subr.mxu0 0.0
        %901 = vmatpush1.msra.mxu0 0.0
        %902 = vmatprep.subr.mxu0 0.0
        %903 = vmatpush1.msra.mxu0 0.0
        %904 = vmatprep.subr.mxu0 0.0
        %905 = vmatpush1.msra.mxu0 0.0
        %906 = vmatprep.subr.mxu0 0.0
        %907 = vmatpush1.msra.mxu0 0.0
        %908 = vmatprep.subr.mxu0 0.0
        %909 = vmatpush1.msra.mxu0 0.0
        %910 = vmatprep.subr.mxu0 0.0
        %911 = vmatpush1.msra.mxu0 0.0
        %912 = vmatprep.subr.mxu0 0.0
        %913 = vmatpush1.msra.mxu0 0.0
        %914 = vmatprep.subr.mxu0 0.0
        %915 = vmatpush1.msra.mxu0 0.0
        %916 = vmatprep.subr.mxu0 0.0
        %917 = vmatpush1.msra.mxu0 0.0
        %918 = vmatprep.subr.mxu0 0.0
        %919 = vmatpush1.msra.mxu0 0.0
        %920 = vmatprep.subr.mxu0 0.0
        %921 = vmatpush1.msra.mxu0 0.0
        %922 = vmatprep.subr.mxu0 0.0
        %923 = vmatpush1.msra.mxu0 0.0
        %924 = vmatprep.subr.mxu0 0.0
        %925 = vmatpush1.msra.mxu0 0.0
        %926 = vmatprep.subr.mxu0 0.0
        %927 = vmatpush1.msra.mxu0 0.0
        %928 = vmatprep.subr.mxu0 0.0
        %929 = vmatpush1.msra.mxu0 0.0
        %930 = vmatprep.subr.mxu0 0.0
        %931 = vmatpush1.msra.mxu0 0.0
        %932 = vmatprep.subr.mxu0 0.0
        %933 = vmatpush1.msra.mxu0 0.0
        %934 = vmatprep.subr.mxu0 0.0
        %935 = vmatpush1.msra.mxu0 0.0
        %936 = vmatprep.subr.mxu0 0.0
        %937 = vmatpush1.msra.mxu0 0.0
        %938 = vmatprep.subr.mxu0 0.0
        %939 = vmatpush1.msra.mxu0 0.0
        %940 = vmatprep.subr.mxu0 0.0
        %941 = vmatpush1.msra.mxu0 0.0
        %942 = vmatprep.subr.mxu0 0.0
        %943 = vmatpush1.msra.mxu0 0.0
        %944 = vmatprep.subr.mxu0 0.0
        %945 = vmatpush1.msra.mxu0 0.0
        %946 = vmatprep.subr.mxu0 0.0
        %947 = vmatpush1.msra.mxu0 0.0
        %948 = vmatprep.subr.mxu0 0.0
        %949 = vmatpush1.msra.mxu0 0.0
        %950 = vmatprep.subr.mxu0 0.0
        %951 = vmatpush1.msra.mxu0 0.0
        %952 = vmatprep.subr.mxu0 0.0
        %953 = vmatpush1.msra.mxu0 0.0
        %954 = vmatprep.subr.mxu0 0.0
        %955 = vmatpush1.msra.mxu0 0.0
        %956 = vmatprep.mubr.f32.mxu0 0.0
        %957 = vmatmul.mubr.f32.gmra.mrb[0].mxu0 %v890
        %v958 = vpop.f32.mrb[0].mxu0
        %v959 = vadd.f32 %v886, %v958
        %v960 = vpop.f32.mrb[0].mxu0
        %961 = vdwg.mxu0
        %962 = vrot.lane.b32.xlu0 %v465, 112
        %v963 = vpop.permute.xlu0 %962
        %964 = vrot.lane.b32.xlu0 %v465, 80
        %v965 = vpop.permute.xlu0 %964
        %v966 = vsel %vm484, %v963, 0
        %v968 = vsel %vm484, %v965, 0
        %970 = vmatprep.subr.mxu0 0.0
        %971 = vmatpush1.xpose.msra.mxu0 %v968
        %972 = vmatprep.subr.mxu0 0.0
        %973 = vmatpush1.xpose.msra.mxu0 0.0
        %974 = vmatprep.subr.mxu0 0.0
        %975 = vmatpush1.xpose.msra.mxu0 0.0
        %976 = vmatprep.subr.mxu0 0.0
        %977 = vmatpush1.xpose.msra.mxu0 0.0
        %978 = vmatprep.subr.mxu0 0.0
        %979 = vmatpush1.xpose.msra.mxu0 0.0
        %980 = vmatprep.subr.mxu0 0.0
        %981 = vmatpush1.xpose.msra.mxu0 0.0
        %982 = vmatprep.subr.mxu0 0.0
        %983 = vmatpush1.xpose.msra.mxu0 0.0
        %984 = vmatprep.subr.mxu0 0.0
        %985 = vmatpush1.xpose.msra.mxu0 0.0
        %986 = vmatprep.subr.mxu0 0.0
        %987 = vmatpush1.xpose.msra.mxu0 0.0
        %988 = vmatprep.subr.mxu0 0.0
        %989 = vmatpush1.xpose.msra.mxu0 0.0
        %990 = vmatprep.subr.mxu0 0.0
        %991 = vmatpush1.xpose.msra.mxu0 0.0
        %992 = vmatprep.subr.mxu0 0.0
        %993 = vmatpush1.xpose.msra.mxu0 0.0
        %994 = vmatprep.subr.mxu0 0.0
        %995 = vmatpush1.xpose.msra.mxu0 0.0
        %996 = vmatprep.subr.mxu0 0.0
        %997 = vmatpush1.xpose.msra.mxu0 0.0
        %998 = vmatprep.subr.mxu0 0.0
        %999 = vmatpush1.xpose.msra.mxu0 0.0
        %1000 = vmatprep.subr.mxu0 0.0
        %1001 = vmatpush1.xpose.msra.mxu0 0.0
        %1002 = vmatprep.subr.mxu0 0.0
        %1003 = vmatpush1.xpose.msra.mxu0 0.0
        %1004 = vmatprep.subr.mxu0 0.0
        %1005 = vmatpush1.xpose.msra.mxu0 0.0
        %1006 = vmatprep.subr.mxu0 0.0
        %1007 = vmatpush1.xpose.msra.mxu0 0.0
        %1008 = vmatprep.subr.mxu0 0.0
        %1009 = vmatpush1.xpose.msra.mxu0 0.0
        %1010 = vmatprep.subr.mxu0 0.0
        %1011 = vmatpush1.xpose.msra.mxu0 0.0
        %1012 = vmatprep.subr.mxu0 0.0
        %1013 = vmatpush1.xpose.msra.mxu0 0.0
        %1014 = vmatprep.subr.mxu0 0.0
        %1015 = vmatpush1.xpose.msra.mxu0 0.0
        %1016 = vmatprep.subr.mxu0 0.0
        %1017 = vmatpush1.xpose.msra.mxu0 0.0
        %1018 = vmatprep.subr.mxu0 0.0
        %1019 = vmatpush1.xpose.msra.mxu0 0.0
        %1020 = vmatprep.subr.mxu0 0.0
        %1021 = vmatpush1.xpose.msra.mxu0 0.0
        %1022 = vmatprep.subr.mxu0 0.0
        %1023 = vmatpush1.xpose.msra.mxu0 0.0
        %1024 = vmatprep.subr.mxu0 0.0
        %1025 = vmatpush1.xpose.msra.mxu0 0.0
        %1026 = vmatprep.subr.mxu0 0.0
        %1027 = vmatpush1.xpose.msra.mxu0 0.0
        %1028 = vmatprep.subr.mxu0 0.0
        %1029 = vmatpush1.xpose.msra.mxu0 0.0
        %1030 = vmatprep.subr.mxu0 0.0
        %1031 = vmatpush1.xpose.msra.mxu0 0.0
        %1032 = vmatprep.subr.mxu0 0.0
        %1033 = vmatpush1.xpose.msra.mxu0 0.0
        %1034 = vmatprep.mubr.f32.mxu0 0.0
        %1035 = vmatmul.mubr.f32.gmra.mrb[0].mxu0 %v966
        %v1036 = vpop.f32.mrb[0].mxu0
        %v1037 = vadd.f32 %v482, %v1036
        %v1038 = vpop.f32.mrb[0].mxu0
        %1039 = vdwg.mxu0
        %v1040 = vsel %vm484, %v1037, -inf
        %1041 = vmax.xlane.f32.xlu0 %v1040
        %v1042 = vpop.xlane.xlu0 %1041
        %v1043 = vsub.f32 %v1037, %v1042
        %v1044 = vmul.f32 %v1043, 1.442695
        %v1045 = vpow.pop %v1044
        %v1046 = vsel %vm484, %v1045, 0.0
        %1047 = vadd.xlane.f32.xlu0 %v1046
        %v1048 = vpop.xlane.xlu0 %1047
        %v1049 = vrcp.pop %v1048
        %v1050 = vmul.f32 %v1048, %v1049
        %v1051 = vsub.f32 2.0, %v1050
        %v1052 = vmul.f32 %v1049, %v1051
        %v1053 = vmul.f32 %v1045, %v1052
        %1054 = vrot.lane.b32.xlu0 %v465, 48
        %v1055 = vpop.permute.xlu0 %1054
        %v1058 = vsel %vm484, %v1053, 0
        %1060 = vmatprep.subr.mxu0 0.0
        %1061 = vmatpush1.msra.mxu0 %v1055
        %1062 = vmatprep.subr.mxu0 0.0
        %1063 = vmatpush1.msra.mxu0 0.0
        %1064 = vmatprep.subr.mxu0 0.0
        %1065 = vmatpush1.msra.mxu0 0.0
        %1066 = vmatprep.subr.mxu0 0.0
        %1067 = vmatpush1.msra.mxu0 0.0
        %1068 = vmatprep.subr.mxu0 0.0
        %1069 = vmatpush1.msra.mxu0 0.0
        %1070 = vmatprep.subr.mxu0 0.0
        %1071 = vmatpush1.msra.mxu0 0.0
        %1072 = vmatprep.subr.mxu0 0.0
        %1073 = vmatpush1.msra.mxu0 0.0
        %1074 = vmatprep.subr.mxu0 0.0
        %1075 = vmatpush1.msra.mxu0 0.0
        %1076 = vmatprep.subr.mxu0 0.0
        %1077 = vmatpush1.msra.mxu0 0.0
        %1078 = vmatprep.subr.mxu0 0.0
        %1079 = vmatpush1.msra.mxu0 0.0
        %1080 = vmatprep.subr.mxu0 0.0
        %1081 = vmatpush1.msra.mxu0 0.0
        %1082 = vmatprep.subr.mxu0 0.0
        %1083 = vmatpush1.msra.mxu0 0.0
        %1084 = vmatprep.subr.mxu0 0.0
        %1085 = vmatpush1.msra.mxu0 0.0
        %1086 = vmatprep.subr.mxu0 0.0
        %1087 = vmatpush1.msra.mxu0 0.0
        %1088 = vmatprep.subr.mxu0 0.0
        %1089 = vmatpush1.msra.mxu0 0.0
        %1090 = vmatprep.subr.mxu0 0.0
        %1091 = vmatpush1.msra.mxu0 0.0
        %1092 = vmatprep.subr.mxu0 0.0
        %1093 = vmatpush1.msra.mxu0 0.0
        %1094 = vmatprep.subr.mxu0 0.0
        %1095 = vmatpush1.msra.mxu0 0.0
        %1096 = vmatprep.subr.mxu0 0.0
        %1097 = vmatpush1.msra.mxu0 0.0
        %1098 = vmatprep.subr.mxu0 0.0
        %1099 = vmatpush1.msra.mxu0 0.0
        %1100 = vmatprep.subr.mxu0 0.0
        %1101 = vmatpush1.msra.mxu0 0.0
        %1102 = vmatprep.subr.mxu0 0.0
        %1103 = vmatpush1.msra.mxu0 0.0
        %1104 = vmatprep.subr.mxu0 0.0
        %1105 = vmatpush1.msra.mxu0 0.0
        %1106 = vmatprep.subr.mxu0 0.0
        %1107 = vmatpush1.msra.mxu0 0.0
        %1108 = vmatprep.subr.mxu0 0.0
        %1109 = vmatpush1.msra.mxu0 0.0
        %1110 = vmatprep.subr.mxu0 0.0
        %1111 = vmatpush1.msra.mxu0 0.0
        %1112 = vmatprep.subr.mxu0 0.0
        %1113 = vmatpush1.msra.mxu0 0.0
        %1114 = vmatprep.subr.mxu0 0.0
        %1115 = vmatpush1.msra.mxu0 0.0
        %1116 = vmatprep.subr.mxu0 0.0
        %1117 = vmatpush1.msra.mxu0 0.0
        %1118 = vmatprep.subr.mxu0 0.0
        %1119 = vmatpush1.msra.mxu0 0.0
        %1120 = vmatprep.subr.mxu0 0.0
        %1121 = vmatpush1.msra.mxu0 0.0
        %1122 = vmatprep.subr.mxu0 0.0
        %1123 = vmatpush1.msra.mxu0 0.0
        %1124 = vmatprep.mubr.f32.mxu0 0.0
        %1125 = vmatmul.mubr.f32.gmra.mrb[0].mxu0 %v1058
        %v1126 = vpop.f32.mrb[0].mxu0
        %v1127 = vadd.f32 0.0, %v1126
        %v1128 = vpop.f32.mrb[0].mxu0
        %1129 = vdwg.mxu0
        %v1130 = vld [vmem:[#allocation7 + $0x10] sm:$0xff]
        %v1132 = vsel %vm484, %v1127, 0
        %1134 = vmatprep.subr.mxu0 0.0
        %1135 = vmatpush1.msra.mxu0 %v1130
        %1136 = vmatprep.subr.mxu0 0.0
        %1137 = vmatpush1.msra.mxu0 0.0
        %1138 = vmatprep.subr.mxu0 0.0
        %1139 = vmatpush1.msra.mxu0 0.0
        %1140 = vmatprep.subr.mxu0 0.0
        %1141 = vmatpush1.msra.mxu0 0.0
        %1142 = vmatprep.subr.mxu0 0.0
        %1143 = vmatpush1.msra.mxu0 0.0
        %1144 = vmatprep.subr.mxu0 0.0
        %1145 = vmatpush1.msra.mxu0 0.0
        %1146 = vmatprep.subr.mxu0 0.0
        %1147 = vmatpush1.msra.mxu0 0.0
        %1148 = vmatprep.subr.mxu0 0.0
        %1149 = vmatpush1.msra.mxu0 0.0
        %1150 = vmatprep.subr.mxu0 0.0
        %1151 = vmatpush1.msra.mxu0 0.0
        %1152 = vmatprep.subr.mxu0 0.0
        %1153 = vmatpush1.msra.mxu0 0.0
        %1154 = vmatprep.subr.mxu0 0.0
        %1155 = vmatpush1.msra.mxu0 0.0
        %1156 = vmatprep.subr.mxu0 0.0
        %1157 = vmatpush1.msra.mxu0 0.0
        %1158 = vmatprep.subr.mxu0 0.0
        %1159 = vmatpush1.msra.mxu0 0.0
        %1160 = vmatprep.subr.mxu0 0.0
        %1161 = vmatpush1.msra.mxu0 0.0
        %1162 = vmatprep.subr.mxu0 0.0
        %1163 = vmatpush1.msra.mxu0 0.0
        %1164 = vmatprep.subr.mxu0 0.0
        %1165 = vmatpush1.msra.mxu0 0.0
        %1166 = vmatprep.subr.mxu0 0.0
        %1167 = vmatpush1.msra.mxu0 0.0
        %1168 = vmatprep.subr.mxu0 0.0
        %1169 = vmatpush1.msra.mxu0 0.0
        %1170 = vmatprep.subr.mxu0 0.0
        %1171 = vmatpush1.msra.mxu0 0.0
        %1172 = vmatprep.subr.mxu0 0.0
        %1173 = vmatpush1.msra.mxu0 0.0
        %1174 = vmatprep.subr.mxu0 0.0
        %1175 = vmatpush1.msra.mxu0 0.0
        %1176 = vmatprep.subr.mxu0 0.0
        %1177 = vmatpush1.msra.mxu0 0.0
        %1178 = vmatprep.subr.mxu0 0.0
        %1179 = vmatpush1.msra.mxu0 0.0
        %1180 = vmatprep.subr.mxu0 0.0
        %1181 = vmatpush1.msra.mxu0 0.0
        %1182 = vmatprep.subr.mxu0 0.0
        %1183 = vmatpush1.msra.mxu0 0.0
        %1184 = vmatprep.subr.mxu0 0.0
        %1185 = vmatpush1.msra.mxu0 0.0
        %1186 = vmatprep.subr.mxu0 0.0
        %1187 = vmatpush1.msra.mxu0 0.0
        %1188 = vmatprep.subr.mxu0 0.0
        %1189 = vmatpush1.msra.mxu0 0.0
        %1190 = vmatprep.subr.mxu0 0.0
        %1191 = vmatpush1.msra.mxu0 0.0
        %1192 = vmatprep.subr.mxu0 0.0
        %1193 = vmatpush1.msra.mxu0 0.0
        %1194 = vmatprep.subr.mxu0 0.0
        %1195 = vmatpush1.msra.mxu0 0.0
        %1196 = vmatprep.subr.mxu0 0.0
        %1197 = vmatpush1.msra.mxu0 0.0
        %1198 = vmatprep.mubr.f32.mxu0 0.0
        %1199 = vmatmul.mubr.f32.gmra.mrb[0].mxu0 %v1132
        %v1200 = vpop.f32.mrb[0].mxu0
        %v1201 = vadd.f32 0.0, %v1200
        %v1202 = vpop.f32.mrb[0].mxu0
        %1203 = vdwg.mxu0
        %v1204 = vadd.f32 %v959, %v1201
        %1205 = vrot.lane.b32.xlu0 %v465, 104
        %v1206 = vpop.permute.xlu0 %1205
        %1207 = vrot.lane.b32.xlu0 %v465, 72
        %v1208 = vpop.permute.xlu0 %1207
        %v1209 = vsel %vm484, %v1206, 0
        %v1211 = vsel %vm484, %v1208, 0
        %1213 = vmatprep.subr.mxu0 0.0
        %1214 = vmatpush1.xpose.msra.mxu0 %v1211
        %1215 = vmatprep.subr.mxu0 0.0
        %1216 = vmatpush1.xpose.msra.mxu0 0.0
        %1217 = vmatprep.subr.mxu0 0.0
        %1218 = vmatpush1.xpose.msra.mxu0 0.0
        %1219 = vmatprep.subr.mxu0 0.0
        %1220 = vmatpush1.xpose.msra.mxu0 0.0
        %1221 = vmatprep.subr.mxu0 0.0
        %1222 = vmatpush1.xpose.msra.mxu0 0.0
        %1223 = vmatprep.subr.mxu0 0.0
        %1224 = vmatpush1.xpose.msra.mxu0 0.0
        %1225 = vmatprep.subr.mxu0 0.0
        %1226 = vmatpush1.xpose.msra.mxu0 0.0
        %1227 = vmatprep.subr.mxu0 0.0
        %1228 = vmatpush1.xpose.msra.mxu0 0.0
        %1229 = vmatprep.subr.mxu0 0.0
        %1230 = vmatpush1.xpose.msra.mxu0 0.0
        %1231 = vmatprep.subr.mxu0 0.0
        %1232 = vmatpush1.xpose.msra.mxu0 0.0
        %1233 = vmatprep.subr.mxu0 0.0
        %1234 = vmatpush1.xpose.msra.mxu0 0.0
        %1235 = vmatprep.subr.mxu0 0.0
        %1236 = vmatpush1.xpose.msra.mxu0 0.0
        %1237 = vmatprep.subr.mxu0 0.0
        %1238 = vmatpush1.xpose.msra.mxu0 0.0
        %1239 = vmatprep.subr.mxu0 0.0
        %1240 = vmatpush1.xpose.msra.mxu0 0.0
        %1241 = vmatprep.subr.mxu0 0.0
        %1242 = vmatpush1.xpose.msra.mxu0 0.0
        %1243 = vmatprep.subr.mxu0 0.0
        %1244 = vmatpush1.xpose.msra.mxu0 0.0
        %1245 = vmatprep.subr.mxu0 0.0
        %1246 = vmatpush1.xpose.msra.mxu0 0.0
        %1247 = vmatprep.subr.mxu0 0.0
        %1248 = vmatpush1.xpose.msra.mxu0 0.0
        %1249 = vmatprep.subr.mxu0 0.0
        %1250 = vmatpush1.xpose.msra.mxu0 0.0
        %1251 = vmatprep.subr.mxu0 0.0
        %1252 = vmatpush1.xpose.msra.mxu0 0.0
        %1253 = vmatprep.subr.mxu0 0.0
        %1254 = vmatpush1.xpose.msra.mxu0 0.0
        %1255 = vmatprep.subr.mxu0 0.0
        %1256 = vmatpush1.xpose.msra.mxu0 0.0
        %1257 = vmatprep.subr.mxu0 0.0
        %1258 = vmatpush1.xpose.msra.mxu0 0.0
        %1259 = vmatprep.subr.mxu0 0.0
        %1260 = vmatpush1.xpose.msra.mxu0 0.0
        %1261 = vmatprep.subr.mxu0 0.0
        %1262 = vmatpush1.xpose.msra.mxu0 0.0
        %1263 = vmatprep.subr.mxu0 0.0
        %1264 = vmatpush1.xpose.msra.mxu0 0.0
        %1265 = vmatprep.subr.mxu0 0.0
        %1266 = vmatpush1.xpose.msra.mxu0 0.0
        %1267 = vmatprep.subr.mxu0 0.0
        %1268 = vmatpush1.xpose.msra.mxu0 0.0
        %1269 = vmatprep.subr.mxu0 0.0
        %1270 = vmatpush1.xpose.msra.mxu0 0.0
        %1271 = vmatprep.subr.mxu0 0.0
        %1272 = vmatpush1.xpose.msra.mxu0 0.0
        %1273 = vmatprep.subr.mxu0 0.0
        %1274 = vmatpush1.xpose.msra.mxu0 0.0
        %1275 = vmatprep.subr.mxu0 0.0
        %1276 = vmatpush1.xpose.msra.mxu0 0.0
        %1277 = vmatprep.mubr.f32.mxu0 0.0
        %1278 = vmatmul.mubr.f32.gmra.mrb[0].mxu0 %v1209
        %v1279 = vpop.f32.mrb[0].mxu0
        %v1280 = vadd.f32 %v482, %v1279
        %v1281 = vpop.f32.mrb[0].mxu0
        %1282 = vdwg.mxu0
        %v1283 = vsel %vm484, %v1280, -inf
        %1284 = vmax.xlane.f32.xlu0 %v1283
        %v1285 = vpop.xlane.xlu0 %1284
        %v1286 = vsub.f32 %v1280, %v1285
        %v1287 = vmul.f32 %v1286, 1.442695
        %v1288 = vpow.pop %v1287
        %v1289 = vsel %vm484, %v1288, 0.0
        %1290 = vadd.xlane.f32.xlu0 %v1289
        %v1291 = vpop.xlane.xlu0 %1290
        %v1292 = vrcp.pop %v1291
        %v1293 = vmul.f32 %v1291, %v1292
        %v1294 = vsub.f32 2.0, %v1293
        %v1295 = vmul.f32 %v1292, %v1294
        %v1296 = vmul.f32 %v1288, %v1295
        %1297 = vrot.lane.b32.xlu0 %v465, 40
        %v1298 = vpop.permute.xlu0 %1297
        %v1301 = vsel %vm484, %v1296, 0
        %1303 = vmatprep.subr.mxu0 0.0
        %1304 = vmatpush1.msra.mxu0 %v1298
        %1305 = vmatprep.subr.mxu0 0.0
        %1306 = vmatpush1.msra.mxu0 0.0
        %1307 = vmatprep.subr.mxu0 0.0
        %1308 = vmatpush1.msra.mxu0 0.0
        %1309 = vmatprep.subr.mxu0 0.0
        %1310 = vmatpush1.msra.mxu0 0.0
        %1311 = vmatprep.subr.mxu0 0.0
        %1312 = vmatpush1.msra.mxu0 0.0
        %1313 = vmatprep.subr.mxu0 0.0
        %1314 = vmatpush1.msra.mxu0 0.0
        %1315 = vmatprep.subr.mxu0 0.0
        %1316 = vmatpush1.msra.mxu0 0.0
        %1317 = vmatprep.subr.mxu0 0.0
        %1318 = vmatpush1.msra.mxu0 0.0
        %1319 = vmatprep.subr.mxu0 0.0
        %1320 = vmatpush1.msra.mxu0 0.0
        %1321 = vmatprep.subr.mxu0 0.0
        %1322 = vmatpush1.msra.mxu0 0.0
        %1323 = vmatprep.subr.mxu0 0.0
        %1324 = vmatpush1.msra.mxu0 0.0
        %1325 = vmatprep.subr.mxu0 0.0
        %1326 = vmatpush1.msra.mxu0 0.0
        %1327 = vmatprep.subr.mxu0 0.0
        %1328 = vmatpush1.msra.mxu0 0.0
        %1329 = vmatprep.subr.mxu0 0.0
        %1330 = vmatpush1.msra.mxu0 0.0
        %1331 = vmatprep.subr.mxu0 0.0
        %1332 = vmatpush1.msra.mxu0 0.0
        %1333 = vmatprep.subr.mxu0 0.0
        %1334 = vmatpush1.msra.mxu0 0.0
        %1335 = vmatprep.subr.mxu0 0.0
        %1336 = vmatpush1.msra.mxu0 0.0
        %1337 = vmatprep.subr.mxu0 0.0
        %1338 = vmatpush1.msra.mxu0 0.0
        %1339 = vmatprep.subr.mxu0 0.0
        %1340 = vmatpush1.msra.mxu0 0.0
        %1341 = vmatprep.subr.mxu0 0.0
        %1342 = vmatpush1.msra.mxu0 0.0
        %1343 = vmatprep.subr.mxu0 0.0
        %1344 = vmatpush1.msra.mxu0 0.0
        %1345 = vmatprep.subr.mxu0 0.0
        %1346 = vmatpush1.msra.mxu0 0.0
        %1347 = vmatprep.subr.mxu0 0.0
        %1348 = vmatpush1.msra.mxu0 0.0
        %1349 = vmatprep.subr.mxu0 0.0
        %1350 = vmatpush1.msra.mxu0 0.0
        %1351 = vmatprep.subr.mxu0 0.0
        %1352 = vmatpush1.msra.mxu0 0.0
        %1353 = vmatprep.subr.mxu0 0.0
        %1354 = vmatpush1.msra.mxu0 0.0
        %1355 = vmatprep.subr.mxu0 0.0
        %1356 = vmatpush1.msra.mxu0 0.0
        %1357 = vmatprep.subr.mxu0 0.0
        %1358 = vmatpush1.msra.mxu0 0.0
        %1359 = vmatprep.subr.mxu0 0.0
        %1360 = vmatpush1.msra.mxu0 0.0
        %1361 = vmatprep.subr.mxu0 0.0
        %1362 = vmatpush1.msra.mxu0 0.0
        %1363 = vmatprep.subr.mxu0 0.0
        %1364 = vmatpush1.msra.mxu0 0.0
        %1365 = vmatprep.subr.mxu0 0.0
        %1366 = vmatpush1.msra.mxu0 0.0
        %1367 = vmatprep.mubr.f32.mxu0 0.0
        %1368 = vmatmul.mubr.f32.gmra.mrb[0].mxu0 %v1301
        %v1369 = vpop.f32.mrb[0].mxu0
        %v1370 = vadd.f32 0.0, %v1369
        %v1371 = vpop.f32.mrb[0].mxu0
        %1372 = vdwg.mxu0
        %v1373 = vld [vmem:[#allocation7 + $0x18] sm:$0xff]
        %v1375 = vsel %vm484, %v1370, 0
        %1377 = vmatprep.subr.mxu0 0.0
        %1378 = vmatpush1.msra.mxu0 %v1373
        %1379 = vmatprep.subr.mxu0 0.0
        %1380 = vmatpush1.msra.mxu0 0.0
        %1381 = vmatprep.subr.mxu0 0.0
        %1382 = vmatpush1.msra.mxu0 0.0
        %1383 = vmatprep.subr.mxu0 0.0
        %1384 = vmatpush1.msra.mxu0 0.0
        %1385 = vmatprep.subr.mxu0 0.0
        %1386 = vmatpush1.msra.mxu0 0.0
        %1387 = vmatprep.subr.mxu0 0.0
        %1388 = vmatpush1.msra.mxu0 0.0
        %1389 = vmatprep.subr.mxu0 0.0
        %1390 = vmatpush1.msra.mxu0 0.0
        %1391 = vmatprep.subr.mxu0 0.0
        %1392 = vmatpush1.msra.mxu0 0.0
        %1393 = vmatprep.subr.mxu0 0.0
        %1394 = vmatpush1.msra.mxu0 0.0
        %1395 = vmatprep.subr.mxu0 0.0
        %1396 = vmatpush1.msra.mxu0 0.0
        %1397 = vmatprep.subr.mxu0 0.0
        %1398 = vmatpush1.msra.mxu0 0.0
        %1399 = vmatprep.subr.mxu0 0.0
        %1400 = vmatpush1.msra.mxu0 0.0
        %1401 = vmatprep.subr.mxu0 0.0
        %1402 = vmatpush1.msra.mxu0 0.0
        %1403 = vmatprep.subr.mxu0 0.0
        %1404 = vmatpush1.msra.mxu0 0.0
        %1405 = vmatprep.subr.mxu0 0.0
        %1406 = vmatpush1.msra.mxu0 0.0
        %1407 = vmatprep.subr.mxu0 0.0
        %1408 = vmatpush1.msra.mxu0 0.0
        %1409 = vmatprep.subr.mxu0 0.0
        %1410 = vmatpush1.msra.mxu0 0.0
        %1411 = vmatprep.subr.mxu0 0.0
        %1412 = vmatpush1.msra.mxu0 0.0
        %1413 = vmatprep.subr.mxu0 0.0
        %1414 = vmatpush1.msra.mxu0 0.0
        %1415 = vmatprep.subr.mxu0 0.0
        %1416 = vmatpush1.msra.mxu0 0.0
        %1417 = vmatprep.subr.mxu0 0.0
        %1418 = vmatpush1.msra.mxu0 0.0
        %1419 = vmatprep.subr.mxu0 0.0
        %1420 = vmatpush1.msra.mxu0 0.0
        %1421 = vmatprep.subr.mxu0 0.0
        %1422 = vmatpush1.msra.mxu0 0.0
        %1423 = vmatprep.subr.mxu0 0.0
        %1424 = vmatpush1.msra.mxu0 0.0
        %1425 = vmatprep.subr.mxu0 0.0
        %1426 = vmatpush1.msra.mxu0 0.0
        %1427 = vmatprep.subr.mxu0 0.0
        %1428 = vmatpush1.msra.mxu0 0.0
        %1429 = vmatprep.subr.mxu0 0.0
        %1430 = vmatpush1.msra.mxu0 0.0
        %1431 = vmatprep.subr.mxu0 0.0
        %1432 = vmatpush1.msra.mxu0 0.0
        %1433 = vmatprep.subr.mxu0 0.0
        %1434 = vmatpush1.msra.mxu0 0.0
        %1435 = vmatprep.subr.mxu0 0.0
        %1436 = vmatpush1.msra.mxu0 0.0
        %1437 = vmatprep.subr.mxu0 0.0
        %1438 = vmatpush1.msra.mxu0 0.0
        %1439 = vmatprep.subr.mxu0 0.0
        %1440 = vmatpush1.msra.mxu0 0.0
        %1441 = vmatprep.mubr.f32.mxu0 0.0
        %1442 = vmatmul.mubr.f32.gmra.mrb[0].mxu0 %v1375
        %v1443 = vpop.f32.mrb[0].mxu0
        %v1444 = vadd.f32 0.0, %v1443
        %v1445 = vpop.f32.mrb[0].mxu0
        %1446 = vdwg.mxu0
        %v1447 = vadd.f32 %v1204, %v1444
        %v1448 = vld [vmem:[%s4] sm:$0x1]
        %v1450 = vlaneseq
        %v1451 = vshrl.u32 %v1450, 7
        %v1452 = vsub.s32 0, %v1451
        %v1453 = vrot.slane %v1448, %v1452
        %v1455 = vadd.f32 %v1447, %v1453
        %1456 = vst.msk [vmem:[%s364] sm:$0xff] %vm394, %v1455
        %s1457 = sand.u32 %s174, 1
        %s1458 = scalar_lea.sflag [#allocation4], %s1457
        %s1459 = sand.u32 %s174, 1
        %s1460 = smul.addr %s1459, 8
        %s1461 = scalar_lea.vmem [#allocation8], %s1460
        %s1462 = sand.u32 %s30, 1
        %s1463 = scalar_lea.sflag [#allocation10], %s1462
        %s1464 = sand.u32 %s200, 1
        %s1465 = smul.addr %s1464, 8
        %s1466 = scalar_lea.vmem [#allocation9], %s1465
        %s1467 = sand.u32 %s30, 1
        %s1468 = scalar_lea.sflag [#allocation10], %s1467
        %s1469 = sand.u32 %s226, 1
        %s1470 = smul.addr %s1469, 8
        %s1471 = scalar_lea.vmem [#allocation11], %s1470
        // Predicated region
        $region57: #{tpu_custom_call.1} parent=43 // pred_check
          %p1472 = pneg %p184
        $region58: #{tpu_custom_call.1} parent=43 // pred_check_branch
          %1474 = sbr.rel (%p1472) target = $region60
        $region59: #{tpu_custom_call.1} parent=43 // pred_region
          %s1476 = ssub.s32 128, 128
          %1477 = vsyncadd %s1458, %s1476
          %s1478 = smul.addr %s30, 128
          %s1479 = scalar_lea.hbm %s6, %s1478
          %s1481 = sshll.u32 %s1461, 4
          %s1482 = int_to_ptr.vmem [resolvable:$true] %s1481
          %1484 = dma.vmem_to_hbm [thread:$0]  %s1482, 128, %s1479, %s1458
        $region60: #{tpu_custom_call.1} parent=43 // pred_fallthru
          _
        // Predicated region
        $region61: #{tpu_custom_call.1} parent=43 // pred_check
          %p1485 = pneg %p210
        $region62: #{tpu_custom_call.1} parent=43 // pred_check_branch
          %1487 = sbr.rel (%p1485) target = $region64
        $region63: #{tpu_custom_call.1} parent=43 // pred_region
          %s1489 = ssub.s32 128, 128
          %1490 = vsyncadd %s1463, %s1489
          %s1491 = smul.addr %s30, 128
          %s1492 = scalar_lea.hbm %s7, %s1491
          %s1494 = sshll.u32 %s1466, 4
          %s1495 = int_to_ptr.vmem [resolvable:$true] %s1494
          %1497 = dma.vmem_to_hbm [thread:$0]  %s1495, 128, %s1492, %s1463
        $region64: #{tpu_custom_call.1} parent=43 // pred_fallthru
          _
        // Predicated region
        $region65: #{tpu_custom_call.1} parent=43 // pred_check
          %p1498 = pneg %p236
        $region66: #{tpu_custom_call.1} parent=43 // pred_check_branch
          %1500 = sbr.rel (%p1498) target = $region68
        $region67: #{tpu_custom_call.1} parent=43 // pred_region
          %s1502 = ssub.s32 128, 128
          %1503 = vsyncadd %s1468, %s1502
          %s1504 = smul.addr %s30, 128
          %s1505 = scalar_lea.hbm %s8, %s1504
          %s1507 = sshll.u32 %s1471, 4
          %s1508 = int_to_ptr.vmem [resolvable:$true] %s1507
          %1510 = dma.vmem_to_hbm [thread:$0]  %s1508, 128, %s1505, %s1468
        $region68: #{tpu_custom_call.1} parent=43 // pred_fallthru
          _
      $region44: #{tpu_custom_call.1} parent=5 // pred_fallthru
        _
      %p1511 = scmp.le.s32.totalorder 2, %s25
      // Predicated region
      $region69: #{tpu_custom_call.1} parent=5 // pred_check
        %p1512 = pneg %p1511
      $region70: #{tpu_custom_call.1} parent=5 // pred_check_branch
        %1514 = sbr.rel (%p1512) target = $region72
      $region71: #{tpu_custom_call.1} parent=5 // pred_region
        %s1515 = ssub.s32 %s25, 2
        // Predicated region
        $region73: #{tpu_custom_call.1} parent=71 // pred_check
          %p1516 = pneg %p190
        $region74: #{tpu_custom_call.1} parent=71 // pred_check_branch
          %1518 = sbr.rel (%p1516) target = $region76
        $region75: #{tpu_custom_call.1} parent=71 // pred_region
          %s1519 = sand.u32 %s175, 1
          %s1520 = scalar_lea.sflag [#allocation4], %s1519
          %s1521 = sand.u32 %s175, 1
          %s1522 = smul.addr %s1521, 8
          %s1523 = scalar_lea.vmem [#allocation8], %s1522
          %1524 = dma.done %s1520, 128
        $region76: #{tpu_custom_call.1} parent=71 // pred_fallthru
          _
        // Predicated region
        $region77: #{tpu_custom_call.1} parent=71 // pred_check
          %p1525 = pneg %p216
        $region78: #{tpu_custom_call.1} parent=71 // pred_check_branch
          %1527 = sbr.rel (%p1525) target = $region80
        $region79: #{tpu_custom_call.1} parent=71 // pred_region
          %s1528 = sand.u32 %s31, 1
          %s1529 = scalar_lea.sflag [#allocation10], %s1528
          %s1530 = sand.u32 %s201, 1
          %s1531 = smul.addr %s1530, 8
          %s1532 = scalar_lea.vmem [#allocation9], %s1531
          %1533 = dma.done %s1529, 128
        $region80: #{tpu_custom_call.1} parent=71 // pred_fallthru
          _
        // Predicated region
        $region81: #{tpu_custom_call.1} parent=71 // pred_check
          %p1534 = pneg %p242
        $region82: #{tpu_custom_call.1} parent=71 // pred_check_branch
          %1536 = sbr.rel (%p1534) target = $region84
        $region83: #{tpu_custom_call.1} parent=71 // pred_region
          %s1537 = sand.u32 %s31, 1
          %s1538 = scalar_lea.sflag [#allocation10], %s1537
          %s1539 = sand.u32 %s227, 1
          %s1540 = smul.addr %s1539, 8
          %s1541 = scalar_lea.vmem [#allocation11], %s1540
          %1542 = dma.done %s1538, 128
        $region84: #{tpu_custom_call.1} parent=71 // pred_fallthru
          _
      $region72: #{tpu_custom_call.1} parent=5 // pred_fallthru
        _
    $region6: #{tpu_custom_call.1} parent=1 // loop_footer
      %s29 = sadd.s32 1, %s25
    $region7: #{tpu_custom_call.1} parent=1 // loop_footer_branch
      %24 = sbr.rel target = $region3
    $region8: #{tpu_custom_call.1} parent=1 // loop_exit
      _
    %1543 = vsyncpa [#allocation3], 1
    %s1544 = scalar_lea.sflag [#allocation3], 1
    %1545 = vsyncpa %s1544, 1
    %1546 = vsyncpa [#allocation6], 1
    %1547 = vsyncpa [#allocation4], 1
    %s1548 = scalar_lea.sflag [#allocation4], 1
    %1549 = vsyncpa %s1548, 1
    %1550 = vsyncpa [#allocation10], 1
    %s1551 = scalar_lea.sflag [#allocation10], 1
    %1552 = vsyncpa %s1551, 1

</llo_original>
